<compile_context>
chip_gen: v7x
topology: tpu7x:2x2x1
jax: 0.10.0
libtpu: 0.0.40
codegen_flags: <defaults>
</compile_context>

<pallas_src>
import jax
import jax.numpy as jnp
from jax.experimental import pallas as pl
from jax.experimental.pallas import tpu as pltpu

BN_EPS = 1e-5

# ---------------------------------------------------------------------------
# pltpu.roll sign-convention probe (one time, eager, 1 vreg).
# "np"   : roll(x, s)[i] == x[(i - s) % n]   (jnp.roll convention)
# "anti" : roll(x, s)[i] == x[(i + s) % n]
# "jnp"  : fall back to jnp.roll (static slice+concat) if roll is unavailable.
# ---------------------------------------------------------------------------
_ROLL_MODE = None


def _roll_mode():
    global _ROLL_MODE
    if _ROLL_MODE is None:
        try:
            def probe(x_ref, o_ref):
                o_ref[...] = pltpu.roll(x_ref[...], shift=1, axis=1)

            xp = jax.lax.broadcasted_iota(jnp.float32, (8, 128), 1)
            rp = pl.pallas_call(
                probe,
                out_shape=jax.ShapeDtypeStruct((8, 128), jnp.float32),
                in_specs=[pl.BlockSpec(memory_space=pltpu.MemorySpace.VMEM)],
                out_specs=pl.BlockSpec(memory_space=pltpu.MemorySpace.VMEM),
            )(xp)
            v = float(rp[0, 1])
            if v == 0.0:
                _ROLL_MODE = "np"
            elif v == 2.0:
                _ROLL_MODE = "anti"
            else:
                _ROLL_MODE = "jnp"
        except Exception:  # safety net: keep the kernel runnable no matter what
            _ROLL_MODE = "jnp"
    return _ROLL_MODE


def _lane_shift(x, d):
    """result[..., l] = x[..., (l + d) % L]  (callers mask wrapped-in lanes)."""
    L = x.shape[-1]
    d = d % L
    if d == 0:
        return x
    mode = _roll_mode()
    if mode == "np":
        return pltpu.roll(x, shift=L - d, axis=1)
    if mode == "anti":
        return pltpu.roll(x, shift=d, axis=1)
    return jnp.roll(x, -d, axis=1)


def _row_shift(x, d):
    """result[r, :] = x[(r + d) % R, :] -- static sublane roll (slice+concat)."""
    return jnp.roll(x, -d, axis=0)


# ---------------------------------------------------------------------------
# The single fused kernel
# ---------------------------------------------------------------------------
def net_kernel(x_ref, w1_ref, b1_ref, g1_ref, bb1_ref,
               w2_ref, b2_ref, g2_ref, bb2_ref,
               gsel_ref, wfc_ref, bfc_ref, out_ref):
    f32 = jnp.float32
    R, L = x_ref.shape               # (N*32, 128); lanes = 4 channel groups x 32
    N = R // 32
    NC = 4

    # ---- index vectors & boundary masks (built once, tiny) -------------------
    r_iota = jax.lax.broadcasted_iota(jnp.int32, (R, 1), 0)
    l_iota = jax.lax.broadcasted_iota(jnp.int32, (1, L), 1)
    h_idx = r_iota % 32              # row within the image
    w_idx = l_iota % 32              # column within the channel group

    def row_not(v):
        return jnp.where(h_idx != v, 1.0, 0.0).astype(f32)

    def lane_not(v):
        return jnp.where(w_idx != v, 1.0, 0.0).astype(f32)

    row_lo = row_not(0)              # zero-pad halo for dh = -1 (both stages)
    lane_lo = lane_not(0)            # zero-pad halo for dw = -1 (both stages)

    def conv_tap(p, dh, dw, dil, row_hi, lane_hi):
        """Zero-padded 'same' conv tap: t[r, l] = p[r + dil*dh, l + dil*dw]
        within the image / channel group, 0 in the halo."""
        t = p
        if dh:
            t = _row_shift(t, dil * dh)
            t = t * (row_hi if dh > 0 else row_lo)
        if dw:
            t = _lane_shift(t, dil * dw)
            t = t * (lane_hi if dw > 0 else lane_lo)
        return t

    def bn_relu(acc, gamma_ref, beta_ref, count, vrow=None, vlane=None):
        """Training-mode BatchNorm2d (single-pass biased batch stats per
        32-lane channel group, over valid positions only) + ReLU, full width."""
        am = acc if vrow is None else acc * vrow * vlane
        s1 = jnp.sum(am, axis=0, keepdims=True)            # (1, L)
        s2 = jnp.sum(am * am, axis=0, keepdims=True)       # (1, L)
        inv_n = 1.0 / count
        a_row = jnp.zeros((1, L), f32)
        c_row = jnp.zeros((1, L), f32)
        for c in range(NC):
            m1 = jnp.sum(s1[:, 32 * c:32 * (c + 1)], axis=1, keepdims=True) * inv_n
            m2 = jnp.sum(s2[:, 32 * c:32 * (c + 1)], axis=1, keepdims=True) * inv_n
            var = jnp.maximum(m2 - m1 * m1, 0.0)
            scale = gamma_ref[c] * jax.lax.rsqrt(var + BN_EPS)   # (1, 1)
            offs = beta_ref[c] - m1 * scale                      # (1, 1)
            sel = gsel_ref[c:c + 1, :]                           # (1, L) group one-hot
            a_row = a_row + scale * sel
            c_row = c_row + offs * sel
        return jnp.maximum(acc * a_row + c_row, 0.0)

    # ---------------- stage 1: Conv2d(1->4, 3x3, pad 1) + BN + ReLU + pool ----
    x = x_ref[...]                                   # input replicated in all groups
    row_hi1, lane_hi1 = row_not(31), lane_not(31)
    acc = jnp.zeros((R, L), f32)
    for kh in range(3):
        for kw in range(3):
            tp = conv_tap(x, kh - 1, kw - 1, 1, row_hi1, lane_hi1)
            w_row = w1_ref[3 * kh + kw:3 * kh + kw + 1, :]       # (1, 128)
            acc = acc + w_row * tp                               # all 4 channels at once
    acc = acc + b1_ref[...]
    y = bn_relu(acc, g1_ref, bb1_ref, float(N * 32 * 32))
    # 2x2/stride-2 max pool, result left in place at (h%2==0, w%2==0):
    z = jnp.maximum(y, _row_shift(y, 1))
    p1 = jnp.maximum(z, _lane_shift(z, 1))

    # ------- stage 2: Conv2d(4->4) on the dilation-2 frame + BN + ReLU + pool -
    row_hi2, lane_hi2 = row_not(30), lane_not(30)
    acc = jnp.zeros((R, L), f32)
    for kh in range(3):
        for kw in range(3):
            tp = conv_tap(p1, kh - 1, kw - 1, 2, row_hi2, lane_hi2)
            base = 4 * (3 * kh + kw)
            for g in range(NC):                      # output group co reads ci=(co+g)%4
                tg = tp if g == 0 else _lane_shift(tp, 32 * g)
                acc = acc + w2_ref[base + g:base + g + 1, :] * tg
    acc = acc + b2_ref[...]
    ev_row = jnp.where(h_idx % 2 == 0, 1.0, 0.0).astype(f32)
    ev_lane = jnp.where(w_idx % 2 == 0, 1.0, 0.0).astype(f32)
    y = bn_relu(acc, g2_ref, bb2_ref, float(N * 16 * 16), ev_row, ev_lane)
    z = jnp.maximum(y, _row_shift(y, 2))
    p2 = jnp.maximum(z, _lane_shift(z, 2))           # valid at (h%4==0, w%4==0)

    # ------------------- fused Linear(4*8*8, 2) epilogue ----------------------
    # wfc_ref is the zero-dilated, batch-tiled fc weight "frame": garbage frame
    # positions carry weight 0, so no compaction / flatten is needed.
    e0 = jnp.where(l_iota == 0, 1.0, 0.0).astype(f32)
    e1 = jnp.where(l_iota == 1, 1.0, 0.0).astype(f32)
    r0 = jnp.sum(p2 * wfc_ref[0:R, :], axis=1, keepdims=True)        # (R, 1)
    r1 = jnp.sum(p2 * wfc_ref[R:2 * R, :], axis=1, keepdims=True)    # (R, 1)
    rows = []
    for n in range(N):
        s0 = jnp.sum(r0[32 * n:32 * (n + 1), :], axis=0, keepdims=True)   # (1, 1)
        s1 = jnp.sum(r1[32 * n:32 * (n + 1), :], axis=0, keepdims=True)   # (1, 1)
        rows.append(s0 * e0 + s1 * e1)                                    # (1, 128)
    out = rows[0] if N == 1 else jnp.concatenate(rows, axis=0)
    out_ref[...] = out + bfc_ref[...]                # single lane-dense (N, 128) store


# ---------------------------------------------------------------------------
# Wrapper: one pallas_call for the whole network
# ---------------------------------------------------------------------------
def net_forward(x_nchw, params):
    f32 = jnp.float32
    N, cin, H, W = x_nchw.shape
    assert (cin, H, W) == (1, 32, 32), "Linear(4*8*8, 2) fixes the input to (N, 1, 32, 32)"
    assert H % 4 == 0 and W % 4 == 0
    _roll_mode()                                     # resolve roll convention (cached)

    R, L = N * 32, 128

    # Input replicated into the 4 output-channel lane groups (lanes = 4 x 32).
    xrep = jnp.tile(x_nchw.astype(f32).reshape(N * 32, 32), (1, 4))

    # conv1 -> (9, 128): row t=(kh,kw), lane 32*c + w holds w1[c, 0, kh, kw].
    w1t = jnp.repeat(params["conv1_w"].astype(f32).reshape(4, 9).T, 32, axis=1)
    b1row = jnp.repeat(params["conv1_b"].astype(f32), 32).reshape(1, 128)

    # conv2 -> (36, 128): row 4*t + g, lane 32*co + w holds w2[co, (co+g)%4, kh, kw].
    w2 = params["conv2_w"].astype(f32).reshape(4, 4, 9)                 # (co, ci, t)
    co = jnp.arange(4)
    w2rot = jnp.stack([w2[co, (co + g) % 4, :] for g in range(4)], axis=0)  # (g, co, t)
    w2t = jnp.repeat(jnp.transpose(w2rot, (2, 0, 1)), 32, axis=2).reshape(36, 128)
    b2row = jnp.repeat(params["conv2_b"].astype(f32), 32).reshape(1, 128)

    gsel = jnp.repeat(jnp.eye(4, dtype=f32), 32, axis=1)                # (4, 128)

    # fc weight -> zero-dilated frame weights (2*N*32, 128):
    # fc_w[o, c*64 + h3*8 + w3] sits at row o*N*32 + n*32 + 4*h3, lane 32*c + 4*w3.
    wfc = params["fc_w"].astype(f32).reshape(2, 4, 8, 8)                # (o, c, h3, w3)
    wd = jnp.zeros((2, 4, 8, 4, 8, 4), f32).at[:, :, :, 0, :, 0].set(wfc)
    wd = wd.reshape(2, 4, 32, 32)                                       # (o, c, h, w)
    wd = jnp.transpose(wd, (0, 2, 1, 3)).reshape(2, 32, 128)            # (o, h, 32c+w)
    wfc_frame = jnp.tile(wd, (1, N, 1)).reshape(2 * R, L)
    bfc_row = jnp.pad(params["fc_b"].astype(f32), (0, 126)).reshape(1, 128)

    vmem = pl.BlockSpec(memory_space=pltpu.MemorySpace.VMEM)
    smem = pl.BlockSpec(memory_space=pltpu.MemorySpace.SMEM)

    out = pl.pallas_call(
        net_kernel,
        out_shape=jax.ShapeDtypeStruct((N, 128), f32),
        in_specs=[vmem, vmem, vmem, smem, smem,      # x, conv1 w/b, bn1 gamma/beta
                  vmem, vmem, smem, smem,            # conv2 w/b, bn2 gamma/beta
                  vmem, vmem, vmem],                 # group one-hots, fc frame, fc bias
        out_specs=vmem,
        compiler_params=pltpu.CompilerParams(vmem_limit_bytes=16 * 1024 * 1024),
    )(xrep, w1t, b1row,
      params["bn1_g"].astype(f32), params["bn1_b"].astype(f32),
      w2t, b2row,
      params["bn2_g"].astype(f32), params["bn2_b"].astype(f32),
      gsel, wfc_frame, bfc_row)
    return out[:, :2]                                # drop the lane padding


# ---------------------------------------------------------------------------
# Pure-JAX reference (for the in-script correctness check) and params
# ---------------------------------------------------------------------------
def net_reference(x_nchw, params):
    f32 = jnp.float32
    x = x_nchw.astype(f32)

    def block(x, w, b, g, beta):
        y = jax.lax.conv_general_dilated(
            x, w.astype(f32), window_strides=(1, 1), padding=((1, 1), (1, 1)),
            dimension_numbers=("NCHW", "OIHW", "NCHW"),
            precision=jax.lax.Precision.HIGHEST)
        y = y + b.reshape(1, -1, 1, 1)
        mean = jnp.mean(y, axis=(0, 2, 3), keepdims=True)
        var = jnp.mean(jnp.square(y - mean), axis=(0, 2, 3), keepdims=True)
        y = (y - mean) * jax.lax.rsqrt(var + BN_EPS)
        y = y * g.reshape(1, -1, 1, 1) + beta.reshape(1, -1, 1, 1)
        y = jnp.maximum(y, 0.0)
        n, c, hh, ww = y.shape
        return y.reshape(n, c, hh // 2, 2, ww // 2, 2).max(axis=(3, 5))

    y = block(x, params["conv1_w"], params["conv1_b"], params["bn1_g"], params["bn1_b"])
    y = block(y, params["conv2_w"], params["conv2_b"], params["bn2_g"], params["bn2_b"])
    flat = y.reshape(y.shape[0], -1)
    return jnp.dot(flat, params["fc_w"].astype(f32).T,
                   precision=jax.lax.Precision.HIGHEST) + params["fc_b"]


def init_params(key):
    ks = jax.random.split(key, 10)
    f32 = jnp.float32
    return {
        "conv1_w": 0.1 * jax.random.normal(ks[0], (4, 1, 3, 3), f32),
        "conv1_b": 0.1 * jax.random.normal(ks[1], (4,), f32),
        "bn1_g": 1.0 + 0.1 * jax.random.normal(ks[2], (4,), f32),
        "bn1_b": 0.1 * jax.random.normal(ks[3], (4,), f32),
        "conv2_w": 0.1 * jax.random.normal(ks[4], (4, 4, 3, 3), f32),
        "conv2_b": 0.1 * jax.random.normal(ks[5], (4,), f32),
        "bn2_g": 1.0 + 0.1 * jax.random.normal(ks[6], (4,), f32),
        "bn2_b": 0.1 * jax.random.normal(ks[7], (4,), f32),
        "fc_w": 0.1 * jax.random.normal(ks[8], (2, 256), f32),  # (out, in), PyTorch layout
        "fc_b": 0.1 * jax.random.normal(ks[9], (2,), f32),
    }


if __name__ == "__main__":
    key = jax.random.PRNGKey(0)
    k_x, k_p = jax.random.split(key)
    # Input consistent with Linear(4*8*8, 2): (N, 1, 32, 32) NCHW, small batch.
    x = jax.random.normal(k_x, (2, 1, 32, 32), jnp.float32)
    params = init_params(k_p)

    _roll_mode()                      # resolve the pltpu.roll convention eagerly

    logits = jax.jit(net_forward)(x, params)
    jax.block_until_ready(logits)
    assert logits.shape == (2, 2) and logits.dtype == jnp.float32

    ref = jax.jit(net_reference)(x, params)
    err = float(jnp.max(jnp.abs(logits - ref)))
    if err > 2e-3:
        raise SystemExit(f"mismatch vs pure-JAX reference: max abs err = {err}")
    print("KERNEL_OK")
</pallas_src>

<mosaic_0001>
module attributes {stable_mosaic.version = 11 : i64} {
  func.func @probe(%arg0: memref<8x128xf32, #tpu.memory_space<vmem>>, %arg1: memref<8x128xf32, #tpu.memory_space<vmem>>) attributes {dimension_semantics = [], scalar_prefetch = 0 : i64, scratch_operands = 0 : i64, tpu.core_type = #tpu.core_type<tc>} {
    %c0 = arith.constant 0 : index
    %c0_0 = arith.constant 0 : index
    %0 = vector.load %arg0[%c0, %c0_0] : memref<8x128xf32, #tpu.memory_space<vmem>>, vector<8x128xf32>
    %c1_i32 = arith.constant 1 : i32
    %1 = tpu.dynamic_rotate %0 by %c1_i32 dim 1 : vector<8x128xf32>, i32 -> vector<8x128xf32>
    %c0_1 = arith.constant 0 : index
    %c0_2 = arith.constant 0 : index
    %2 = vector.load %arg1[%c0_1, %c0_2] : memref<8x128xf32, #tpu.memory_space<vmem>>, vector<8x128xf32>
    tpu.vector_store %arg1[%c0_1, %c0_2], %1 {strides = array<i32>} : memref<8x128xf32, #tpu.memory_space<vmem>>, vector<8x128xf32>,
    return
  }
}

module attributes {stable_mosaic.version = 11 : i64} {
  func.func @net_kernel(%arg0: memref<64x128xf32, #tpu.memory_space<vmem>>, %arg1: memref<9x128xf32, #tpu.memory_space<vmem>>, %arg2: memref<1x128xf32, #tpu.memory_space<vmem>>, %arg3: memref<4xf32, #tpu.memory_space<smem>>, %arg4: memref<4xf32, #tpu.memory_space<smem>>, %arg5: memref<36x128xf32, #tpu.memory_space<vmem>>, %arg6: memref<1x128xf32, #tpu.memory_space<vmem>>, %arg7: memref<4xf32, #tpu.memory_space<smem>>, %arg8: memref<4xf32, #tpu.memory_space<smem>>, %arg9: memref<4x128xf32, #tpu.memory_space<vmem>>, %arg10: memref<128x128xf32, #tpu.memory_space<vmem>>, %arg11: memref<1x128xf32, #tpu.memory_space<vmem>>, %arg12: memref<2x128xf32, #tpu.memory_space<vmem>>) attributes {dimension_semantics = [], scalar_prefetch = 0 : i64, scratch_operands = 0 : i64, tpu.core_type = #tpu.core_type<tc>} {
    %0 = tpu.iota {dimensions = array<i32: 0>} : vector<64x1xi32>
    %1 = tpu.iota {dimensions = array<i32: 1>} : vector<1x128xi32>
    %c32_i32 = arith.constant 32 : i32
    %c0_i32 = arith.constant 0 : i32
    %2 = arith.cmpi eq, %c32_i32, %c0_i32 : i32
    %c1_i32 = arith.constant 1 : i32
    %3 = arith.select %2, %c1_i32, %c32_i32 : i32
    %4 = vector.broadcast %3 : i32 to vector<64x1xi32>
    %5 = arith.remsi %0, %4 : vector<64x1xi32>
    %c0_i32_0 = arith.constant 0 : i32
    %6 = vector.broadcast %c0_i32_0 : i32 to vector<64x1xi32>
    %7 = arith.cmpi ne, %5, %6 : vector<64x1xi32>
    %c0_i32_1 = arith.constant 0 : i32
    %8 = vector.broadcast %c0_i32_1 : i32 to vector<64x1xi32>
    %9 = arith.cmpi slt, %5, %8 : vector<64x1xi32>
    %c0_i32_2 = arith.constant 0 : i32
    %10 = arith.cmpi slt, %3, %c0_i32_2 : i32
    %11 = vector.broadcast %10 : i1 to vector<64x1xi1>
    %12 = vector.broadcast %11 : vector<64x1xi1> to vector<64x1xi1>
    %13 = arith.xori %9, %12 : vector<64x1xi1>
    %14 = arith.andi %13, %7 : vector<64x1xi1>
    %15 = vector.broadcast %3 : i32 to vector<64x1xi32>
    %16 = arith.addi %5, %15 : vector<64x1xi32>
    %17 = arith.select %14, %16, %5 : vector<64x1xi1>, vector<64x1xi32>
    %c32_i32_3 = arith.constant 32 : i32
    %c0_i32_4 = arith.constant 0 : i32
    %18 = arith.cmpi eq, %c32_i32_3, %c0_i32_4 : i32
    %c1_i32_5 = arith.constant 1 : i32
    %19 = arith.select %18, %c1_i32_5, %c32_i32_3 : i32
    %20 = vector.broadcast %19 : i32 to vector<1x128xi32>
    %21 = arith.remsi %1, %20 : vector<1x128xi32>
    %c0_i32_6 = arith.constant 0 : i32
    %22 = vector.broadcast %c0_i32_6 : i32 to vector<1x128xi32>
    %23 = arith.cmpi ne, %21, %22 : vector<1x128xi32>
    %c0_i32_7 = arith.constant 0 : i32
    %24 = vector.broadcast %c0_i32_7 : i32 to vector<1x128xi32>
    %25 = arith.cmpi slt, %21, %24 : vector<1x128xi32>
    %c0_i32_8 = arith.constant 0 : i32
    %26 = arith.cmpi slt, %19, %c0_i32_8 : i32
    %27 = vector.broadcast %26 : i1 to vector<1x128xi1>
    %28 = vector.broadcast %27 : vector<1x128xi1> to vector<1x128xi1>
    %29 = arith.xori %25, %28 : vector<1x128xi1>
    %30 = arith.andi %29, %23 : vector<1x128xi1>
    %31 = vector.broadcast %19 : i32 to vector<1x128xi32>
    %32 = arith.addi %21, %31 : vector<1x128xi32>
    %33 = arith.select %30, %32, %21 : vector<1x128xi1>, vector<1x128xi32>
    %c0_i32_9 = arith.constant 0 : i32
    %34 = vector.broadcast %c0_i32_9 : i32 to vector<64x1xi32>
    %35 = arith.cmpi ne, %17, %34 : vector<64x1xi32>
    %cst = arith.constant 1.000000e+00 : f32
    %cst_10 = arith.constant 0.000000e+00 : f32
    %36 = vector.broadcast %cst : f32 to vector<64x1xf32>
    %37 = vector.broadcast %cst_10 : f32 to vector<64x1xf32>
    %38 = arith.select %35, %36, %37 : vector<64x1xi1>, vector<64x1xf32>
    %c0_i32_11 = arith.constant 0 : i32
    %39 = vector.broadcast %c0_i32_11 : i32 to vector<1x128xi32>
    %40 = arith.cmpi ne, %33, %39 : vector<1x128xi32>
    %cst_12 = arith.constant 1.000000e+00 : f32
    %cst_13 = arith.constant 0.000000e+00 : f32
    %41 = vector.broadcast %cst_12 : f32 to vector<1x128xf32>
    %42 = vector.broadcast %cst_13 : f32 to vector<1x128xf32>
    %43 = arith.select %40, %41, %42 : vector<1x128xi1>, vector<1x128xf32>
    %c0 = arith.constant 0 : index
    %c0_14 = arith.constant 0 : index
    %44 = vector.load %arg0[%c0, %c0_14] : memref<64x128xf32, #tpu.memory_space<vmem>>, vector<64x128xf32>
    %c31_i32 = arith.constant 31 : i32
    %45 = vector.broadcast %c31_i32 : i32 to vector<64x1xi32>
    %46 = arith.cmpi ne, %17, %45 : vector<64x1xi32>
    %cst_15 = arith.constant 1.000000e+00 : f32
    %cst_16 = arith.constant 0.000000e+00 : f32
    %47 = vector.broadcast %cst_15 : f32 to vector<64x1xf32>
    %48 = vector.broadcast %cst_16 : f32 to vector<64x1xf32>
    %49 = arith.select %46, %47, %48 : vector<64x1xi1>, vector<64x1xf32>
    %c31_i32_17 = arith.constant 31 : i32
    %50 = vector.broadcast %c31_i32_17 : i32 to vector<1x128xi32>
    %51 = arith.cmpi ne, %33, %50 : vector<1x128xi32>
    %cst_18 = arith.constant 1.000000e+00 : f32
    %cst_19 = arith.constant 0.000000e+00 : f32
    %52 = vector.broadcast %cst_18 : f32 to vector<1x128xf32>
    %53 = vector.broadcast %cst_19 : f32 to vector<1x128xf32>
    %54 = arith.select %51, %52, %53 : vector<1x128xi1>, vector<1x128xf32>
    %cst_20 = arith.constant 0.000000e+00 : f32
    %55 = vector.broadcast %cst_20 : f32 to vector<64x128xf32>
    %56 = vector.extract_strided_slice %44 {offsets = [63, 0], sizes = [1, 128], strides = [1, 1]} : vector<64x128xf32> to vector<1x128xf32>
    %57 = vector.extract_strided_slice %44 {offsets = [0, 0], sizes = [63, 128], strides = [1, 1]} : vector<64x128xf32> to vector<63x128xf32>
    %58 = tpu.concatenate %56, %57 in 0 : vector<1x128xf32>, vector<63x128xf32> -> vector<64x128xf32>
    %59 = vector.broadcast %38 : vector<64x1xf32> to vector<64x128xf32>
    %60 = arith.mulf %58, %59 : vector<64x128xf32>
    %61 = vector.extract_strided_slice %60 {offsets = [0, 127], sizes = [64, 1], strides = [1, 1]} : vector<64x128xf32> to vector<64x1xf32>
    %62 = vector.extract_strided_slice %60 {offsets = [0, 0], sizes = [64, 127], strides = [1, 1]} : vector<64x128xf32> to vector<64x127xf32>
    %63 = tpu.concatenate %61, %62 in 1 : vector<64x1xf32>, vector<64x127xf32> -> vector<64x128xf32>
    %64 = vector.broadcast %43 : vector<1x128xf32> to vector<64x128xf32>
    %65 = arith.mulf %63, %64 : vector<64x128xf32>
    %c0_21 = arith.constant 0 : index
    %c0_22 = arith.constant 0 : index
    %66 = vector.load %arg1[%c0_21, %c0_22] : memref<9x128xf32, #tpu.memory_space<vmem>>, vector<1x128xf32>
    %67 = vector.broadcast %66 : vector<1x128xf32> to vector<64x128xf32>
    %68 = arith.mulf %67, %65 : vector<64x128xf32>
    %69 = arith.addf %55, %68 : vector<64x128xf32>
    %70 = vector.extract_strided_slice %44 {offsets = [63, 0], sizes = [1, 128], strides = [1, 1]} : vector<64x128xf32> to vector<1x128xf32>
    %71 = vector.extract_strided_slice %44 {offsets = [0, 0], sizes = [63, 128], strides = [1, 1]} : vector<64x128xf32> to vector<63x128xf32>
    %72 = tpu.concatenate %70, %71 in 0 : vector<1x128xf32>, vector<63x128xf32> -> vector<64x128xf32>
    %73 = vector.broadcast %38 : vector<64x1xf32> to vector<64x128xf32>
    %74 = arith.mulf %72, %73 : vector<64x128xf32>
    %c1 = arith.constant 1 : index
    %c0_23 = arith.constant 0 : index
    %75 = vector.load %arg1[%c1, %c0_23] : memref<9x128xf32, #tpu.memory_space<vmem>>, vector<1x128xf32>
    %76 = vector.broadcast %75 : vector<1x128xf32> to vector<64x128xf32>
    %77 = arith.mulf %76, %74 : vector<64x128xf32>
    %78 = arith.addf %69, %77 : vector<64x128xf32>
    %79 = vector.extract_strided_slice %44 {offsets = [63, 0], sizes = [1, 128], strides = [1, 1]} : vector<64x128xf32> to vector<1x128xf32>
    %80 = vector.extract_strided_slice %44 {offsets = [0, 0], sizes = [63, 128], strides = [1, 1]} : vector<64x128xf32> to vector<63x128xf32>
    %81 = tpu.concatenate %79, %80 in 0 : vector<1x128xf32>, vector<63x128xf32> -> vector<64x128xf32>
    %82 = vector.broadcast %38 : vector<64x1xf32> to vector<64x128xf32>
    %83 = arith.mulf %81, %82 : vector<64x128xf32>
    %84 = vector.extract_strided_slice %83 {offsets = [0, 1], sizes = [64, 127], strides = [1, 1]} : vector<64x128xf32> to vector<64x127xf32>
    %85 = vector.extract_strided_slice %83 {offsets = [0, 0], sizes = [64, 1], strides = [1, 1]} : vector<64x128xf32> to vector<64x1xf32>
    %86 = tpu.concatenate %84, %85 in 1 : vector<64x127xf32>, vector<64x1xf32> -> vector<64x128xf32>
    %87 = vector.broadcast %54 : vector<1x128xf32> to vector<64x128xf32>
    %88 = arith.mulf %86, %87 : vector<64x128xf32>
    %c2 = arith.constant 2 : index
    %c0_24 = arith.constant 0 : index
    %89 = vector.load %arg1[%c2, %c0_24] : memref<9x128xf32, #tpu.memory_space<vmem>>, vector<1x128xf32>
    %90 = vector.broadcast %89 : vector<1x128xf32> to vector<64x128xf32>
    %91 = arith.mulf %90, %88 : vector<64x128xf32>
    %92 = arith.addf %78, %91 : vector<64x128xf32>
    %93 = vector.extract_strided_slice %44 {offsets = [0, 127], sizes = [64, 1], strides = [1, 1]} : vector<64x128xf32> to vector<64x1xf32>
    %94 = vector.extract_strided_slice %44 {offsets = [0, 0], sizes = [64, 127], strides = [1, 1]} : vector<64x128xf32> to vector<64x127xf32>
    %95 = tpu.concatenate %93, %94 in 1 : vector<64x1xf32>, vector<64x127xf32> -> vector<64x128xf32>
    %96 = vector.broadcast %43 : vector<1x128xf32> to vector<64x128xf32>
    %97 = arith.mulf %95, %96 : vector<64x128xf32>
    %c3 = arith.constant 3 : index
    %c0_25 = arith.constant 0 : index
    %98 = vector.load %arg1[%c3, %c0_25] : memref<9x128xf32, #tpu.memory_space<vmem>>, vector<1x128xf32>
    %99 = vector.broadcast %98 : vector<1x128xf32> to vector<64x128xf32>
    %100 = arith.mulf %99, %97 : vector<64x128xf32>
    %101 = arith.addf %92, %100 : vector<64x128xf32>
    %c4 = arith.constant 4 : index
    %c0_26 = arith.constant 0 : index
    %102 = vector.load %arg1[%c4, %c0_26] : memref<9x128xf32, #tpu.memory_space<vmem>>, vector<1x128xf32>
    %103 = vector.broadcast %102 : vector<1x128xf32> to vector<64x128xf32>
    %104 = arith.mulf %103, %44 : vector<64x128xf32>
    %105 = arith.addf %101, %104 : vector<64x128xf32>
    %106 = vector.extract_strided_slice %44 {offsets = [0, 1], sizes = [64, 127], strides = [1, 1]} : vector<64x128xf32> to vector<64x127xf32>
    %107 = vector.extract_strided_slice %44 {offsets = [0, 0], sizes = [64, 1], strides = [1, 1]} : vector<64x128xf32> to vector<64x1xf32>
    %108 = tpu.concatenate %106, %107 in 1 : vector<64x127xf32>, vector<64x1xf32> -> vector<64x128xf32>
    %109 = vector.broadcast %54 : vector<1x128xf32> to vector<64x128xf32>
    %110 = arith.mulf %108, %109 : vector<64x128xf32>
    %c5 = arith.constant 5 : index
    %c0_27 = arith.constant 0 : index
    %111 = vector.load %arg1[%c5, %c0_27] : memref<9x128xf32, #tpu.memory_space<vmem>>, vector<1x128xf32>
    %112 = vector.broadcast %111 : vector<1x128xf32> to vector<64x128xf32>
    %113 = arith.mulf %112, %110 : vector<64x128xf32>
    %114 = arith.addf %105, %113 : vector<64x128xf32>
    %115 = vector.extract_strided_slice %44 {offsets = [1, 0], sizes = [63, 128], strides = [1, 1]} : vector<64x128xf32> to vector<63x128xf32>
    %116 = vector.extract_strided_slice %44 {offsets = [0, 0], sizes = [1, 128], strides = [1, 1]} : vector<64x128xf32> to vector<1x128xf32>
    %117 = tpu.concatenate %115, %116 in 0 : vector<63x128xf32>, vector<1x128xf32> -> vector<64x128xf32>
    %118 = vector.broadcast %49 : vector<64x1xf32> to vector<64x128xf32>
    %119 = arith.mulf %117, %118 : vector<64x128xf32>
    %120 = vector.extract_strided_slice %119 {offsets = [0, 127], sizes = [64, 1], strides = [1, 1]} : vector<64x128xf32> to vector<64x1xf32>
    %121 = vector.extract_strided_slice %119 {offsets = [0, 0], sizes = [64, 127], strides = [1, 1]} : vector<64x128xf32> to vector<64x127xf32>
    %122 = tpu.concatenate %120, %121 in 1 : vector<64x1xf32>, vector<64x127xf32> -> vector<64x128xf32>
    %123 = vector.broadcast %43 : vector<1x128xf32> to vector<64x128xf32>
    %124 = arith.mulf %122, %123 : vector<64x128xf32>
    %c6 = arith.constant 6 : index
    %c0_28 = arith.constant 0 : index
    %125 = vector.load %arg1[%c6, %c0_28] : memref<9x128xf32, #tpu.memory_space<vmem>>, vector<1x128xf32>
    %126 = vector.broadcast %125 : vector<1x128xf32> to vector<64x128xf32>
    %127 = arith.mulf %126, %124 : vector<64x128xf32>
    %128 = arith.addf %114, %127 : vector<64x128xf32>
    %129 = vector.extract_strided_slice %44 {offsets = [1, 0], sizes = [63, 128], strides = [1, 1]} : vector<64x128xf32> to vector<63x128xf32>
    %130 = vector.extract_strided_slice %44 {offsets = [0, 0], sizes = [1, 128], strides = [1, 1]} : vector<64x128xf32> to vector<1x128xf32>
    %131 = tpu.concatenate %129, %130 in 0 : vector<63x128xf32>, vector<1x128xf32> -> vector<64x128xf32>
    %132 = vector.broadcast %49 : vector<64x1xf32> to vector<64x128xf32>
    %133 = arith.mulf %131, %132 : vector<64x128xf32>
    %c7 = arith.constant 7 : index
    %c0_29 = arith.constant 0 : index
    %134 = vector.load %arg1[%c7, %c0_29] : memref<9x128xf32, #tpu.memory_space<vmem>>, vector<1x128xf32>
    %135 = vector.broadcast %134 : vector<1x128xf32> to vector<64x128xf32>
    %136 = arith.mulf %135, %133 : vector<64x128xf32>
    %137 = arith.addf %128, %136 : vector<64x128xf32>
    %138 = vector.extract_strided_slice %44 {offsets = [1, 0], sizes = [63, 128], strides = [1, 1]} : vector<64x128xf32> to vector<63x128xf32>
    %139 = vector.extract_strided_slice %44 {offsets = [0, 0], sizes = [1, 128], strides = [1, 1]} : vector<64x128xf32> to vector<1x128xf32>
    %140 = tpu.concatenate %138, %139 in 0 : vector<63x128xf32>, vector<1x128xf32> -> vector<64x128xf32>
    %141 = vector.broadcast %49 : vector<64x1xf32> to vector<64x128xf32>
    %142 = arith.mulf %140, %141 : vector<64x128xf32>
    %143 = vector.extract_strided_slice %142 {offsets = [0, 1], sizes = [64, 127], strides = [1, 1]} : vector<64x128xf32> to vector<64x127xf32>
    %144 = vector.extract_strided_slice %142 {offsets = [0, 0], sizes = [64, 1], strides = [1, 1]} : vector<64x128xf32> to vector<64x1xf32>
    %145 = tpu.concatenate %143, %144 in 1 : vector<64x127xf32>, vector<64x1xf32> -> vector<64x128xf32>
    %146 = vector.broadcast %54 : vector<1x128xf32> to vector<64x128xf32>
    %147 = arith.mulf %145, %146 : vector<64x128xf32>
    %c8 = arith.constant 8 : index
    %c0_30 = arith.constant 0 : index
    %148 = vector.load %arg1[%c8, %c0_30] : memref<9x128xf32, #tpu.memory_space<vmem>>, vector<1x128xf32>
    %149 = vector.broadcast %148 : vector<1x128xf32> to vector<64x128xf32>
    %150 = arith.mulf %149, %147 : vector<64x128xf32>
    %151 = arith.addf %137, %150 : vector<64x128xf32>
    %c0_31 = arith.constant 0 : index
    %c0_32 = arith.constant 0 : index
    %152 = vector.load %arg2[%c0_31, %c0_32] : memref<1x128xf32, #tpu.memory_space<vmem>>, vector<1x128xf32>
    %153 = vector.broadcast %152 : vector<1x128xf32> to vector<64x128xf32>
    %154 = arith.addf %151, %153 : vector<64x128xf32>
    %cst_33 = arith.constant dense<0.000000e+00> : vector<128xf32>
    %155 = vector.multi_reduction <add>, %154, %cst_33 [0] : vector<64x128xf32> to vector<128xf32>
    %156 = vector.shape_cast %155 : vector<128xf32> to vector<1x128xf32>
    %157 = arith.mulf %154, %154 : vector<64x128xf32>
    %cst_34 = arith.constant dense<0.000000e+00> : vector<128xf32>
    %158 = vector.multi_reduction <add>, %157, %cst_34 [0] : vector<64x128xf32> to vector<128xf32>
    %159 = vector.shape_cast %158 : vector<128xf32> to vector<1x128xf32>
    %cst_35 = arith.constant 0.000000e+00 : f32
    %160 = vector.broadcast %cst_35 : f32 to vector<1x128xf32>
    %cst_36 = arith.constant 0.000000e+00 : f32
    %161 = vector.broadcast %cst_36 : f32 to vector<1x128xf32>
    %162 = vector.extract_strided_slice %156 {offsets = [0, 0], sizes = [1, 32], strides = [1, 1]} : vector<1x128xf32> to vector<1x32xf32>
    %cst_37 = arith.constant dense<0.000000e+00> : vector<1xf32>
    %163 = vector.multi_reduction <add>, %162, %cst_37 [1] : vector<1x32xf32> to vector<1xf32>
    %164 = vector.shape_cast %163 : vector<1xf32> to vector<1x1xf32>
    %cst_38 = arith.constant 4.8828125E-4 : f32
    %165 = vector.broadcast %cst_38 : f32 to vector<1x1xf32>
    %166 = arith.mulf %164, %165 : vector<1x1xf32>
    %167 = vector.extract_strided_slice %159 {offsets = [0, 0], sizes = [1, 32], strides = [1, 1]} : vector<1x128xf32> to vector<1x32xf32>
    %cst_39 = arith.constant dense<0.000000e+00> : vector<1xf32>
    %168 = vector.multi_reduction <add>, %167, %cst_39 [1] : vector<1x32xf32> to vector<1xf32>
    %169 = vector.shape_cast %168 : vector<1xf32> to vector<1x1xf32>
    %cst_40 = arith.constant 4.8828125E-4 : f32
    %170 = vector.broadcast %cst_40 : f32 to vector<1x1xf32>
    %171 = arith.mulf %169, %170 : vector<1x1xf32>
    %172 = arith.mulf %166, %166 : vector<1x1xf32>
    %173 = arith.subf %171, %172 : vector<1x1xf32>
    %cst_41 = arith.constant 0.000000e+00 : f32
    %174 = vector.broadcast %cst_41 : f32 to vector<1x1xf32>
    %175 = arith.maximumf %173, %174 : vector<1x1xf32>
    %c0_42 = arith.constant 0 : index
    %176 = memref.load %arg3[%c0_42] : memref<4xf32, #tpu.memory_space<smem>>
    %cst_43 = arith.constant 9.99999974E-6 : f32
    %177 = vector.broadcast %cst_43 : f32 to vector<1x1xf32>
    %178 = arith.addf %175, %177 : vector<1x1xf32>
    %179 = math.rsqrt %178 : vector<1x1xf32>
    %180 = vector.broadcast %176 : f32 to vector<1x1xf32>
    %181 = arith.mulf %180, %179 : vector<1x1xf32>
    %c0_44 = arith.constant 0 : index
    %182 = memref.load %arg4[%c0_44] : memref<4xf32, #tpu.memory_space<smem>>
    %183 = arith.mulf %166, %181 : vector<1x1xf32>
    %184 = vector.broadcast %182 : f32 to vector<1x1xf32>
    %185 = arith.subf %184, %183 : vector<1x1xf32>
    %c0_45 = arith.constant 0 : index
    %c0_46 = arith.constant 0 : index
    %186 = vector.load %arg9[%c0_45, %c0_46] : memref<4x128xf32, #tpu.memory_space<vmem>>, vector<1x128xf32>
    %187 = vector.broadcast %181 : vector<1x1xf32> to vector<1x128xf32>
    %188 = arith.mulf %187, %186 : vector<1x128xf32>
    %189 = arith.addf %160, %188 : vector<1x128xf32>
    %190 = vector.broadcast %185 : vector<1x1xf32> to vector<1x128xf32>
    %191 = arith.mulf %190, %186 : vector<1x128xf32>
    %192 = arith.addf %161, %191 : vector<1x128xf32>
    %193 = vector.extract_strided_slice %156 {offsets = [0, 32], sizes = [1, 32], strides = [1, 1]} : vector<1x128xf32> to vector<1x32xf32>
    %cst_47 = arith.constant dense<0.000000e+00> : vector<1xf32>
    %194 = vector.multi_reduction <add>, %193, %cst_47 [1] : vector<1x32xf32> to vector<1xf32>
    %195 = vector.shape_cast %194 : vector<1xf32> to vector<1x1xf32>
    %cst_48 = arith.constant 4.8828125E-4 : f32
    %196 = vector.broadcast %cst_48 : f32 to vector<1x1xf32>
    %197 = arith.mulf %195, %196 : vector<1x1xf32>
    %198 = vector.extract_strided_slice %159 {offsets = [0, 32], sizes = [1, 32], strides = [1, 1]} : vector<1x128xf32> to vector<1x32xf32>
    %cst_49 = arith.constant dense<0.000000e+00> : vector<1xf32>
    %199 = vector.multi_reduction <add>, %198, %cst_49 [1] : vector<1x32xf32> to vector<1xf32>
    %200 = vector.shape_cast %199 : vector<1xf32> to vector<1x1xf32>
    %cst_50 = arith.constant 4.8828125E-4 : f32
    %201 = vector.broadcast %cst_50 : f32 to vector<1x1xf32>
    %202 = arith.mulf %200, %201 : vector<1x1xf32>
    %203 = arith.mulf %197, %197 : vector<1x1xf32>
    %204 = arith.subf %202, %203 : vector<1x1xf32>
    %cst_51 = arith.constant 0.000000e+00 : f32
    %205 = vector.broadcast %cst_51 : f32 to vector<1x1xf32>
    %206 = arith.maximumf %204, %205 : vector<1x1xf32>
    %c1_52 = arith.constant 1 : index
    %207 = memref.load %arg3[%c1_52] : memref<4xf32, #tpu.memory_space<smem>>
    %cst_53 = arith.constant 9.99999974E-6 : f32
    %208 = vector.broadcast %cst_53 : f32 to vector<1x1xf32>
    %209 = arith.addf %206, %208 : vector<1x1xf32>
    %210 = math.rsqrt %209 : vector<1x1xf32>
    %211 = vector.broadcast %207 : f32 to vector<1x1xf32>
    %212 = arith.mulf %211, %210 : vector<1x1xf32>
    %c1_54 = arith.constant 1 : index
    %213 = memref.load %arg4[%c1_54] : memref<4xf32, #tpu.memory_space<smem>>
    %214 = arith.mulf %197, %212 : vector<1x1xf32>
    %215 = vector.broadcast %213 : f32 to vector<1x1xf32>
    %216 = arith.subf %215, %214 : vector<1x1xf32>
    %c1_55 = arith.constant 1 : index
    %c0_56 = arith.constant 0 : index
    %217 = vector.load %arg9[%c1_55, %c0_56] : memref<4x128xf32, #tpu.memory_space<vmem>>, vector<1x128xf32>
    %218 = vector.broadcast %212 : vector<1x1xf32> to vector<1x128xf32>
    %219 = arith.mulf %218, %217 : vector<1x128xf32>
    %220 = arith.addf %189, %219 : vector<1x128xf32>
    %221 = vector.broadcast %216 : vector<1x1xf32> to vector<1x128xf32>
    %222 = arith.mulf %221, %217 : vector<1x128xf32>
    %223 = arith.addf %192, %222 : vector<1x128xf32>
    %224 = vector.extract_strided_slice %156 {offsets = [0, 64], sizes = [1, 32], strides = [1, 1]} : vector<1x128xf32> to vector<1x32xf32>
    %cst_57 = arith.constant dense<0.000000e+00> : vector<1xf32>
    %225 = vector.multi_reduction <add>, %224, %cst_57 [1] : vector<1x32xf32> to vector<1xf32>
    %226 = vector.shape_cast %225 : vector<1xf32> to vector<1x1xf32>
    %cst_58 = arith.constant 4.8828125E-4 : f32
    %227 = vector.broadcast %cst_58 : f32 to vector<1x1xf32>
    %228 = arith.mulf %226, %227 : vector<1x1xf32>
    %229 = vector.extract_strided_slice %159 {offsets = [0, 64], sizes = [1, 32], strides = [1, 1]} : vector<1x128xf32> to vector<1x32xf32>
    %cst_59 = arith.constant dense<0.000000e+00> : vector<1xf32>
    %230 = vector.multi_reduction <add>, %229, %cst_59 [1] : vector<1x32xf32> to vector<1xf32>
    %231 = vector.shape_cast %230 : vector<1xf32> to vector<1x1xf32>
    %cst_60 = arith.constant 4.8828125E-4 : f32
    %232 = vector.broadcast %cst_60 : f32 to vector<1x1xf32>
    %233 = arith.mulf %231, %232 : vector<1x1xf32>
    %234 = arith.mulf %228, %228 : vector<1x1xf32>
    %235 = arith.subf %233, %234 : vector<1x1xf32>
    %cst_61 = arith.constant 0.000000e+00 : f32
    %236 = vector.broadcast %cst_61 : f32 to vector<1x1xf32>
    %237 = arith.maximumf %235, %236 : vector<1x1xf32>
    %c2_62 = arith.constant 2 : index
    %238 = memref.load %arg3[%c2_62] : memref<4xf32, #tpu.memory_space<smem>>
    %cst_63 = arith.constant 9.99999974E-6 : f32
    %239 = vector.broadcast %cst_63 : f32 to vector<1x1xf32>
    %240 = arith.addf %237, %239 : vector<1x1xf32>
    %241 = math.rsqrt %240 : vector<1x1xf32>
    %242 = vector.broadcast %238 : f32 to vector<1x1xf32>
    %243 = arith.mulf %242, %241 : vector<1x1xf32>
    %c2_64 = arith.constant 2 : index
    %244 = memref.load %arg4[%c2_64] : memref<4xf32, #tpu.memory_space<smem>>
    %245 = arith.mulf %228, %243 : vector<1x1xf32>
    %246 = vector.broadcast %244 : f32 to vector<1x1xf32>
    %247 = arith.subf %246, %245 : vector<1x1xf32>
    %c2_65 = arith.constant 2 : index
    %c0_66 = arith.constant 0 : index
    %248 = vector.load %arg9[%c2_65, %c0_66] : memref<4x128xf32, #tpu.memory_space<vmem>>, vector<1x128xf32>
    %249 = vector.broadcast %243 : vector<1x1xf32> to vector<1x128xf32>
    %250 = arith.mulf %249, %248 : vector<1x128xf32>
    %251 = arith.addf %220, %250 : vector<1x128xf32>
    %252 = vector.broadcast %247 : vector<1x1xf32> to vector<1x128xf32>
    %253 = arith.mulf %252, %248 : vector<1x128xf32>
    %254 = arith.addf %223, %253 : vector<1x128xf32>
    %255 = vector.extract_strided_slice %156 {offsets = [0, 96], sizes = [1, 32], strides = [1, 1]} : vector<1x128xf32> to vector<1x32xf32>
    %cst_67 = arith.constant dense<0.000000e+00> : vector<1xf32>
    %256 = vector.multi_reduction <add>, %255, %cst_67 [1] : vector<1x32xf32> to vector<1xf32>
    %257 = vector.shape_cast %256 : vector<1xf32> to vector<1x1xf32>
    %cst_68 = arith.constant 4.8828125E-4 : f32
    %258 = vector.broadcast %cst_68 : f32 to vector<1x1xf32>
    %259 = arith.mulf %257, %258 : vector<1x1xf32>
    %260 = vector.extract_strided_slice %159 {offsets = [0, 96], sizes = [1, 32], strides = [1, 1]} : vector<1x128xf32> to vector<1x32xf32>
    %cst_69 = arith.constant dense<0.000000e+00> : vector<1xf32>
    %261 = vector.multi_reduction <add>, %260, %cst_69 [1] : vector<1x32xf32> to vector<1xf32>
    %262 = vector.shape_cast %261 : vector<1xf32> to vector<1x1xf32>
    %cst_70 = arith.constant 4.8828125E-4 : f32
    %263 = vector.broadcast %cst_70 : f32 to vector<1x1xf32>
    %264 = arith.mulf %262, %263 : vector<1x1xf32>
    %265 = arith.mulf %259, %259 : vector<1x1xf32>
    %266 = arith.subf %264, %265 : vector<1x1xf32>
    %cst_71 = arith.constant 0.000000e+00 : f32
    %267 = vector.broadcast %cst_71 : f32 to vector<1x1xf32>
    %268 = arith.maximumf %266, %267 : vector<1x1xf32>
    %c3_72 = arith.constant 3 : index
    %269 = memref.load %arg3[%c3_72] : memref<4xf32, #tpu.memory_space<smem>>
    %cst_73 = arith.constant 9.99999974E-6 : f32
    %270 = vector.broadcast %cst_73 : f32 to vector<1x1xf32>
    %271 = arith.addf %268, %270 : vector<1x1xf32>
    %272 = math.rsqrt %271 : vector<1x1xf32>
    %273 = vector.broadcast %269 : f32 to vector<1x1xf32>
    %274 = arith.mulf %273, %272 : vector<1x1xf32>
    %c3_74 = arith.constant 3 : index
    %275 = memref.load %arg4[%c3_74] : memref<4xf32, #tpu.memory_space<smem>>
    %276 = arith.mulf %259, %274 : vector<1x1xf32>
    %277 = vector.broadcast %275 : f32 to vector<1x1xf32>
    %278 = arith.subf %277, %276 : vector<1x1xf32>
    %c3_75 = arith.constant 3 : index
    %c0_76 = arith.constant 0 : index
    %279 = vector.load %arg9[%c3_75, %c0_76] : memref<4x128xf32, #tpu.memory_space<vmem>>, vector<1x128xf32>
    %280 = vector.broadcast %274 : vector<1x1xf32> to vector<1x128xf32>
    %281 = arith.mulf %280, %279 : vector<1x128xf32>
    %282 = arith.addf %251, %281 : vector<1x128xf32>
    %283 = vector.broadcast %278 : vector<1x1xf32> to vector<1x128xf32>
    %284 = arith.mulf %283, %279 : vector<1x128xf32>
    %285 = arith.addf %254, %284 : vector<1x128xf32>
    %286 = vector.broadcast %282 : vector<1x128xf32> to vector<64x128xf32>
    %287 = arith.mulf %154, %286 : vector<64x128xf32>
    %288 = vector.broadcast %285 : vector<1x128xf32> to vector<64x128xf32>
    %289 = arith.addf %287, %288 : vector<64x128xf32>
    %cst_77 = arith.constant 0.000000e+00 : f32
    %290 = vector.broadcast %cst_77 : f32 to vector<64x128xf32>
    %291 = arith.maximumf %289, %290 : vector<64x128xf32>
    %292 = vector.extract_strided_slice %291 {offsets = [1, 0], sizes = [63, 128], strides = [1, 1]} : vector<64x128xf32> to vector<63x128xf32>
    %293 = vector.extract_strided_slice %291 {offsets = [0, 0], sizes = [1, 128], strides = [1, 1]} : vector<64x128xf32> to vector<1x128xf32>
    %294 = tpu.concatenate %292, %293 in 0 : vector<63x128xf32>, vector<1x128xf32> -> vector<64x128xf32>
    %295 = arith.maximumf %291, %294 : vector<64x128xf32>
    %296 = vector.extract_strided_slice %295 {offsets = [0, 1], sizes = [64, 127], strides = [1, 1]} : vector<64x128xf32> to vector<64x127xf32>
    %297 = vector.extract_strided_slice %295 {offsets = [0, 0], sizes = [64, 1], strides = [1, 1]} : vector<64x128xf32> to vector<64x1xf32>
    %298 = tpu.concatenate %296, %297 in 1 : vector<64x127xf32>, vector<64x1xf32> -> vector<64x128xf32>
    %299 = arith.maximumf %295, %298 : vector<64x128xf32>
    %c30_i32 = arith.constant 30 : i32
    %300 = vector.broadcast %c30_i32 : i32 to vector<64x1xi32>
    %301 = arith.cmpi ne, %17, %300 : vector<64x1xi32>
    %cst_78 = arith.constant 1.000000e+00 : f32
    %cst_79 = arith.constant 0.000000e+00 : f32
    %302 = vector.broadcast %cst_78 : f32 to vector<64x1xf32>
    %303 = vector.broadcast %cst_79 : f32 to vector<64x1xf32>
    %304 = arith.select %301, %302, %303 : vector<64x1xi1>, vector<64x1xf32>
    %c30_i32_80 = arith.constant 30 : i32
    %305 = vector.broadcast %c30_i32_80 : i32 to vector<1x128xi32>
    %306 = arith.cmpi ne, %33, %305 : vector<1x128xi32>
    %cst_81 = arith.constant 1.000000e+00 : f32
    %cst_82 = arith.constant 0.000000e+00 : f32
    %307 = vector.broadcast %cst_81 : f32 to vector<1x128xf32>
    %308 = vector.broadcast %cst_82 : f32 to vector<1x128xf32>
    %309 = arith.select %306, %307, %308 : vector<1x128xi1>, vector<1x128xf32>
    %cst_83 = arith.constant 0.000000e+00 : f32
    %310 = vector.broadcast %cst_83 : f32 to vector<64x128xf32>
    %311 = vector.extract_strided_slice %299 {offsets = [62, 0], sizes = [2, 128], strides = [1, 1]} : vector<64x128xf32> to vector<2x128xf32>
    %312 = vector.extract_strided_slice %299 {offsets = [0, 0], sizes = [62, 128], strides = [1, 1]} : vector<64x128xf32> to vector<62x128xf32>
    %313 = tpu.concatenate %311, %312 in 0 : vector<2x128xf32>, vector<62x128xf32> -> vector<64x128xf32>
    %314 = vector.broadcast %38 : vector<64x1xf32> to vector<64x128xf32>
    %315 = arith.mulf %313, %314 : vector<64x128xf32>
    %316 = vector.extract_strided_slice %315 {offsets = [0, 126], sizes = [64, 2], strides = [1, 1]} : vector<64x128xf32> to vector<64x2xf32>
    %317 = vector.extract_strided_slice %315 {offsets = [0, 0], sizes = [64, 126], strides = [1, 1]} : vector<64x128xf32> to vector<64x126xf32>
    %318 = tpu.concatenate %316, %317 in 1 : vector<64x2xf32>, vector<64x126xf32> -> vector<64x128xf32>
    %319 = vector.broadcast %43 : vector<1x128xf32> to vector<64x128xf32>
    %320 = arith.mulf %318, %319 : vector<64x128xf32>
    %c0_84 = arith.constant 0 : index
    %c0_85 = arith.constant 0 : index
    %321 = vector.load %arg5[%c0_84, %c0_85] : memref<36x128xf32, #tpu.memory_space<vmem>>, vector<1x128xf32>
    %322 = vector.broadcast %321 : vector<1x128xf32> to vector<64x128xf32>
    %323 = arith.mulf %322, %320 : vector<64x128xf32>
    %324 = arith.addf %310, %323 : vector<64x128xf32>
    %325 = vector.extract_strided_slice %320 {offsets = [0, 32], sizes = [64, 96], strides = [1, 1]} : vector<64x128xf32> to vector<64x96xf32>
    %326 = vector.extract_strided_slice %320 {offsets = [0, 0], sizes = [64, 32], strides = [1, 1]} : vector<64x128xf32> to vector<64x32xf32>
    %327 = tpu.concatenate %325, %326 in 1 : vector<64x96xf32>, vector<64x32xf32> -> vector<64x128xf32>
    %c1_86 = arith.constant 1 : index
    %c0_87 = arith.constant 0 : index
    %328 = vector.load %arg5[%c1_86, %c0_87] : memref<36x128xf32, #tpu.memory_space<vmem>>, vector<1x128xf32>
    %329 = vector.broadcast %328 : vector<1x128xf32> to vector<64x128xf32>
    %330 = arith.mulf %329, %327 : vector<64x128xf32>
    %331 = arith.addf %324, %330 : vector<64x128xf32>
    %332 = vector.extract_strided_slice %320 {offsets = [0, 64], sizes = [64, 64], strides = [1, 1]} : vector<64x128xf32> to vector<64x64xf32>
    %333 = vector.extract_strided_slice %320 {offsets = [0, 0], sizes = [64, 64], strides = [1, 1]} : vector<64x128xf32> to vector<64x64xf32>
    %334 = tpu.concatenate %332, %333 in 1 : vector<64x64xf32>, vector<64x64xf32> -> vector<64x128xf32>
    %c2_88 = arith.constant 2 : index
    %c0_89 = arith.constant 0 : index
    %335 = vector.load %arg5[%c2_88, %c0_89] : memref<36x128xf32, #tpu.memory_space<vmem>>, vector<1x128xf32>
    %336 = vector.broadcast %335 : vector<1x128xf32> to vector<64x128xf32>
    %337 = arith.mulf %336, %334 : vector<64x128xf32>
    %338 = arith.addf %331, %337 : vector<64x128xf32>
    %339 = vector.extract_strided_slice %320 {offsets = [0, 96], sizes = [64, 32], strides = [1, 1]} : vector<64x128xf32> to vector<64x32xf32>
    %340 = vector.extract_strided_slice %320 {offsets = [0, 0], sizes = [64, 96], strides = [1, 1]} : vector<64x128xf32> to vector<64x96xf32>
    %341 = tpu.concatenate %339, %340 in 1 : vector<64x32xf32>, vector<64x96xf32> -> vector<64x128xf32>
    %c3_90 = arith.constant 3 : index
    %c0_91 = arith.constant 0 : index
    %342 = vector.load %arg5[%c3_90, %c0_91] : memref<36x128xf32, #tpu.memory_space<vmem>>, vector<1x128xf32>
    %343 = vector.broadcast %342 : vector<1x128xf32> to vector<64x128xf32>
    %344 = arith.mulf %343, %341 : vector<64x128xf32>
    %345 = arith.addf %338, %344 : vector<64x128xf32>
    %346 = vector.extract_strided_slice %299 {offsets = [62, 0], sizes = [2, 128], strides = [1, 1]} : vector<64x128xf32> to vector<2x128xf32>
    %347 = vector.extract_strided_slice %299 {offsets = [0, 0], sizes = [62, 128], strides = [1, 1]} : vector<64x128xf32> to vector<62x128xf32>
    %348 = tpu.concatenate %346, %347 in 0 : vector<2x128xf32>, vector<62x128xf32> -> vector<64x128xf32>
    %349 = vector.broadcast %38 : vector<64x1xf32> to vector<64x128xf32>
    %350 = arith.mulf %348, %349 : vector<64x128xf32>
    %c4_92 = arith.constant 4 : index
    %c0_93 = arith.constant 0 : index
    %351 = vector.load %arg5[%c4_92, %c0_93] : memref<36x128xf32, #tpu.memory_space<vmem>>, vector<1x128xf32>
    %352 = vector.broadcast %351 : vector<1x128xf32> to vector<64x128xf32>
    %353 = arith.mulf %352, %350 : vector<64x128xf32>
    %354 = arith.addf %345, %353 : vector<64x128xf32>
    %355 = vector.extract_strided_slice %350 {offsets = [0, 32], sizes = [64, 96], strides = [1, 1]} : vector<64x128xf32> to vector<64x96xf32>
    %356 = vector.extract_strided_slice %350 {offsets = [0, 0], sizes = [64, 32], strides = [1, 1]} : vector<64x128xf32> to vector<64x32xf32>
    %357 = tpu.concatenate %355, %356 in 1 : vector<64x96xf32>, vector<64x32xf32> -> vector<64x128xf32>
    %c5_94 = arith.constant 5 : index
    %c0_95 = arith.constant 0 : index
    %358 = vector.load %arg5[%c5_94, %c0_95] : memref<36x128xf32, #tpu.memory_space<vmem>>, vector<1x128xf32>
    %359 = vector.broadcast %358 : vector<1x128xf32> to vector<64x128xf32>
    %360 = arith.mulf %359, %357 : vector<64x128xf32>
    %361 = arith.addf %354, %360 : vector<64x128xf32>
    %362 = vector.extract_strided_slice %350 {offsets = [0, 64], sizes = [64, 64], strides = [1, 1]} : vector<64x128xf32> to vector<64x64xf32>
    %363 = vector.extract_strided_slice %350 {offsets = [0, 0], sizes = [64, 64], strides = [1, 1]} : vector<64x128xf32> to vector<64x64xf32>
    %364 = tpu.concatenate %362, %363 in 1 : vector<64x64xf32>, vector<64x64xf32> -> vector<64x128xf32>
    %c6_96 = arith.constant 6 : index
    %c0_97 = arith.constant 0 : index
    %365 = vector.load %arg5[%c6_96, %c0_97] : memref<36x128xf32, #tpu.memory_space<vmem>>, vector<1x128xf32>
    %366 = vector.broadcast %365 : vector<1x128xf32> to vector<64x128xf32>
    %367 = arith.mulf %366, %364 : vector<64x128xf32>
    %368 = arith.addf %361, %367 : vector<64x128xf32>
    %369 = vector.extract_strided_slice %350 {offsets = [0, 96], sizes = [64, 32], strides = [1, 1]} : vector<64x128xf32> to vector<64x32xf32>
    %370 = vector.extract_strided_slice %350 {offsets = [0, 0], sizes = [64, 96], strides = [1, 1]} : vector<64x128xf32> to vector<64x96xf32>
    %371 = tpu.concatenate %369, %370 in 1 : vector<64x32xf32>, vector<64x96xf32> -> vector<64x128xf32>
    %c7_98 = arith.constant 7 : index
    %c0_99 = arith.constant 0 : index
    %372 = vector.load %arg5[%c7_98, %c0_99] : memref<36x128xf32, #tpu.memory_space<vmem>>, vector<1x128xf32>
    %373 = vector.broadcast %372 : vector<1x128xf32> to vector<64x128xf32>
    %374 = arith.mulf %373, %371 : vector<64x128xf32>
    %375 = arith.addf %368, %374 : vector<64x128xf32>
    %376 = vector.extract_strided_slice %299 {offsets = [62, 0], sizes = [2, 128], strides = [1, 1]} : vector<64x128xf32> to vector<2x128xf32>
    %377 = vector.extract_strided_slice %299 {offsets = [0, 0], sizes = [62, 128], strides = [1, 1]} : vector<64x128xf32> to vector<62x128xf32>
    %378 = tpu.concatenate %376, %377 in 0 : vector<2x128xf32>, vector<62x128xf32> -> vector<64x128xf32>
    %379 = vector.broadcast %38 : vector<64x1xf32> to vector<64x128xf32>
    %380 = arith.mulf %378, %379 : vector<64x128xf32>
    %381 = vector.extract_strided_slice %380 {offsets = [0, 2], sizes = [64, 126], strides = [1, 1]} : vector<64x128xf32> to vector<64x126xf32>
    %382 = vector.extract_strided_slice %380 {offsets = [0, 0], sizes = [64, 2], strides = [1, 1]} : vector<64x128xf32> to vector<64x2xf32>
    %383 = tpu.concatenate %381, %382 in 1 : vector<64x126xf32>, vector<64x2xf32> -> vector<64x128xf32>
    %384 = vector.broadcast %309 : vector<1x128xf32> to vector<64x128xf32>
    %385 = arith.mulf %383, %384 : vector<64x128xf32>
    %c8_100 = arith.constant 8 : index
    %c0_101 = arith.constant 0 : index
    %386 = vector.load %arg5[%c8_100, %c0_101] : memref<36x128xf32, #tpu.memory_space<vmem>>, vector<1x128xf32>
    %387 = vector.broadcast %386 : vector<1x128xf32> to vector<64x128xf32>
    %388 = arith.mulf %387, %385 : vector<64x128xf32>
    %389 = arith.addf %375, %388 : vector<64x128xf32>
    %390 = vector.extract_strided_slice %385 {offsets = [0, 32], sizes = [64, 96], strides = [1, 1]} : vector<64x128xf32> to vector<64x96xf32>
    %391 = vector.extract_strided_slice %385 {offsets = [0, 0], sizes = [64, 32], strides = [1, 1]} : vector<64x128xf32> to vector<64x32xf32>
    %392 = tpu.concatenate %390, %391 in 1 : vector<64x96xf32>, vector<64x32xf32> -> vector<64x128xf32>
    %c9 = arith.constant 9 : index
    %c0_102 = arith.constant 0 : index
    %393 = vector.load %arg5[%c9, %c0_102] : memref<36x128xf32, #tpu.memory_space<vmem>>, vector<1x128xf32>
    %394 = vector.broadcast %393 : vector<1x128xf32> to vector<64x128xf32>
    %395 = arith.mulf %394, %392 : vector<64x128xf32>
    %396 = arith.addf %389, %395 : vector<64x128xf32>
    %397 = vector.extract_strided_slice %385 {offsets = [0, 64], sizes = [64, 64], strides = [1, 1]} : vector<64x128xf32> to vector<64x64xf32>
    %398 = vector.extract_strided_slice %385 {offsets = [0, 0], sizes = [64, 64], strides = [1, 1]} : vector<64x128xf32> to vector<64x64xf32>
    %399 = tpu.concatenate %397, %398 in 1 : vector<64x64xf32>, vector<64x64xf32> -> vector<64x128xf32>
    %c10 = arith.constant 10 : index
    %c0_103 = arith.constant 0 : index
    %400 = vector.load %arg5[%c10, %c0_103] : memref<36x128xf32, #tpu.memory_space<vmem>>, vector<1x128xf32>
    %401 = vector.broadcast %400 : vector<1x128xf32> to vector<64x128xf32>
    %402 = arith.mulf %401, %399 : vector<64x128xf32>
    %403 = arith.addf %396, %402 : vector<64x128xf32>
    %404 = vector.extract_strided_slice %385 {offsets = [0, 96], sizes = [64, 32], strides = [1, 1]} : vector<64x128xf32> to vector<64x32xf32>
    %405 = vector.extract_strided_slice %385 {offsets = [0, 0], sizes = [64, 96], strides = [1, 1]} : vector<64x128xf32> to vector<64x96xf32>
    %406 = tpu.concatenate %404, %405 in 1 : vector<64x32xf32>, vector<64x96xf32> -> vector<64x128xf32>
    %c11 = arith.constant 11 : index
    %c0_104 = arith.constant 0 : index
    %407 = vector.load %arg5[%c11, %c0_104] : memref<36x128xf32, #tpu.memory_space<vmem>>, vector<1x128xf32>
    %408 = vector.broadcast %407 : vector<1x128xf32> to vector<64x128xf32>
    %409 = arith.mulf %408, %406 : vector<64x128xf32>
    %410 = arith.addf %403, %409 : vector<64x128xf32>
    %411 = vector.extract_strided_slice %299 {offsets = [0, 126], sizes = [64, 2], strides = [1, 1]} : vector<64x128xf32> to vector<64x2xf32>
    %412 = vector.extract_strided_slice %299 {offsets = [0, 0], sizes = [64, 126], strides = [1, 1]} : vector<64x128xf32> to vector<64x126xf32>
    %413 = tpu.concatenate %411, %412 in 1 : vector<64x2xf32>, vector<64x126xf32> -> vector<64x128xf32>
    %414 = vector.broadcast %43 : vector<1x128xf32> to vector<64x128xf32>
    %415 = arith.mulf %413, %414 : vector<64x128xf32>
    %c12 = arith.constant 12 : index
    %c0_105 = arith.constant 0 : index
    %416 = vector.load %arg5[%c12, %c0_105] : memref<36x128xf32, #tpu.memory_space<vmem>>, vector<1x128xf32>
    %417 = vector.broadcast %416 : vector<1x128xf32> to vector<64x128xf32>
    %418 = arith.mulf %417, %415 : vector<64x128xf32>
    %419 = arith.addf %410, %418 : vector<64x128xf32>
    %420 = vector.extract_strided_slice %415 {offsets = [0, 32], sizes = [64, 96], strides = [1, 1]} : vector<64x128xf32> to vector<64x96xf32>
    %421 = vector.extract_strided_slice %415 {offsets = [0, 0], sizes = [64, 32], strides = [1, 1]} : vector<64x128xf32> to vector<64x32xf32>
    %422 = tpu.concatenate %420, %421 in 1 : vector<64x96xf32>, vector<64x32xf32> -> vector<64x128xf32>
    %c13 = arith.constant 13 : index
    %c0_106 = arith.constant 0 : index
    %423 = vector.load %arg5[%c13, %c0_106] : memref<36x128xf32, #tpu.memory_space<vmem>>, vector<1x128xf32>
    %424 = vector.broadcast %423 : vector<1x128xf32> to vector<64x128xf32>
    %425 = arith.mulf %424, %422 : vector<64x128xf32>
    %426 = arith.addf %419, %425 : vector<64x128xf32>
    %427 = vector.extract_strided_slice %415 {offsets = [0, 64], sizes = [64, 64], strides = [1, 1]} : vector<64x128xf32> to vector<64x64xf32>
    %428 = vector.extract_strided_slice %415 {offsets = [0, 0], sizes = [64, 64], strides = [1, 1]} : vector<64x128xf32> to vector<64x64xf32>
    %429 = tpu.concatenate %427, %428 in 1 : vector<64x64xf32>, vector<64x64xf32> -> vector<64x128xf32>
    %c14 = arith.constant 14 : index
    %c0_107 = arith.constant 0 : index
    %430 = vector.load %arg5[%c14, %c0_107] : memref<36x128xf32, #tpu.memory_space<vmem>>, vector<1x128xf32>
    %431 = vector.broadcast %430 : vector<1x128xf32> to vector<64x128xf32>
    %432 = arith.mulf %431, %429 : vector<64x128xf32>
    %433 = arith.addf %426, %432 : vector<64x128xf32>
    %434 = vector.extract_strided_slice %415 {offsets = [0, 96], sizes = [64, 32], strides = [1, 1]} : vector<64x128xf32> to vector<64x32xf32>
    %435 = vector.extract_strided_slice %415 {offsets = [0, 0], sizes = [64, 96], strides = [1, 1]} : vector<64x128xf32> to vector<64x96xf32>
    %436 = tpu.concatenate %434, %435 in 1 : vector<64x32xf32>, vector<64x96xf32> -> vector<64x128xf32>
    %c15 = arith.constant 15 : index
    %c0_108 = arith.constant 0 : index
    %437 = vector.load %arg5[%c15, %c0_108] : memref<36x128xf32, #tpu.memory_space<vmem>>, vector<1x128xf32>
    %438 = vector.broadcast %437 : vector<1x128xf32> to vector<64x128xf32>
    %439 = arith.mulf %438, %436 : vector<64x128xf32>
    %440 = arith.addf %433, %439 : vector<64x128xf32>
    %c16 = arith.constant 16 : index
    %c0_109 = arith.constant 0 : index
    %441 = vector.load %arg5[%c16, %c0_109] : memref<36x128xf32, #tpu.memory_space<vmem>>, vector<1x128xf32>
    %442 = vector.broadcast %441 : vector<1x128xf32> to vector<64x128xf32>
    %443 = arith.mulf %442, %299 : vector<64x128xf32>
    %444 = arith.addf %440, %443 : vector<64x128xf32>
    %445 = vector.extract_strided_slice %299 {offsets = [0, 32], sizes = [64, 96], strides = [1, 1]} : vector<64x128xf32> to vector<64x96xf32>
    %446 = vector.extract_strided_slice %299 {offsets = [0, 0], sizes = [64, 32], strides = [1, 1]} : vector<64x128xf32> to vector<64x32xf32>
    %447 = tpu.concatenate %445, %446 in 1 : vector<64x96xf32>, vector<64x32xf32> -> vector<64x128xf32>
    %c17 = arith.constant 17 : index
    %c0_110 = arith.constant 0 : index
    %448 = vector.load %arg5[%c17, %c0_110] : memref<36x128xf32, #tpu.memory_space<vmem>>, vector<1x128xf32>
    %449 = vector.broadcast %448 : vector<1x128xf32> to vector<64x128xf32>
    %450 = arith.mulf %449, %447 : vector<64x128xf32>
    %451 = arith.addf %444, %450 : vector<64x128xf32>
    %452 = vector.extract_strided_slice %299 {offsets = [0, 64], sizes = [64, 64], strides = [1, 1]} : vector<64x128xf32> to vector<64x64xf32>
    %453 = vector.extract_strided_slice %299 {offsets = [0, 0], sizes = [64, 64], strides = [1, 1]} : vector<64x128xf32> to vector<64x64xf32>
    %454 = tpu.concatenate %452, %453 in 1 : vector<64x64xf32>, vector<64x64xf32> -> vector<64x128xf32>
    %c18 = arith.constant 18 : index
    %c0_111 = arith.constant 0 : index
    %455 = vector.load %arg5[%c18, %c0_111] : memref<36x128xf32, #tpu.memory_space<vmem>>, vector<1x128xf32>
    %456 = vector.broadcast %455 : vector<1x128xf32> to vector<64x128xf32>
    %457 = arith.mulf %456, %454 : vector<64x128xf32>
    %458 = arith.addf %451, %457 : vector<64x128xf32>
    %459 = vector.extract_strided_slice %299 {offsets = [0, 96], sizes = [64, 32], strides = [1, 1]} : vector<64x128xf32> to vector<64x32xf32>
    %460 = vector.extract_strided_slice %299 {offsets = [0, 0], sizes = [64, 96], strides = [1, 1]} : vector<64x128xf32> to vector<64x96xf32>
    %461 = tpu.concatenate %459, %460 in 1 : vector<64x32xf32>, vector<64x96xf32> -> vector<64x128xf32>
    %c19 = arith.constant 19 : index
    %c0_112 = arith.constant 0 : index
    %462 = vector.load %arg5[%c19, %c0_112] : memref<36x128xf32, #tpu.memory_space<vmem>>, vector<1x128xf32>
    %463 = vector.broadcast %462 : vector<1x128xf32> to vector<64x128xf32>
    %464 = arith.mulf %463, %461 : vector<64x128xf32>
    %465 = arith.addf %458, %464 : vector<64x128xf32>
    %466 = vector.extract_strided_slice %299 {offsets = [0, 2], sizes = [64, 126], strides = [1, 1]} : vector<64x128xf32> to vector<64x126xf32>
    %467 = vector.extract_strided_slice %299 {offsets = [0, 0], sizes = [64, 2], strides = [1, 1]} : vector<64x128xf32> to vector<64x2xf32>
    %468 = tpu.concatenate %466, %467 in 1 : vector<64x126xf32>, vector<64x2xf32> -> vector<64x128xf32>
    %469 = vector.broadcast %309 : vector<1x128xf32> to vector<64x128xf32>
    %470 = arith.mulf %468, %469 : vector<64x128xf32>
    %c20 = arith.constant 20 : index
    %c0_113 = arith.constant 0 : index
    %471 = vector.load %arg5[%c20, %c0_113] : memref<36x128xf32, #tpu.memory_space<vmem>>, vector<1x128xf32>
    %472 = vector.broadcast %471 : vector<1x128xf32> to vector<64x128xf32>
    %473 = arith.mulf %472, %470 : vector<64x128xf32>
    %474 = arith.addf %465, %473 : vector<64x128xf32>
    %475 = vector.extract_strided_slice %470 {offsets = [0, 32], sizes = [64, 96], strides = [1, 1]} : vector<64x128xf32> to vector<64x96xf32>
    %476 = vector.extract_strided_slice %470 {offsets = [0, 0], sizes = [64, 32], strides = [1, 1]} : vector<64x128xf32> to vector<64x32xf32>
    %477 = tpu.concatenate %475, %476 in 1 : vector<64x96xf32>, vector<64x32xf32> -> vector<64x128xf32>
    %c21 = arith.constant 21 : index
    %c0_114 = arith.constant 0 : index
    %478 = vector.load %arg5[%c21, %c0_114] : memref<36x128xf32, #tpu.memory_space<vmem>>, vector<1x128xf32>
    %479 = vector.broadcast %478 : vector<1x128xf32> to vector<64x128xf32>
    %480 = arith.mulf %479, %477 : vector<64x128xf32>
    %481 = arith.addf %474, %480 : vector<64x128xf32>
    %482 = vector.extract_strided_slice %470 {offsets = [0, 64], sizes = [64, 64], strides = [1, 1]} : vector<64x128xf32> to vector<64x64xf32>
    %483 = vector.extract_strided_slice %470 {offsets = [0, 0], sizes = [64, 64], strides = [1, 1]} : vector<64x128xf32> to vector<64x64xf32>
    %484 = tpu.concatenate %482, %483 in 1 : vector<64x64xf32>, vector<64x64xf32> -> vector<64x128xf32>
    %c22 = arith.constant 22 : index
    %c0_115 = arith.constant 0 : index
    %485 = vector.load %arg5[%c22, %c0_115] : memref<36x128xf32, #tpu.memory_space<vmem>>, vector<1x128xf32>
    %486 = vector.broadcast %485 : vector<1x128xf32> to vector<64x128xf32>
    %487 = arith.mulf %486, %484 : vector<64x128xf32>
    %488 = arith.addf %481, %487 : vector<64x128xf32>
    %489 = vector.extract_strided_slice %470 {offsets = [0, 96], sizes = [64, 32], strides = [1, 1]} : vector<64x128xf32> to vector<64x32xf32>
    %490 = vector.extract_strided_slice %470 {offsets = [0, 0], sizes = [64, 96], strides = [1, 1]} : vector<64x128xf32> to vector<64x96xf32>
    %491 = tpu.concatenate %489, %490 in 1 : vector<64x32xf32>, vector<64x96xf32> -> vector<64x128xf32>
    %c23 = arith.constant 23 : index
    %c0_116 = arith.constant 0 : index
    %492 = vector.load %arg5[%c23, %c0_116] : memref<36x128xf32, #tpu.memory_space<vmem>>, vector<1x128xf32>
    %493 = vector.broadcast %492 : vector<1x128xf32> to vector<64x128xf32>
    %494 = arith.mulf %493, %491 : vector<64x128xf32>
    %495 = arith.addf %488, %494 : vector<64x128xf32>
    %496 = vector.extract_strided_slice %299 {offsets = [2, 0], sizes = [62, 128], strides = [1, 1]} : vector<64x128xf32> to vector<62x128xf32>
    %497 = vector.extract_strided_slice %299 {offsets = [0, 0], sizes = [2, 128], strides = [1, 1]} : vector<64x128xf32> to vector<2x128xf32>
    %498 = tpu.concatenate %496, %497 in 0 : vector<62x128xf32>, vector<2x128xf32> -> vector<64x128xf32>
    %499 = vector.broadcast %304 : vector<64x1xf32> to vector<64x128xf32>
    %500 = arith.mulf %498, %499 : vector<64x128xf32>
    %501 = vector.extract_strided_slice %500 {offsets = [0, 126], sizes = [64, 2], strides = [1, 1]} : vector<64x128xf32> to vector<64x2xf32>
    %502 = vector.extract_strided_slice %500 {offsets = [0, 0], sizes = [64, 126], strides = [1, 1]} : vector<64x128xf32> to vector<64x126xf32>
    %503 = tpu.concatenate %501, %502 in 1 : vector<64x2xf32>, vector<64x126xf32> -> vector<64x128xf32>
    %504 = vector.broadcast %43 : vector<1x128xf32> to vector<64x128xf32>
    %505 = arith.mulf %503, %504 : vector<64x128xf32>
    %c24 = arith.constant 24 : index
    %c0_117 = arith.constant 0 : index
    %506 = vector.load %arg5[%c24, %c0_117] : memref<36x128xf32, #tpu.memory_space<vmem>>, vector<1x128xf32>
    %507 = vector.broadcast %506 : vector<1x128xf32> to vector<64x128xf32>
    %508 = arith.mulf %507, %505 : vector<64x128xf32>
    %509 = arith.addf %495, %508 : vector<64x128xf32>
    %510 = vector.extract_strided_slice %505 {offsets = [0, 32], sizes = [64, 96], strides = [1, 1]} : vector<64x128xf32> to vector<64x96xf32>
    %511 = vector.extract_strided_slice %505 {offsets = [0, 0], sizes = [64, 32], strides = [1, 1]} : vector<64x128xf32> to vector<64x32xf32>
    %512 = tpu.concatenate %510, %511 in 1 : vector<64x96xf32>, vector<64x32xf32> -> vector<64x128xf32>
    %c25 = arith.constant 25 : index
    %c0_118 = arith.constant 0 : index
    %513 = vector.load %arg5[%c25, %c0_118] : memref<36x128xf32, #tpu.memory_space<vmem>>, vector<1x128xf32>
    %514 = vector.broadcast %513 : vector<1x128xf32> to vector<64x128xf32>
    %515 = arith.mulf %514, %512 : vector<64x128xf32>
    %516 = arith.addf %509, %515 : vector<64x128xf32>
    %517 = vector.extract_strided_slice %505 {offsets = [0, 64], sizes = [64, 64], strides = [1, 1]} : vector<64x128xf32> to vector<64x64xf32>
    %518 = vector.extract_strided_slice %505 {offsets = [0, 0], sizes = [64, 64], strides = [1, 1]} : vector<64x128xf32> to vector<64x64xf32>
    %519 = tpu.concatenate %517, %518 in 1 : vector<64x64xf32>, vector<64x64xf32> -> vector<64x128xf32>
    %c26 = arith.constant 26 : index
    %c0_119 = arith.constant 0 : index
    %520 = vector.load %arg5[%c26, %c0_119] : memref<36x128xf32, #tpu.memory_space<vmem>>, vector<1x128xf32>
    %521 = vector.broadcast %520 : vector<1x128xf32> to vector<64x128xf32>
    %522 = arith.mulf %521, %519 : vector<64x128xf32>
    %523 = arith.addf %516, %522 : vector<64x128xf32>
    %524 = vector.extract_strided_slice %505 {offsets = [0, 96], sizes = [64, 32], strides = [1, 1]} : vector<64x128xf32> to vector<64x32xf32>
    %525 = vector.extract_strided_slice %505 {offsets = [0, 0], sizes = [64, 96], strides = [1, 1]} : vector<64x128xf32> to vector<64x96xf32>
    %526 = tpu.concatenate %524, %525 in 1 : vector<64x32xf32>, vector<64x96xf32> -> vector<64x128xf32>
    %c27 = arith.constant 27 : index
    %c0_120 = arith.constant 0 : index
    %527 = vector.load %arg5[%c27, %c0_120] : memref<36x128xf32, #tpu.memory_space<vmem>>, vector<1x128xf32>
    %528 = vector.broadcast %527 : vector<1x128xf32> to vector<64x128xf32>
    %529 = arith.mulf %528, %526 : vector<64x128xf32>
    %530 = arith.addf %523, %529 : vector<64x128xf32>
    %531 = vector.extract_strided_slice %299 {offsets = [2, 0], sizes = [62, 128], strides = [1, 1]} : vector<64x128xf32> to vector<62x128xf32>
    %532 = vector.extract_strided_slice %299 {offsets = [0, 0], sizes = [2, 128], strides = [1, 1]} : vector<64x128xf32> to vector<2x128xf32>
    %533 = tpu.concatenate %531, %532 in 0 : vector<62x128xf32>, vector<2x128xf32> -> vector<64x128xf32>
    %534 = vector.broadcast %304 : vector<64x1xf32> to vector<64x128xf32>
    %535 = arith.mulf %533, %534 : vector<64x128xf32>
    %c28 = arith.constant 28 : index
    %c0_121 = arith.constant 0 : index
    %536 = vector.load %arg5[%c28, %c0_121] : memref<36x128xf32, #tpu.memory_space<vmem>>, vector<1x128xf32>
    %537 = vector.broadcast %536 : vector<1x128xf32> to vector<64x128xf32>
    %538 = arith.mulf %537, %535 : vector<64x128xf32>
    %539 = arith.addf %530, %538 : vector<64x128xf32>
    %540 = vector.extract_strided_slice %535 {offsets = [0, 32], sizes = [64, 96], strides = [1, 1]} : vector<64x128xf32> to vector<64x96xf32>
    %541 = vector.extract_strided_slice %535 {offsets = [0, 0], sizes = [64, 32], strides = [1, 1]} : vector<64x128xf32> to vector<64x32xf32>
    %542 = tpu.concatenate %540, %541 in 1 : vector<64x96xf32>, vector<64x32xf32> -> vector<64x128xf32>
    %c29 = arith.constant 29 : index
    %c0_122 = arith.constant 0 : index
    %543 = vector.load %arg5[%c29, %c0_122] : memref<36x128xf32, #tpu.memory_space<vmem>>, vector<1x128xf32>
    %544 = vector.broadcast %543 : vector<1x128xf32> to vector<64x128xf32>
    %545 = arith.mulf %544, %542 : vector<64x128xf32>
    %546 = arith.addf %539, %545 : vector<64x128xf32>
    %547 = vector.extract_strided_slice %535 {offsets = [0, 64], sizes = [64, 64], strides = [1, 1]} : vector<64x128xf32> to vector<64x64xf32>
    %548 = vector.extract_strided_slice %535 {offsets = [0, 0], sizes = [64, 64], strides = [1, 1]} : vector<64x128xf32> to vector<64x64xf32>
    %549 = tpu.concatenate %547, %548 in 1 : vector<64x64xf32>, vector<64x64xf32> -> vector<64x128xf32>
    %c30 = arith.constant 30 : index
    %c0_123 = arith.constant 0 : index
    %550 = vector.load %arg5[%c30, %c0_123] : memref<36x128xf32, #tpu.memory_space<vmem>>, vector<1x128xf32>
    %551 = vector.broadcast %550 : vector<1x128xf32> to vector<64x128xf32>
    %552 = arith.mulf %551, %549 : vector<64x128xf32>
    %553 = arith.addf %546, %552 : vector<64x128xf32>
    %554 = vector.extract_strided_slice %535 {offsets = [0, 96], sizes = [64, 32], strides = [1, 1]} : vector<64x128xf32> to vector<64x32xf32>
    %555 = vector.extract_strided_slice %535 {offsets = [0, 0], sizes = [64, 96], strides = [1, 1]} : vector<64x128xf32> to vector<64x96xf32>
    %556 = tpu.concatenate %554, %555 in 1 : vector<64x32xf32>, vector<64x96xf32> -> vector<64x128xf32>
    %c31 = arith.constant 31 : index
    %c0_124 = arith.constant 0 : index
    %557 = vector.load %arg5[%c31, %c0_124] : memref<36x128xf32, #tpu.memory_space<vmem>>, vector<1x128xf32>
    %558 = vector.broadcast %557 : vector<1x128xf32> to vector<64x128xf32>
    %559 = arith.mulf %558, %556 : vector<64x128xf32>
    %560 = arith.addf %553, %559 : vector<64x128xf32>
    %561 = vector.extract_strided_slice %299 {offsets = [2, 0], sizes = [62, 128], strides = [1, 1]} : vector<64x128xf32> to vector<62x128xf32>
    %562 = vector.extract_strided_slice %299 {offsets = [0, 0], sizes = [2, 128], strides = [1, 1]} : vector<64x128xf32> to vector<2x128xf32>
    %563 = tpu.concatenate %561, %562 in 0 : vector<62x128xf32>, vector<2x128xf32> -> vector<64x128xf32>
    %564 = vector.broadcast %304 : vector<64x1xf32> to vector<64x128xf32>
    %565 = arith.mulf %563, %564 : vector<64x128xf32>
    %566 = vector.extract_strided_slice %565 {offsets = [0, 2], sizes = [64, 126], strides = [1, 1]} : vector<64x128xf32> to vector<64x126xf32>
    %567 = vector.extract_strided_slice %565 {offsets = [0, 0], sizes = [64, 2], strides = [1, 1]} : vector<64x128xf32> to vector<64x2xf32>
    %568 = tpu.concatenate %566, %567 in 1 : vector<64x126xf32>, vector<64x2xf32> -> vector<64x128xf32>
    %569 = vector.broadcast %309 : vector<1x128xf32> to vector<64x128xf32>
    %570 = arith.mulf %568, %569 : vector<64x128xf32>
    %c32 = arith.constant 32 : index
    %c0_125 = arith.constant 0 : index
    %571 = vector.load %arg5[%c32, %c0_125] : memref<36x128xf32, #tpu.memory_space<vmem>>, vector<1x128xf32>
    %572 = vector.broadcast %571 : vector<1x128xf32> to vector<64x128xf32>
    %573 = arith.mulf %572, %570 : vector<64x128xf32>
    %574 = arith.addf %560, %573 : vector<64x128xf32>
    %575 = vector.extract_strided_slice %570 {offsets = [0, 32], sizes = [64, 96], strides = [1, 1]} : vector<64x128xf32> to vector<64x96xf32>
    %576 = vector.extract_strided_slice %570 {offsets = [0, 0], sizes = [64, 32], strides = [1, 1]} : vector<64x128xf32> to vector<64x32xf32>
    %577 = tpu.concatenate %575, %576 in 1 : vector<64x96xf32>, vector<64x32xf32> -> vector<64x128xf32>
    %c33 = arith.constant 33 : index
    %c0_126 = arith.constant 0 : index
    %578 = vector.load %arg5[%c33, %c0_126] : memref<36x128xf32, #tpu.memory_space<vmem>>, vector<1x128xf32>
    %579 = vector.broadcast %578 : vector<1x128xf32> to vector<64x128xf32>
    %580 = arith.mulf %579, %577 : vector<64x128xf32>
    %581 = arith.addf %574, %580 : vector<64x128xf32>
    %582 = vector.extract_strided_slice %570 {offsets = [0, 64], sizes = [64, 64], strides = [1, 1]} : vector<64x128xf32> to vector<64x64xf32>
    %583 = vector.extract_strided_slice %570 {offsets = [0, 0], sizes = [64, 64], strides = [1, 1]} : vector<64x128xf32> to vector<64x64xf32>
    %584 = tpu.concatenate %582, %583 in 1 : vector<64x64xf32>, vector<64x64xf32> -> vector<64x128xf32>
    %c34 = arith.constant 34 : index
    %c0_127 = arith.constant 0 : index
    %585 = vector.load %arg5[%c34, %c0_127] : memref<36x128xf32, #tpu.memory_space<vmem>>, vector<1x128xf32>
    %586 = vector.broadcast %585 : vector<1x128xf32> to vector<64x128xf32>
    %587 = arith.mulf %586, %584 : vector<64x128xf32>
    %588 = arith.addf %581, %587 : vector<64x128xf32>
    %589 = vector.extract_strided_slice %570 {offsets = [0, 96], sizes = [64, 32], strides = [1, 1]} : vector<64x128xf32> to vector<64x32xf32>
    %590 = vector.extract_strided_slice %570 {offsets = [0, 0], sizes = [64, 96], strides = [1, 1]} : vector<64x128xf32> to vector<64x96xf32>
    %591 = tpu.concatenate %589, %590 in 1 : vector<64x32xf32>, vector<64x96xf32> -> vector<64x128xf32>
    %c35 = arith.constant 35 : index
    %c0_128 = arith.constant 0 : index
    %592 = vector.load %arg5[%c35, %c0_128] : memref<36x128xf32, #tpu.memory_space<vmem>>, vector<1x128xf32>
    %593 = vector.broadcast %592 : vector<1x128xf32> to vector<64x128xf32>
    %594 = arith.mulf %593, %591 : vector<64x128xf32>
    %595 = arith.addf %588, %594 : vector<64x128xf32>
    %c0_129 = arith.constant 0 : index
    %c0_130 = arith.constant 0 : index
    %596 = vector.load %arg6[%c0_129, %c0_130] : memref<1x128xf32, #tpu.memory_space<vmem>>, vector<1x128xf32>
    %597 = vector.broadcast %596 : vector<1x128xf32> to vector<64x128xf32>
    %598 = arith.addf %595, %597 : vector<64x128xf32>
    %c2_i32 = arith.constant 2 : i32
    %c0_i32_131 = arith.constant 0 : i32
    %599 = arith.cmpi eq, %c2_i32, %c0_i32_131 : i32
    %c1_i32_132 = arith.constant 1 : i32
    %600 = arith.select %599, %c1_i32_132, %c2_i32 : i32
    %601 = vector.broadcast %600 : i32 to vector<64x1xi32>
    %602 = arith.remsi %17, %601 : vector<64x1xi32>
    %c0_i32_133 = arith.constant 0 : i32
    %603 = vector.broadcast %c0_i32_133 : i32 to vector<64x1xi32>
    %604 = arith.cmpi ne, %602, %603 : vector<64x1xi32>
    %c0_i32_134 = arith.constant 0 : i32
    %605 = vector.broadcast %c0_i32_134 : i32 to vector<64x1xi32>
    %606 = arith.cmpi slt, %602, %605 : vector<64x1xi32>
    %c0_i32_135 = arith.constant 0 : i32
    %607 = arith.cmpi slt, %600, %c0_i32_135 : i32
    %608 = vector.broadcast %607 : i1 to vector<64x1xi1>
    %609 = vector.broadcast %608 : vector<64x1xi1> to vector<64x1xi1>
    %610 = arith.xori %606, %609 : vector<64x1xi1>
    %611 = arith.andi %610, %604 : vector<64x1xi1>
    %612 = vector.broadcast %600 : i32 to vector<64x1xi32>
    %613 = arith.addi %602, %612 : vector<64x1xi32>
    %614 = arith.select %611, %613, %602 : vector<64x1xi1>, vector<64x1xi32>
    %c0_i32_136 = arith.constant 0 : i32
    %615 = vector.broadcast %c0_i32_136 : i32 to vector<64x1xi32>
    %616 = arith.cmpi eq, %614, %615 : vector<64x1xi32>
    %cst_137 = arith.constant 1.000000e+00 : f32
    %cst_138 = arith.constant 0.000000e+00 : f32
    %617 = vector.broadcast %cst_137 : f32 to vector<64x1xf32>
    %618 = vector.broadcast %cst_138 : f32 to vector<64x1xf32>
    %619 = arith.select %616, %617, %618 : vector<64x1xi1>, vector<64x1xf32>
    %c2_i32_139 = arith.constant 2 : i32
    %c0_i32_140 = arith.constant 0 : i32
    %620 = arith.cmpi eq, %c2_i32_139, %c0_i32_140 : i32
    %c1_i32_141 = arith.constant 1 : i32
    %621 = arith.select %620, %c1_i32_141, %c2_i32_139 : i32
    %622 = vector.broadcast %621 : i32 to vector<1x128xi32>
    %623 = arith.remsi %33, %622 : vector<1x128xi32>
    %c0_i32_142 = arith.constant 0 : i32
    %624 = vector.broadcast %c0_i32_142 : i32 to vector<1x128xi32>
    %625 = arith.cmpi ne, %623, %624 : vector<1x128xi32>
    %c0_i32_143 = arith.constant 0 : i32
    %626 = vector.broadcast %c0_i32_143 : i32 to vector<1x128xi32>
    %627 = arith.cmpi slt, %623, %626 : vector<1x128xi32>
    %c0_i32_144 = arith.constant 0 : i32
    %628 = arith.cmpi slt, %621, %c0_i32_144 : i32
    %629 = vector.broadcast %628 : i1 to vector<1x128xi1>
    %630 = vector.broadcast %629 : vector<1x128xi1> to vector<1x128xi1>
    %631 = arith.xori %627, %630 : vector<1x128xi1>
    %632 = arith.andi %631, %625 : vector<1x128xi1>
    %633 = vector.broadcast %621 : i32 to vector<1x128xi32>
    %634 = arith.addi %623, %633 : vector<1x128xi32>
    %635 = arith.select %632, %634, %623 : vector<1x128xi1>, vector<1x128xi32>
    %c0_i32_145 = arith.constant 0 : i32
    %636 = vector.broadcast %c0_i32_145 : i32 to vector<1x128xi32>
    %637 = arith.cmpi eq, %635, %636 : vector<1x128xi32>
    %cst_146 = arith.constant 1.000000e+00 : f32
    %cst_147 = arith.constant 0.000000e+00 : f32
    %638 = vector.broadcast %cst_146 : f32 to vector<1x128xf32>
    %639 = vector.broadcast %cst_147 : f32 to vector<1x128xf32>
    %640 = arith.select %637, %638, %639 : vector<1x128xi1>, vector<1x128xf32>
    %641 = vector.broadcast %619 : vector<64x1xf32> to vector<64x128xf32>
    %642 = arith.mulf %598, %641 : vector<64x128xf32>
    %643 = vector.broadcast %640 : vector<1x128xf32> to vector<64x128xf32>
    %644 = arith.mulf %642, %643 : vector<64x128xf32>
    %cst_148 = arith.constant dense<0.000000e+00> : vector<128xf32>
    %645 = vector.multi_reduction <add>, %644, %cst_148 [0] : vector<64x128xf32> to vector<128xf32>
    %646 = vector.shape_cast %645 : vector<128xf32> to vector<1x128xf32>
    %647 = arith.mulf %644, %644 : vector<64x128xf32>
    %cst_149 = arith.constant dense<0.000000e+00> : vector<128xf32>
    %648 = vector.multi_reduction <add>, %647, %cst_149 [0] : vector<64x128xf32> to vector<128xf32>
    %649 = vector.shape_cast %648 : vector<128xf32> to vector<1x128xf32>
    %cst_150 = arith.constant 0.000000e+00 : f32
    %650 = vector.broadcast %cst_150 : f32 to vector<1x128xf32>
    %cst_151 = arith.constant 0.000000e+00 : f32
    %651 = vector.broadcast %cst_151 : f32 to vector<1x128xf32>
    %652 = vector.extract_strided_slice %646 {offsets = [0, 0], sizes = [1, 32], strides = [1, 1]} : vector<1x128xf32> to vector<1x32xf32>
    %cst_152 = arith.constant dense<0.000000e+00> : vector<1xf32>
    %653 = vector.multi_reduction <add>, %652, %cst_152 [1] : vector<1x32xf32> to vector<1xf32>
    %654 = vector.shape_cast %653 : vector<1xf32> to vector<1x1xf32>
    %cst_153 = arith.constant 0.001953125 : f32
    %655 = vector.broadcast %cst_153 : f32 to vector<1x1xf32>
    %656 = arith.mulf %654, %655 : vector<1x1xf32>
    %657 = vector.extract_strided_slice %649 {offsets = [0, 0], sizes = [1, 32], strides = [1, 1]} : vector<1x128xf32> to vector<1x32xf32>
    %cst_154 = arith.constant dense<0.000000e+00> : vector<1xf32>
    %658 = vector.multi_reduction <add>, %657, %cst_154 [1] : vector<1x32xf32> to vector<1xf32>
    %659 = vector.shape_cast %658 : vector<1xf32> to vector<1x1xf32>
    %cst_155 = arith.constant 0.001953125 : f32
    %660 = vector.broadcast %cst_155 : f32 to vector<1x1xf32>
    %661 = arith.mulf %659, %660 : vector<1x1xf32>
    %662 = arith.mulf %656, %656 : vector<1x1xf32>
    %663 = arith.subf %661, %662 : vector<1x1xf32>
    %cst_156 = arith.constant 0.000000e+00 : f32
    %664 = vector.broadcast %cst_156 : f32 to vector<1x1xf32>
    %665 = arith.maximumf %663, %664 : vector<1x1xf32>
    %c0_157 = arith.constant 0 : index
    %666 = memref.load %arg7[%c0_157] : memref<4xf32, #tpu.memory_space<smem>>
    %cst_158 = arith.constant 9.99999974E-6 : f32
    %667 = vector.broadcast %cst_158 : f32 to vector<1x1xf32>
    %668 = arith.addf %665, %667 : vector<1x1xf32>
    %669 = math.rsqrt %668 : vector<1x1xf32>
    %670 = vector.broadcast %666 : f32 to vector<1x1xf32>
    %671 = arith.mulf %670, %669 : vector<1x1xf32>
    %c0_159 = arith.constant 0 : index
    %672 = memref.load %arg8[%c0_159] : memref<4xf32, #tpu.memory_space<smem>>
    %673 = arith.mulf %656, %671 : vector<1x1xf32>
    %674 = vector.broadcast %672 : f32 to vector<1x1xf32>
    %675 = arith.subf %674, %673 : vector<1x1xf32>
    %c0_160 = arith.constant 0 : index
    %c0_161 = arith.constant 0 : index
    %676 = vector.load %arg9[%c0_160, %c0_161] : memref<4x128xf32, #tpu.memory_space<vmem>>, vector<1x128xf32>
    %677 = vector.broadcast %671 : vector<1x1xf32> to vector<1x128xf32>
    %678 = arith.mulf %677, %676 : vector<1x128xf32>
    %679 = arith.addf %650, %678 : vector<1x128xf32>
    %680 = vector.broadcast %675 : vector<1x1xf32> to vector<1x128xf32>
    %681 = arith.mulf %680, %676 : vector<1x128xf32>
    %682 = arith.addf %651, %681 : vector<1x128xf32>
    %683 = vector.extract_strided_slice %646 {offsets = [0, 32], sizes = [1, 32], strides = [1, 1]} : vector<1x128xf32> to vector<1x32xf32>
    %cst_162 = arith.constant dense<0.000000e+00> : vector<1xf32>
    %684 = vector.multi_reduction <add>, %683, %cst_162 [1] : vector<1x32xf32> to vector<1xf32>
    %685 = vector.shape_cast %684 : vector<1xf32> to vector<1x1xf32>
    %cst_163 = arith.constant 0.001953125 : f32
    %686 = vector.broadcast %cst_163 : f32 to vector<1x1xf32>
    %687 = arith.mulf %685, %686 : vector<1x1xf32>
    %688 = vector.extract_strided_slice %649 {offsets = [0, 32], sizes = [1, 32], strides = [1, 1]} : vector<1x128xf32> to vector<1x32xf32>
    %cst_164 = arith.constant dense<0.000000e+00> : vector<1xf32>
    %689 = vector.multi_reduction <add>, %688, %cst_164 [1] : vector<1x32xf32> to vector<1xf32>
    %690 = vector.shape_cast %689 : vector<1xf32> to vector<1x1xf32>
    %cst_165 = arith.constant 0.001953125 : f32
    %691 = vector.broadcast %cst_165 : f32 to vector<1x1xf32>
    %692 = arith.mulf %690, %691 : vector<1x1xf32>
    %693 = arith.mulf %687, %687 : vector<1x1xf32>
    %694 = arith.subf %692, %693 : vector<1x1xf32>
    %cst_166 = arith.constant 0.000000e+00 : f32
    %695 = vector.broadcast %cst_166 : f32 to vector<1x1xf32>
    %696 = arith.maximumf %694, %695 : vector<1x1xf32>
    %c1_167 = arith.constant 1 : index
    %697 = memref.load %arg7[%c1_167] : memref<4xf32, #tpu.memory_space<smem>>
    %cst_168 = arith.constant 9.99999974E-6 : f32
    %698 = vector.broadcast %cst_168 : f32 to vector<1x1xf32>
    %699 = arith.addf %696, %698 : vector<1x1xf32>
    %700 = math.rsqrt %699 : vector<1x1xf32>
    %701 = vector.broadcast %697 : f32 to vector<1x1xf32>
    %702 = arith.mulf %701, %700 : vector<1x1xf32>
    %c1_169 = arith.constant 1 : index
    %703 = memref.load %arg8[%c1_169] : memref<4xf32, #tpu.memory_space<smem>>
    %704 = arith.mulf %687, %702 : vector<1x1xf32>
    %705 = vector.broadcast %703 : f32 to vector<1x1xf32>
    %706 = arith.subf %705, %704 : vector<1x1xf32>
    %c1_170 = arith.constant 1 : index
    %c0_171 = arith.constant 0 : index
    %707 = vector.load %arg9[%c1_170, %c0_171] : memref<4x128xf32, #tpu.memory_space<vmem>>, vector<1x128xf32>
    %708 = vector.broadcast %702 : vector<1x1xf32> to vector<1x128xf32>
    %709 = arith.mulf %708, %707 : vector<1x128xf32>
    %710 = arith.addf %679, %709 : vector<1x128xf32>
    %711 = vector.broadcast %706 : vector<1x1xf32> to vector<1x128xf32>
    %712 = arith.mulf %711, %707 : vector<1x128xf32>
    %713 = arith.addf %682, %712 : vector<1x128xf32>
    %714 = vector.extract_strided_slice %646 {offsets = [0, 64], sizes = [1, 32], strides = [1, 1]} : vector<1x128xf32> to vector<1x32xf32>
    %cst_172 = arith.constant dense<0.000000e+00> : vector<1xf32>
    %715 = vector.multi_reduction <add>, %714, %cst_172 [1] : vector<1x32xf32> to vector<1xf32>
    %716 = vector.shape_cast %715 : vector<1xf32> to vector<1x1xf32>
    %cst_173 = arith.constant 0.001953125 : f32
    %717 = vector.broadcast %cst_173 : f32 to vector<1x1xf32>
    %718 = arith.mulf %716, %717 : vector<1x1xf32>
    %719 = vector.extract_strided_slice %649 {offsets = [0, 64], sizes = [1, 32], strides = [1, 1]} : vector<1x128xf32> to vector<1x32xf32>
    %cst_174 = arith.constant dense<0.000000e+00> : vector<1xf32>
    %720 = vector.multi_reduction <add>, %719, %cst_174 [1] : vector<1x32xf32> to vector<1xf32>
    %721 = vector.shape_cast %720 : vector<1xf32> to vector<1x1xf32>
    %cst_175 = arith.constant 0.001953125 : f32
    %722 = vector.broadcast %cst_175 : f32 to vector<1x1xf32>
    %723 = arith.mulf %721, %722 : vector<1x1xf32>
    %724 = arith.mulf %718, %718 : vector<1x1xf32>
    %725 = arith.subf %723, %724 : vector<1x1xf32>
    %cst_176 = arith.constant 0.000000e+00 : f32
    %726 = vector.broadcast %cst_176 : f32 to vector<1x1xf32>
    %727 = arith.maximumf %725, %726 : vector<1x1xf32>
    %c2_177 = arith.constant 2 : index
    %728 = memref.load %arg7[%c2_177] : memref<4xf32, #tpu.memory_space<smem>>
    %cst_178 = arith.constant 9.99999974E-6 : f32
    %729 = vector.broadcast %cst_178 : f32 to vector<1x1xf32>
    %730 = arith.addf %727, %729 : vector<1x1xf32>
    %731 = math.rsqrt %730 : vector<1x1xf32>
    %732 = vector.broadcast %728 : f32 to vector<1x1xf32>
    %733 = arith.mulf %732, %731 : vector<1x1xf32>
    %c2_179 = arith.constant 2 : index
    %734 = memref.load %arg8[%c2_179] : memref<4xf32, #tpu.memory_space<smem>>
    %735 = arith.mulf %718, %733 : vector<1x1xf32>
    %736 = vector.broadcast %734 : f32 to vector<1x1xf32>
    %737 = arith.subf %736, %735 : vector<1x1xf32>
    %c2_180 = arith.constant 2 : index
    %c0_181 = arith.constant 0 : index
    %738 = vector.load %arg9[%c2_180, %c0_181] : memref<4x128xf32, #tpu.memory_space<vmem>>, vector<1x128xf32>
    %739 = vector.broadcast %733 : vector<1x1xf32> to vector<1x128xf32>
    %740 = arith.mulf %739, %738 : vector<1x128xf32>
    %741 = arith.addf %710, %740 : vector<1x128xf32>
    %742 = vector.broadcast %737 : vector<1x1xf32> to vector<1x128xf32>
    %743 = arith.mulf %742, %738 : vector<1x128xf32>
    %744 = arith.addf %713, %743 : vector<1x128xf32>
    %745 = vector.extract_strided_slice %646 {offsets = [0, 96], sizes = [1, 32], strides = [1, 1]} : vector<1x128xf32> to vector<1x32xf32>
    %cst_182 = arith.constant dense<0.000000e+00> : vector<1xf32>
    %746 = vector.multi_reduction <add>, %745, %cst_182 [1] : vector<1x32xf32> to vector<1xf32>
    %747 = vector.shape_cast %746 : vector<1xf32> to vector<1x1xf32>
    %cst_183 = arith.constant 0.001953125 : f32
    %748 = vector.broadcast %cst_183 : f32 to vector<1x1xf32>
    %749 = arith.mulf %747, %748 : vector<1x1xf32>
    %750 = vector.extract_strided_slice %649 {offsets = [0, 96], sizes = [1, 32], strides = [1, 1]} : vector<1x128xf32> to vector<1x32xf32>
    %cst_184 = arith.constant dense<0.000000e+00> : vector<1xf32>
    %751 = vector.multi_reduction <add>, %750, %cst_184 [1] : vector<1x32xf32> to vector<1xf32>
    %752 = vector.shape_cast %751 : vector<1xf32> to vector<1x1xf32>
    %cst_185 = arith.constant 0.001953125 : f32
    %753 = vector.broadcast %cst_185 : f32 to vector<1x1xf32>
    %754 = arith.mulf %752, %753 : vector<1x1xf32>
    %755 = arith.mulf %749, %749 : vector<1x1xf32>
    %756 = arith.subf %754, %755 : vector<1x1xf32>
    %cst_186 = arith.constant 0.000000e+00 : f32
    %757 = vector.broadcast %cst_186 : f32 to vector<1x1xf32>
    %758 = arith.maximumf %756, %757 : vector<1x1xf32>
    %c3_187 = arith.constant 3 : index
    %759 = memref.load %arg7[%c3_187] : memref<4xf32, #tpu.memory_space<smem>>
    %cst_188 = arith.constant 9.99999974E-6 : f32
    %760 = vector.broadcast %cst_188 : f32 to vector<1x1xf32>
    %761 = arith.addf %758, %760 : vector<1x1xf32>
    %762 = math.rsqrt %761 : vector<1x1xf32>
    %763 = vector.broadcast %759 : f32 to vector<1x1xf32>
    %764 = arith.mulf %763, %762 : vector<1x1xf32>
    %c3_189 = arith.constant 3 : index
    %765 = memref.load %arg8[%c3_189] : memref<4xf32, #tpu.memory_space<smem>>
    %766 = arith.mulf %749, %764 : vector<1x1xf32>
    %767 = vector.broadcast %765 : f32 to vector<1x1xf32>
    %768 = arith.subf %767, %766 : vector<1x1xf32>
    %c3_190 = arith.constant 3 : index
    %c0_191 = arith.constant 0 : index
    %769 = vector.load %arg9[%c3_190, %c0_191] : memref<4x128xf32, #tpu.memory_space<vmem>>, vector<1x128xf32>
    %770 = vector.broadcast %764 : vector<1x1xf32> to vector<1x128xf32>
    %771 = arith.mulf %770, %769 : vector<1x128xf32>
    %772 = arith.addf %741, %771 : vector<1x128xf32>
    %773 = vector.broadcast %768 : vector<1x1xf32> to vector<1x128xf32>
    %774 = arith.mulf %773, %769 : vector<1x128xf32>
    %775 = arith.addf %744, %774 : vector<1x128xf32>
    %776 = vector.broadcast %772 : vector<1x128xf32> to vector<64x128xf32>
    %777 = arith.mulf %598, %776 : vector<64x128xf32>
    %778 = vector.broadcast %775 : vector<1x128xf32> to vector<64x128xf32>
    %779 = arith.addf %777, %778 : vector<64x128xf32>
    %cst_192 = arith.constant 0.000000e+00 : f32
    %780 = vector.broadcast %cst_192 : f32 to vector<64x128xf32>
    %781 = arith.maximumf %779, %780 : vector<64x128xf32>
    %782 = vector.extract_strided_slice %781 {offsets = [2, 0], sizes = [62, 128], strides = [1, 1]} : vector<64x128xf32> to vector<62x128xf32>
    %783 = vector.extract_strided_slice %781 {offsets = [0, 0], sizes = [2, 128], strides = [1, 1]} : vector<64x128xf32> to vector<2x128xf32>
    %784 = tpu.concatenate %782, %783 in 0 : vector<62x128xf32>, vector<2x128xf32> -> vector<64x128xf32>
    %785 = arith.maximumf %781, %784 : vector<64x128xf32>
    %786 = vector.extract_strided_slice %785 {offsets = [0, 2], sizes = [64, 126], strides = [1, 1]} : vector<64x128xf32> to vector<64x126xf32>
    %787 = vector.extract_strided_slice %785 {offsets = [0, 0], sizes = [64, 2], strides = [1, 1]} : vector<64x128xf32> to vector<64x2xf32>
    %788 = tpu.concatenate %786, %787 in 1 : vector<64x126xf32>, vector<64x2xf32> -> vector<64x128xf32>
    %789 = arith.maximumf %785, %788 : vector<64x128xf32>
    %c0_i32_193 = arith.constant 0 : i32
    %790 = vector.broadcast %c0_i32_193 : i32 to vector<1x128xi32>
    %791 = arith.cmpi eq, %1, %790 : vector<1x128xi32>
    %cst_194 = arith.constant 1.000000e+00 : f32
    %cst_195 = arith.constant 0.000000e+00 : f32
    %792 = vector.broadcast %cst_194 : f32 to vector<1x128xf32>
    %793 = vector.broadcast %cst_195 : f32 to vector<1x128xf32>
    %794 = arith.select %791, %792, %793 : vector<1x128xi1>, vector<1x128xf32>
    %c1_i32_196 = arith.constant 1 : i32
    %795 = vector.broadcast %c1_i32_196 : i32 to vector<1x128xi32>
    %796 = arith.cmpi eq, %1, %795 : vector<1x128xi32>
    %cst_197 = arith.constant 1.000000e+00 : f32
    %cst_198 = arith.constant 0.000000e+00 : f32
    %797 = vector.broadcast %cst_197 : f32 to vector<1x128xf32>
    %798 = vector.broadcast %cst_198 : f32 to vector<1x128xf32>
    %799 = arith.select %796, %797, %798 : vector<1x128xi1>, vector<1x128xf32>
    %c0_199 = arith.constant 0 : index
    %c0_200 = arith.constant 0 : index
    %800 = vector.load %arg10[%c0_199, %c0_200] : memref<128x128xf32, #tpu.memory_space<vmem>>, vector<64x128xf32>
    %801 = arith.mulf %789, %800 : vector<64x128xf32>
    %cst_201 = arith.constant dense<0.000000e+00> : vector<64xf32>
    %802 = vector.multi_reduction <add>, %801, %cst_201 [1] : vector<64x128xf32> to vector<64xf32>
    %803 = vector.shape_cast %802 : vector<64xf32> to vector<64x1xf32>
    %c64 = arith.constant 64 : index
    %c0_202 = arith.constant 0 : index
    %804 = vector.load %arg10[%c64, %c0_202] : memref<128x128xf32, #tpu.memory_space<vmem>>, vector<64x128xf32>
    %805 = arith.mulf %789, %804 : vector<64x128xf32>
    %cst_203 = arith.constant dense<0.000000e+00> : vector<64xf32>
    %806 = vector.multi_reduction <add>, %805, %cst_203 [1] : vector<64x128xf32> to vector<64xf32>
    %807 = vector.shape_cast %806 : vector<64xf32> to vector<64x1xf32>
    %808 = vector.extract_strided_slice %803 {offsets = [0, 0], sizes = [32, 1], strides = [1, 1]} : vector<64x1xf32> to vector<32x1xf32>
    %cst_204 = arith.constant dense<0.000000e+00> : vector<1xf32>
    %809 = vector.multi_reduction <add>, %808, %cst_204 [0] : vector<32x1xf32> to vector<1xf32>
    %810 = vector.shape_cast %809 : vector<1xf32> to vector<1x1xf32>
    %811 = vector.extract_strided_slice %807 {offsets = [0, 0], sizes = [32, 1], strides = [1, 1]} : vector<64x1xf32> to vector<32x1xf32>
    %cst_205 = arith.constant dense<0.000000e+00> : vector<1xf32>
    %812 = vector.multi_reduction <add>, %811, %cst_205 [0] : vector<32x1xf32> to vector<1xf32>
    %813 = vector.shape_cast %812 : vector<1xf32> to vector<1x1xf32>
    %814 = vector.broadcast %810 : vector<1x1xf32> to vector<1x128xf32>
    %815 = arith.mulf %814, %794 : vector<1x128xf32>
    %816 = vector.broadcast %813 : vector<1x1xf32> to vector<1x128xf32>
    %817 = arith.mulf %816, %799 : vector<1x128xf32>
    %818 = arith.addf %815, %817 : vector<1x128xf32>
    %819 = vector.extract_strided_slice %803 {offsets = [32, 0], sizes = [32, 1], strides = [1, 1]} : vector<64x1xf32> to vector<32x1xf32>
    %cst_206 = arith.constant dense<0.000000e+00> : vector<1xf32>
    %820 = vector.multi_reduction <add>, %819, %cst_206 [0] : vector<32x1xf32> to vector<1xf32>
    %821 = vector.shape_cast %820 : vector<1xf32> to vector<1x1xf32>
    %822 = vector.extract_strided_slice %807 {offsets = [32, 0], sizes = [32, 1], strides = [1, 1]} : vector<64x1xf32> to vector<32x1xf32>
    %cst_207 = arith.constant dense<0.000000e+00> : vector<1xf32>
    %823 = vector.multi_reduction <add>, %822, %cst_207 [0] : vector<32x1xf32> to vector<1xf32>
    %824 = vector.shape_cast %823 : vector<1xf32> to vector<1x1xf32>
    %825 = vector.broadcast %821 : vector<1x1xf32> to vector<1x128xf32>
    %826 = arith.mulf %825, %794 : vector<1x128xf32>
    %827 = vector.broadcast %824 : vector<1x1xf32> to vector<1x128xf32>
    %828 = arith.mulf %827, %799 : vector<1x128xf32>
    %829 = arith.addf %826, %828 : vector<1x128xf32>
    %830 = tpu.concatenate %818, %829 in 0 : vector<1x128xf32>, vector<1x128xf32> -> vector<2x128xf32>
    %c0_208 = arith.constant 0 : index
    %c0_209 = arith.constant 0 : index
    %831 = vector.load %arg11[%c0_208, %c0_209] : memref<1x128xf32, #tpu.memory_space<vmem>>, vector<1x128xf32>
    %832 = vector.broadcast %831 : vector<1x128xf32> to vector<2x128xf32>
    %833 = arith.addf %830, %832 : vector<2x128xf32>
    %c0_210 = arith.constant 0 : index
    %c0_211 = arith.constant 0 : index
    %834 = vector.load %arg12[%c0_210, %c0_211] : memref<2x128xf32, #tpu.memory_space<vmem>>, vector<2x128xf32>
    tpu.vector_store %arg12[%c0_210, %c0_211], %833 {strides = array<i32>} : memref<2x128xf32, #tpu.memory_space<vmem>>, vector<2x128xf32>,
    return
  }
}

</mosaic_0001>

<llo_original>
// kernel: tpu_custom_call.1
$region0: #{tpu_custom_call.1}
  #allocation0 [shape = 'u32[]', space=smem, size = 0x4, offset = 0x4, fixed_abs, tag = 'smem constant byte address 0x4 - core index']
  #allocation1 [shape = 'u32[144,128]{1,0:T(1,128)}', space=vmem, size = 0x12000, scoped, tag = 'internal scratch']
  %s0 = inlined_call_operand.hbm [shape: f32[8,128], index: 0, kind: input, shape index: {}]
  %s1 = inlined_call_operand.hbm [shape: f32[8,128], index: 1, kind: output, shape index: {}]
  %s2 = sld [smem:[#allocation0]]
  $region18: #{tpu_custom_call.1} parent=0
    _
  %s4 = ssub.s32 1, %s2
  %s5 = scalar_select 0, %s4, %s2
  $region1: #{tpu_custom_call.1} parent=0
    #allocation2 [shape = 'u8[4096]{0}', space=vmem, size = 0x1000, scoped, tag = 'input window, operand 0, single buffered']
    #allocation3 [shape = 's32[1]{0}', space=sflag, size = 0x4, scoped, tag = 'scoped memory for tpu_custom_call.1']
    #allocation4 [shape = 's32[1]{0}', space=sflag, size = 0x4, scoped, tag = 'scoped memory for tpu_custom_call.1']
    #allocation5 [shape = 'u8[4096]{0}', space=vmem, size = 0x1000, scoped, tag = 'output window, operand 0, single buffered']
    %6 = vsyncpa [#allocation3], 0
    %7 = vsyncpa [#allocation4], 0
    // Predicated region
    $region2: #{tpu_custom_call.1} parent=1 // pred_check
      _
    $region3: #{tpu_custom_call.1} parent=1 // pred_check_branch
      %9 = sbr.rel (0) target = $region5
    $region4: #{tpu_custom_call.1} parent=1 // pred_region
      %s11 = ssub.s32 128, 128
      %12 = vsyncadd [#allocation3], %s11
      %s14 = sshll.u32 [#allocation2], 4
      %s15 = int_to_ptr.vmem [resolvable:$true] %s14
      %17 = dma.hbm_to_vmem [thread:$0]  %s0, 128, %s15, [#allocation3]
    $region5: #{tpu_custom_call.1} parent=1 // pred_fallthru
      _
    // Predicated region
    $region6: #{tpu_custom_call.1} parent=1 // pred_check
      _
    $region7: #{tpu_custom_call.1} parent=1 // pred_check_branch
      %19 = sbr.rel (0) target = $region9
    $region8: #{tpu_custom_call.1} parent=1 // pred_region
      %20 = dma.done [#allocation3], 128
    $region9: #{tpu_custom_call.1} parent=1 // pred_fallthru
      _
    %v21 = vld [vmem:[#allocation2] sm:$0xff]
    %22 = vrot.lane.b32.xlu0 %v21, 1
    %v23 = vpop.permute.xlu0 %22
    %24 = vst [vmem:[#allocation5] sm:$0xff] %v23
    // Predicated region
    $region10: #{tpu_custom_call.1} parent=1 // pred_check
      _
    $region11: #{tpu_custom_call.1} parent=1 // pred_check_branch
      %26 = sbr.rel (0) target = $region13
    $region12: #{tpu_custom_call.1} parent=1 // pred_region
      %s28 = ssub.s32 128, 128
      %29 = vsyncadd [#allocation4], %s28
      %s31 = sshll.u32 [#allocation5], 4
      %s32 = int_to_ptr.vmem [resolvable:$true] %s31
      %34 = dma.vmem_to_hbm [thread:$0]  %s32, 128, %s1, [#allocation4]
    $region13: #{tpu_custom_call.1} parent=1 // pred_fallthru
      _
    // Predicated region
    $region14: #{tpu_custom_call.1} parent=1 // pred_check
      _
    $region15: #{tpu_custom_call.1} parent=1 // pred_check_branch
      %36 = sbr.rel (0) target = $region17
    $region16: #{tpu_custom_call.1} parent=1 // pred_region
      %37 = dma.done [#allocation4], 128
    $region17: #{tpu_custom_call.1} parent=1 // pred_fallthru
      _
    %38 = vsyncpa [#allocation3], 1
    %39 = vsyncpa [#allocation4], 1

// kernel: net_forward.1
$region0: #{net_forward.1}
  #allocation0 [shape = 'u32[]', space=smem, size = 0x4, offset = 0x4, fixed_abs, tag = 'smem constant byte address 0x4 - core index']
  #allocation1 [shape = 'u32[144,128]{1,0:T(1,128)}', space=vmem, size = 0x12000, scoped, tag = 'internal scratch']
  %s0 = inlined_call_operand.vmem [shape: f32[64,128], index: 0, kind: input, shape index: {}]
  %s1 = inlined_call_operand.vmem [shape: f32[9,128], index: 1, kind: input, shape index: {}]
  %s2 = inlined_call_operand.vmem [shape: f32[1,128], index: 2, kind: input, shape index: {}]
  %s3 = inlined_call_operand.vmem [shape: f32[4], index: 3, kind: input, shape index: {}]
  %s4 = inlined_call_operand.vmem [shape: f32[4], index: 4, kind: input, shape index: {}]
  %s5 = inlined_call_operand.vmem [shape: f32[36,128], index: 5, kind: input, shape index: {}]
  %s6 = inlined_call_operand.vmem [shape: f32[1,128], index: 6, kind: input, shape index: {}]
  %s7 = inlined_call_operand.vmem [shape: f32[4], index: 7, kind: input, shape index: {}]
  %s8 = inlined_call_operand.vmem [shape: f32[4], index: 8, kind: input, shape index: {}]
  %s9 = inlined_call_operand.vmem [shape: f32[4,128], index: 9, kind: input, shape index: {}]
  %s10 = inlined_call_operand.vmem [shape: f32[128,128], index: 10, kind: input, shape index: {}]
  %s11 = inlined_call_operand.vmem [shape: f32[1,128], index: 11, kind: input, shape index: {}]
  %s12 = inlined_call_operand.hbm [shape: f32[2,128], index: 12, kind: output, shape index: {}]
  %s13 = sld [smem:[#allocation0]]
  $region74: #{net_forward.1} parent=0
    _
  %s15 = ssub.s32 1, %s13
  %s16 = scalar_select 0, %s15, %s13
  $region1: #{net_forward.1} parent=0
    #allocation2 [shape = 'u8[512]{0}', space=smem, size = 0x200, scoped, tag = 'input window, operand 3, single buffered']
    #allocation3 [shape = 's32[1]{0}', space=sflag, size = 0x4, scoped, tag = 'scoped memory for net_forward.1']
    #allocation4 [shape = 's32[1]{0}', space=sflag, size = 0x4, scoped, tag = 'scoped memory for net_forward.1']
    #allocation5 [shape = 'u8[512]{0}', space=smem, size = 0x200, scoped, tag = 'input window, operand 4, single buffered']
    #allocation6 [shape = 's32[1]{0}', space=sflag, size = 0x4, scoped, tag = 'scoped memory for net_forward.1']
    #allocation7 [shape = 'u8[512]{0}', space=smem, size = 0x200, scoped, tag = 'input window, operand 7, single buffered']
    #allocation8 [shape = 'u8[512]{0}', space=smem, size = 0x200, scoped, tag = 'input window, operand 8, single buffered']
    #allocation9 [shape = 's32[1]{0}', space=sflag, size = 0x4, scoped, tag = 'scoped memory for net_forward.1']
    #allocation10 [shape = 'u8[1024]{0}', space=vmem, size = 0x400, scoped, tag = 'output window, operand 0, single buffered']
    %17 = vsyncpa [#allocation4], 0
    %18 = vsyncpa [#allocation6], 0
    %19 = vsyncpa [#allocation9], 0
    %20 = vsyncpa [#allocation3], 0
    // Predicated region
    $region2: #{net_forward.1} parent=1 // pred_check
      _
    $region3: #{net_forward.1} parent=1 // pred_check_branch
      %22 = sbr.rel (0) target = $region5
    $region4: #{net_forward.1} parent=1 // pred_region
      _
    $region5: #{net_forward.1} parent=1 // pred_fallthru
      _
    // Predicated region
    $region6: #{net_forward.1} parent=1 // pred_check
      _
    $region7: #{net_forward.1} parent=1 // pred_check_branch
      %24 = sbr.rel (0) target = $region9
    $region8: #{net_forward.1} parent=1 // pred_region
      _
    $region9: #{net_forward.1} parent=1 // pred_fallthru
      _
    // Predicated region
    $region10: #{net_forward.1} parent=1 // pred_check
      _
    $region11: #{net_forward.1} parent=1 // pred_check_branch
      %26 = sbr.rel (0) target = $region13
    $region12: #{net_forward.1} parent=1 // pred_region
      _
    $region13: #{net_forward.1} parent=1 // pred_fallthru
      _
    // Predicated region
    $region14: #{net_forward.1} parent=1 // pred_check
      _
    $region15: #{net_forward.1} parent=1 // pred_check_branch
      %28 = sbr.rel (0) target = $region17
    $region16: #{net_forward.1} parent=1 // pred_region
      %s30 = ssub.s32 16, 16
      %31 = vsyncadd [#allocation4], %s30
      %s33 = sshll.u32 %s3, 4
      %s34 = int_to_ptr.vmem [resolvable:$true] %s33
      %36 = dma.vmem_to_smem %s34, 16, [#allocation2], [#allocation4]
    $region17: #{net_forward.1} parent=1 // pred_fallthru
      _
    // Predicated region
    $region18: #{net_forward.1} parent=1 // pred_check
      _
    $region19: #{net_forward.1} parent=1 // pred_check_branch
      %38 = sbr.rel (0) target = $region21
    $region20: #{net_forward.1} parent=1 // pred_region
      %s40 = ssub.s32 16, 16
      %41 = vsyncadd [#allocation6], %s40
      %s43 = sshll.u32 %s4, 4
      %s44 = int_to_ptr.vmem [resolvable:$true] %s43
      %46 = dma.vmem_to_smem %s44, 16, [#allocation5], [#allocation6]
    $region21: #{net_forward.1} parent=1 // pred_fallthru
      _
    // Predicated region
    $region22: #{net_forward.1} parent=1 // pred_check
      _
    $region23: #{net_forward.1} parent=1 // pred_check_branch
      %48 = sbr.rel (0) target = $region25
    $region24: #{net_forward.1} parent=1 // pred_region
      _
    $region25: #{net_forward.1} parent=1 // pred_fallthru
      _
    // Predicated region
    $region26: #{net_forward.1} parent=1 // pred_check
      _
    $region27: #{net_forward.1} parent=1 // pred_check_branch
      %50 = sbr.rel (0) target = $region29
    $region28: #{net_forward.1} parent=1 // pred_region
      _
    $region29: #{net_forward.1} parent=1 // pred_fallthru
      _
    // Predicated region
    $region30: #{net_forward.1} parent=1 // pred_check
      _
    $region31: #{net_forward.1} parent=1 // pred_check_branch
      %52 = sbr.rel (0) target = $region33
    $region32: #{net_forward.1} parent=1 // pred_region
      %s54 = ssub.s32 16, 16
      %55 = vsyncadd [#allocation6], %s54
      %s57 = sshll.u32 %s7, 4
      %s58 = int_to_ptr.vmem [resolvable:$true] %s57
      %60 = dma.vmem_to_smem %s58, 16, [#allocation7], [#allocation6]
    $region33: #{net_forward.1} parent=1 // pred_fallthru
      _
    // Predicated region
    $region34: #{net_forward.1} parent=1 // pred_check
      _
    $region35: #{net_forward.1} parent=1 // pred_check_branch
      %62 = sbr.rel (0) target = $region37
    $region36: #{net_forward.1} parent=1 // pred_region
      %s64 = ssub.s32 16, 16
      %65 = vsyncadd [#allocation9], %s64
      %s67 = sshll.u32 %s8, 4
      %s68 = int_to_ptr.vmem [resolvable:$true] %s67
      %70 = dma.vmem_to_smem %s68, 16, [#allocation8], [#allocation9]
    $region37: #{net_forward.1} parent=1 // pred_fallthru
      _
    // Predicated region
    $region38: #{net_forward.1} parent=1 // pred_check
      _
    $region39: #{net_forward.1} parent=1 // pred_check_branch
      %72 = sbr.rel (0) target = $region41
    $region40: #{net_forward.1} parent=1 // pred_region
      _
    $region41: #{net_forward.1} parent=1 // pred_fallthru
      _
    // Predicated region
    $region42: #{net_forward.1} parent=1 // pred_check
      _
    $region43: #{net_forward.1} parent=1 // pred_check_branch
      %74 = sbr.rel (0) target = $region45
    $region44: #{net_forward.1} parent=1 // pred_region
      _
    $region45: #{net_forward.1} parent=1 // pred_fallthru
      _
    // Predicated region
    $region46: #{net_forward.1} parent=1 // pred_check
      _
    $region47: #{net_forward.1} parent=1 // pred_check_branch
      %76 = sbr.rel (0) target = $region49
    $region48: #{net_forward.1} parent=1 // pred_region
      _
    $region49: #{net_forward.1} parent=1 // pred_fallthru
      _
    // Predicated region
    $region50: #{net_forward.1} parent=1 // pred_check
      _
    $region51: #{net_forward.1} parent=1 // pred_check_branch
      %78 = sbr.rel (0) target = $region53
    $region52: #{net_forward.1} parent=1 // pred_region
      %79 = dma.done [#allocation4], 16
    $region53: #{net_forward.1} parent=1 // pred_fallthru
      _
    // Predicated region
    $region54: #{net_forward.1} parent=1 // pred_check
      _
    $region55: #{net_forward.1} parent=1 // pred_check_branch
      %81 = sbr.rel (0) target = $region57
    $region56: #{net_forward.1} parent=1 // pred_region
      %82 = dma.done [#allocation6], 16
    $region57: #{net_forward.1} parent=1 // pred_fallthru
      _
    // Predicated region
    $region58: #{net_forward.1} parent=1 // pred_check
      _
    $region59: #{net_forward.1} parent=1 // pred_check_branch
      %84 = sbr.rel (0) target = $region61
    $region60: #{net_forward.1} parent=1 // pred_region
      %85 = dma.done [#allocation6], 16
    $region61: #{net_forward.1} parent=1 // pred_fallthru
      _
    // Predicated region
    $region62: #{net_forward.1} parent=1 // pred_check
      _
    $region63: #{net_forward.1} parent=1 // pred_check_branch
      %87 = sbr.rel (0) target = $region65
    $region64: #{net_forward.1} parent=1 // pred_region
      %88 = dma.done [#allocation9], 16
    $region65: #{net_forward.1} parent=1 // pred_fallthru
      _
    %89 = sfence
    %v90 = vlaneseq
    %v91 = vshrl.u32 %v90, 7
    %v92 = vadd.s32 %v91, 8
    %v93 = vadd.s32 %v91, 16
    %v94 = vadd.s32 %v91, 24
    %v95 = vadd.s32 %v91, 32
    %v96 = vadd.s32 %v91, 40
    %v97 = vadd.s32 %v91, 48
    %v98 = vadd.s32 %v91, 56
    %v99 = vlaneseq
    %v100 = vand.u32 %v99, 127
    %vm101 = vcmp.lt.s32.totalorder %v91, 0
    %v102 = vsub.s32 0, %v91
    %v103 = vsel %vm101, %v102, %v91
    %v104 = vshrl.u32 %v103, 5
    %v105 = vand.u32 %v103, 31
    %v106 = vsub.s32 0, %v105
    %v107 = vsel %vm101, %v106, %v105
    %vm108 = vcmp.lt.s32.totalorder %v92, 0
    %v109 = vsub.s32 0, %v92
    %v110 = vsel %vm108, %v109, %v92
    %v111 = vshrl.u32 %v110, 5
    %v112 = vand.u32 %v110, 31
    %v113 = vsub.s32 0, %v112
    %v114 = vsel %vm108, %v113, %v112
    %vm115 = vcmp.lt.s32.totalorder %v93, 0
    %v116 = vsub.s32 0, %v93
    %v117 = vsel %vm115, %v116, %v93
    %v118 = vshrl.u32 %v117, 5
    %v119 = vand.u32 %v117, 31
    %v120 = vsub.s32 0, %v119
    %v121 = vsel %vm115, %v120, %v119
    %vm122 = vcmp.lt.s32.totalorder %v94, 0
    %v123 = vsub.s32 0, %v94
    %v124 = vsel %vm122, %v123, %v94
    %v125 = vshrl.u32 %v124, 5
    %v126 = vand.u32 %v124, 31
    %v127 = vsub.s32 0, %v126
    %v128 = vsel %vm122, %v127, %v126
    %vm129 = vcmp.lt.s32.totalorder %v95, 0
    %v130 = vsub.s32 0, %v95
    %v131 = vsel %vm129, %v130, %v95
    %v132 = vshrl.u32 %v131, 5
    %v133 = vand.u32 %v131, 31
    %v134 = vsub.s32 0, %v133
    %v135 = vsel %vm129, %v134, %v133
    %vm136 = vcmp.lt.s32.totalorder %v96, 0
    %v137 = vsub.s32 0, %v96
    %v138 = vsel %vm136, %v137, %v96
    %v139 = vshrl.u32 %v138, 5
    %v140 = vand.u32 %v138, 31
    %v141 = vsub.s32 0, %v140
    %v142 = vsel %vm136, %v141, %v140
    %vm143 = vcmp.lt.s32.totalorder %v97, 0
    %v144 = vsub.s32 0, %v97
    %v145 = vsel %vm143, %v144, %v97
    %v146 = vshrl.u32 %v145, 5
    %v147 = vand.u32 %v145, 31
    %v148 = vsub.s32 0, %v147
    %v149 = vsel %vm143, %v148, %v147
    %vm150 = vcmp.lt.s32.totalorder %v98, 0
    %v151 = vsub.s32 0, %v98
    %v152 = vsel %vm150, %v151, %v98
    %v153 = vshrl.u32 %v152, 5
    %v154 = vand.u32 %v152, 31
    %v155 = vsub.s32 0, %v154
    %v156 = vsel %vm150, %v155, %v154
    %vm157 = vcmp.ne.s32.totalorder %v107, 0
    %vm158 = vcmp.ne.s32.totalorder %v114, 0
    %vm159 = vcmp.ne.s32.totalorder %v121, 0
    %vm160 = vcmp.ne.s32.totalorder %v128, 0
    %vm161 = vcmp.ne.s32.totalorder %v135, 0
    %vm162 = vcmp.ne.s32.totalorder %v142, 0
    %vm163 = vcmp.ne.s32.totalorder %v149, 0
    %vm164 = vcmp.ne.s32.totalorder %v156, 0
    %vm165 = vcmp.lt.s32.totalorder %v107, 0
    %vm166 = vcmp.lt.s32.totalorder %v114, 0
    %vm167 = vcmp.lt.s32.totalorder %v121, 0
    %vm168 = vcmp.lt.s32.totalorder %v128, 0
    %vm169 = vcmp.lt.s32.totalorder %v135, 0
    %vm170 = vcmp.lt.s32.totalorder %v142, 0
    %vm171 = vcmp.lt.s32.totalorder %v149, 0
    %vm172 = vcmp.lt.s32.totalorder %v156, 0
    %vm173 = vmand %vm165, %vm157
    %vm174 = vmand %vm166, %vm158
    %vm175 = vmand %vm167, %vm159
    %vm176 = vmand %vm168, %vm160
    %vm177 = vmand %vm169, %vm161
    %vm178 = vmand %vm170, %vm162
    %vm179 = vmand %vm171, %vm163
    %vm180 = vmand %vm172, %vm164
    %v181 = vadd.s32 %v107, 32
    %v182 = vadd.s32 %v114, 32
    %v183 = vadd.s32 %v121, 32
    %v184 = vadd.s32 %v128, 32
    %v185 = vadd.s32 %v135, 32
    %v186 = vadd.s32 %v142, 32
    %v187 = vadd.s32 %v149, 32
    %v188 = vadd.s32 %v156, 32
    %v189 = vsel %vm173, %v181, %v107
    %v190 = vsel %vm174, %v182, %v114
    %v191 = vsel %vm175, %v183, %v121
    %v192 = vsel %vm176, %v184, %v128
    %v193 = vsel %vm177, %v185, %v135
    %v194 = vsel %vm178, %v186, %v142
    %v195 = vsel %vm179, %v187, %v149
    %v196 = vsel %vm180, %v188, %v156
    %vm197 = vcmp.lt.s32.totalorder %v100, 0
    %v198 = vsub.s32 0, %v100
    %v199 = vsel %vm197, %v198, %v100
    %v200 = vshrl.u32 %v199, 5
    %v201 = vand.u32 %v199, 31
    %v202 = vsub.s32 0, %v201
    %v203 = vsel %vm197, %v202, %v201
    %vm204 = vcmp.ne.s32.totalorder %v203, 0
    %vm205 = vcmp.lt.s32.totalorder %v203, 0
    %vm206 = vmand %vm205, %vm204
    %v207 = vadd.s32 %v203, 32
    %v208 = vsel %vm206, %v207, %v203
    %vm209 = vcmp.ne.s32.totalorder %v189, 0
    %vm210 = vcmp.ne.s32.totalorder %v190, 0
    %vm211 = vcmp.ne.s32.totalorder %v191, 0
    %vm212 = vcmp.ne.s32.totalorder %v192, 0
    %vm213 = vcmp.ne.s32.totalorder %v193, 0
    %vm214 = vcmp.ne.s32.totalorder %v194, 0
    %vm215 = vcmp.ne.s32.totalorder %v195, 0
    %vm216 = vcmp.ne.s32.totalorder %v196, 0
    %v217 = vsel %vm209, 1.0, 0.0
    %v218 = vsel %vm210, 1.0, 0.0
    %v219 = vsel %vm211, 1.0, 0.0
    %v220 = vsel %vm212, 1.0, 0.0
    %v221 = vsel %vm213, 1.0, 0.0
    %v222 = vsel %vm214, 1.0, 0.0
    %v223 = vsel %vm215, 1.0, 0.0
    %v224 = vsel %vm216, 1.0, 0.0
    %vm225 = vcmp.ne.s32.totalorder %v208, 0
    %v226 = vsel %vm225, 1.0, 0.0
    %v227 = vld [vmem:[%s0] sm:$0xff]
    %v228 = vld [vmem:[%s0 + $0x8] sm:$0xff]
    %v229 = vld [vmem:[%s0 + $0x10] sm:$0xff]
    %v230 = vld [vmem:[%s0 + $0x18] sm:$0xff]
    %v231 = vld [vmem:[%s0 + $0x20] sm:$0xff]
    %v232 = vld [vmem:[%s0 + $0x28] sm:$0xff]
    %v233 = vld [vmem:[%s0 + $0x30] sm:$0xff]
    %v234 = vld [vmem:[%s0 + $0x38] sm:$0xff]
    %vm235 = vcmp.ne.s32.totalorder %v189, 31
    %vm236 = vcmp.ne.s32.totalorder %v190, 31
    %vm237 = vcmp.ne.s32.totalorder %v191, 31
    %vm238 = vcmp.ne.s32.totalorder %v192, 31
    %vm239 = vcmp.ne.s32.totalorder %v193, 31
    %vm240 = vcmp.ne.s32.totalorder %v194, 31
    %vm241 = vcmp.ne.s32.totalorder %v195, 31
    %vm242 = vcmp.ne.s32.totalorder %v196, 31
    %v243 = vsel %vm235, 1.0, 0.0
    %v244 = vsel %vm236, 1.0, 0.0
    %v245 = vsel %vm237, 1.0, 0.0
    %v246 = vsel %vm238, 1.0, 0.0
    %v247 = vsel %vm239, 1.0, 0.0
    %v248 = vsel %vm240, 1.0, 0.0
    %v249 = vsel %vm241, 1.0, 0.0
    %v250 = vsel %vm242, 1.0, 0.0
    %vm251 = vcmp.ne.s32.totalorder %v208, 31
    %v252 = vsel %vm251, 1.0, 0.0
    %v254 = vrot.slane %v234, 7
    %vm263 = vcmask 1040384
    %v264 = vrot.slane %v227, 7
    %v265 = vrot.slane %v228, 7
    %v266 = vsel %vm263, %v264, %v265
    %v267 = vrot.slane %v229, 7
    %v268 = vsel %vm263, %v265, %v267
    %v269 = vrot.slane %v230, 7
    %v270 = vsel %vm263, %v267, %v269
    %v271 = vrot.slane %v231, 7
    %v272 = vsel %vm263, %v269, %v271
    %v273 = vrot.slane %v232, 7
    %v274 = vsel %vm263, %v271, %v273
    %v275 = vrot.slane %v233, 7
    %v276 = vsel %vm263, %v273, %v275
    %v277 = vsel %vm263, %v275, %v254
    %v286 = vsel %vm263, %v254, %v264
    %v287 = vmul.f32 %v286, %v217
    %v288 = vmul.f32 %v266, %v218
    %v289 = vmul.f32 %v268, %v219
    %v290 = vmul.f32 %v270, %v220
    %v291 = vmul.f32 %v272, %v221
    %v292 = vmul.f32 %v274, %v222
    %v293 = vmul.f32 %v276, %v223
    %v294 = vmul.f32 %v277, %v224
    %303 = vrot.lane.b32.xlu0 %v287, 1
    %v304 = vpop.permute.xlu0 %303
    %305 = vrot.lane.b32.xlu0 %v288, 1
    %v306 = vpop.permute.xlu0 %305
    %307 = vrot.lane.b32.xlu0 %v289, 1
    %v308 = vpop.permute.xlu0 %307
    %309 = vrot.lane.b32.xlu0 %v290, 1
    %v310 = vpop.permute.xlu0 %309
    %311 = vrot.lane.b32.xlu0 %v291, 1
    %v312 = vpop.permute.xlu0 %311
    %313 = vrot.lane.b32.xlu0 %v292, 1
    %v314 = vpop.permute.xlu0 %313
    %315 = vrot.lane.b32.xlu0 %v293, 1
    %v316 = vpop.permute.xlu0 %315
    %317 = vrot.lane.b32.xlu0 %v294, 1
    %v318 = vpop.permute.xlu0 %317
    %v327 = vmul.f32 %v304, %v226
    %v328 = vmul.f32 %v306, %v226
    %v329 = vmul.f32 %v308, %v226
    %v330 = vmul.f32 %v310, %v226
    %v331 = vmul.f32 %v312, %v226
    %v332 = vmul.f32 %v314, %v226
    %v333 = vmul.f32 %v316, %v226
    %v334 = vmul.f32 %v318, %v226
    %v335 = vld [vmem:[%s1] sm:$0x1]
    %v336 = vlaneseq
    %v337 = vshrl.u32 %v336, 7
    %v338 = vsub.s32 0, %v337
    %v339 = vrot.slane %v335, %v338
    %v340 = vmul.f32 %v339, %v327
    %v341 = vmul.f32 %v339, %v328
    %v342 = vmul.f32 %v339, %v329
    %v343 = vmul.f32 %v339, %v330
    %v344 = vmul.f32 %v339, %v331
    %v345 = vmul.f32 %v339, %v332
    %v346 = vmul.f32 %v339, %v333
    %v347 = vmul.f32 %v339, %v334
    %v348 = vadd.f32 %v340, 0.0
    %v349 = vadd.f32 %v341, 0.0
    %v350 = vadd.f32 %v342, 0.0
    %v351 = vadd.f32 %v343, 0.0
    %v352 = vadd.f32 %v344, 0.0
    %v353 = vadd.f32 %v345, 0.0
    %v354 = vadd.f32 %v346, 0.0
    %v355 = vadd.f32 %v347, 0.0
    %v356 = vld [vmem:[%s1 + $0x1] sm:$0x1]
    %v357 = vlaneseq
    %v358 = vshrl.u32 %v357, 7
    %v359 = vsub.s32 0, %v358
    %v360 = vrot.slane %v356, %v359
    %v361 = vmul.f32 %v360, %v287
    %v362 = vmul.f32 %v360, %v288
    %v363 = vmul.f32 %v360, %v289
    %v364 = vmul.f32 %v360, %v290
    %v365 = vmul.f32 %v360, %v291
    %v366 = vmul.f32 %v360, %v292
    %v367 = vmul.f32 %v360, %v293
    %v368 = vmul.f32 %v360, %v294
    %v369 = vadd.f32 %v348, %v361
    %v370 = vadd.f32 %v349, %v362
    %v371 = vadd.f32 %v350, %v363
    %v372 = vadd.f32 %v351, %v364
    %v373 = vadd.f32 %v352, %v365
    %v374 = vadd.f32 %v353, %v366
    %v375 = vadd.f32 %v354, %v367
    %v376 = vadd.f32 %v355, %v368
    %377 = vrot.lane.b32.xlu0 %v287, 127
    %v378 = vpop.permute.xlu0 %377
    %379 = vrot.lane.b32.xlu0 %v288, 127
    %v380 = vpop.permute.xlu0 %379
    %381 = vrot.lane.b32.xlu0 %v289, 127
    %v382 = vpop.permute.xlu0 %381
    %383 = vrot.lane.b32.xlu0 %v290, 127
    %v384 = vpop.permute.xlu0 %383
    %385 = vrot.lane.b32.xlu0 %v291, 127
    %v386 = vpop.permute.xlu0 %385
    %387 = vrot.lane.b32.xlu0 %v292, 127
    %v388 = vpop.permute.xlu0 %387
    %389 = vrot.lane.b32.xlu0 %v293, 127
    %v390 = vpop.permute.xlu0 %389
    %391 = vrot.lane.b32.xlu0 %v294, 127
    %v392 = vpop.permute.xlu0 %391
    %v401 = vmul.f32 %v378, %v252
    %v402 = vmul.f32 %v380, %v252
    %v403 = vmul.f32 %v382, %v252
    %v404 = vmul.f32 %v384, %v252
    %v405 = vmul.f32 %v386, %v252
    %v406 = vmul.f32 %v388, %v252
    %v407 = vmul.f32 %v390, %v252
    %v408 = vmul.f32 %v392, %v252
    %v409 = vld [vmem:[%s1 + $0x2] sm:$0x1]
    %v410 = vlaneseq
    %v411 = vshrl.u32 %v410, 7
    %v412 = vsub.s32 0, %v411
    %v413 = vrot.slane %v409, %v412
    %v414 = vmul.f32 %v413, %v401
    %v415 = vmul.f32 %v413, %v402
    %v416 = vmul.f32 %v413, %v403
    %v417 = vmul.f32 %v413, %v404
    %v418 = vmul.f32 %v413, %v405
    %v419 = vmul.f32 %v413, %v406
    %v420 = vmul.f32 %v413, %v407
    %v421 = vmul.f32 %v413, %v408
    %v422 = vadd.f32 %v369, %v414
    %v423 = vadd.f32 %v370, %v415
    %v424 = vadd.f32 %v371, %v416
    %v425 = vadd.f32 %v372, %v417
    %v426 = vadd.f32 %v373, %v418
    %v427 = vadd.f32 %v374, %v419
    %v428 = vadd.f32 %v375, %v420
    %v429 = vadd.f32 %v376, %v421
    %430 = vrot.lane.b32.xlu0 %v227, 1
    %v431 = vpop.permute.xlu0 %430
    %432 = vrot.lane.b32.xlu0 %v228, 1
    %v433 = vpop.permute.xlu0 %432
    %434 = vrot.lane.b32.xlu0 %v229, 1
    %v435 = vpop.permute.xlu0 %434
    %436 = vrot.lane.b32.xlu0 %v230, 1
    %v437 = vpop.permute.xlu0 %436
    %438 = vrot.lane.b32.xlu0 %v231, 1
    %v439 = vpop.permute.xlu0 %438
    %440 = vrot.lane.b32.xlu0 %v232, 1
    %v441 = vpop.permute.xlu0 %440
    %442 = vrot.lane.b32.xlu0 %v233, 1
    %v443 = vpop.permute.xlu0 %442
    %444 = vrot.lane.b32.xlu0 %v234, 1
    %v445 = vpop.permute.xlu0 %444
    %v454 = vmul.f32 %v431, %v226
    %v455 = vmul.f32 %v433, %v226
    %v456 = vmul.f32 %v435, %v226
    %v457 = vmul.f32 %v437, %v226
    %v458 = vmul.f32 %v439, %v226
    %v459 = vmul.f32 %v441, %v226
    %v460 = vmul.f32 %v443, %v226
    %v461 = vmul.f32 %v445, %v226
    %v462 = vld [vmem:[%s1 + $0x3] sm:$0x1]
    %v463 = vlaneseq
    %v464 = vshrl.u32 %v463, 7
    %v465 = vsub.s32 0, %v464
    %v466 = vrot.slane %v462, %v465
    %v467 = vmul.f32 %v466, %v454
    %v468 = vmul.f32 %v466, %v455
    %v469 = vmul.f32 %v466, %v456
    %v470 = vmul.f32 %v466, %v457
    %v471 = vmul.f32 %v466, %v458
    %v472 = vmul.f32 %v466, %v459
    %v473 = vmul.f32 %v466, %v460
    %v474 = vmul.f32 %v466, %v461
    %v475 = vadd.f32 %v422, %v467
    %v476 = vadd.f32 %v423, %v468
    %v477 = vadd.f32 %v424, %v469
    %v478 = vadd.f32 %v425, %v470
    %v479 = vadd.f32 %v426, %v471
    %v480 = vadd.f32 %v427, %v472
    %v481 = vadd.f32 %v428, %v473
    %v482 = vadd.f32 %v429, %v474
    %v483 = vld [vmem:[%s1 + $0x4] sm:$0x1]
    %v484 = vlaneseq
    %v485 = vshrl.u32 %v484, 7
    %v486 = vsub.s32 0, %v485
    %v487 = vrot.slane %v483, %v486
    %v488 = vmul.f32 %v487, %v227
    %v489 = vmul.f32 %v487, %v228
    %v490 = vmul.f32 %v487, %v229
    %v491 = vmul.f32 %v487, %v230
    %v492 = vmul.f32 %v487, %v231
    %v493 = vmul.f32 %v487, %v232
    %v494 = vmul.f32 %v487, %v233
    %v495 = vmul.f32 %v487, %v234
    %v496 = vadd.f32 %v475, %v488
    %v497 = vadd.f32 %v476, %v489
    %v498 = vadd.f32 %v477, %v490
    %v499 = vadd.f32 %v478, %v491
    %v500 = vadd.f32 %v479, %v492
    %v501 = vadd.f32 %v480, %v493
    %v502 = vadd.f32 %v481, %v494
    %v503 = vadd.f32 %v482, %v495
    %504 = vrot.lane.b32.xlu0 %v227, 127
    %v505 = vpop.permute.xlu0 %504
    %506 = vrot.lane.b32.xlu0 %v228, 127
    %v507 = vpop.permute.xlu0 %506
    %508 = vrot.lane.b32.xlu0 %v229, 127
    %v509 = vpop.permute.xlu0 %508
    %510 = vrot.lane.b32.xlu0 %v230, 127
    %v511 = vpop.permute.xlu0 %510
    %512 = vrot.lane.b32.xlu0 %v231, 127
    %v513 = vpop.permute.xlu0 %512
    %514 = vrot.lane.b32.xlu0 %v232, 127
    %v515 = vpop.permute.xlu0 %514
    %516 = vrot.lane.b32.xlu0 %v233, 127
    %v517 = vpop.permute.xlu0 %516
    %518 = vrot.lane.b32.xlu0 %v234, 127
    %v519 = vpop.permute.xlu0 %518
    %v528 = vmul.f32 %v505, %v252
    %v529 = vmul.f32 %v507, %v252
    %v530 = vmul.f32 %v509, %v252
    %v531 = vmul.f32 %v511, %v252
    %v532 = vmul.f32 %v513, %v252
    %v533 = vmul.f32 %v515, %v252
    %v534 = vmul.f32 %v517, %v252
    %v535 = vmul.f32 %v519, %v252
    %v536 = vld [vmem:[%s1 + $0x5] sm:$0x1]
    %v537 = vlaneseq
    %v538 = vshrl.u32 %v537, 7
    %v539 = vsub.s32 0, %v538
    %v540 = vrot.slane %v536, %v539
    %v541 = vmul.f32 %v540, %v528
    %v542 = vmul.f32 %v540, %v529
    %v543 = vmul.f32 %v540, %v530
    %v544 = vmul.f32 %v540, %v531
    %v545 = vmul.f32 %v540, %v532
    %v546 = vmul.f32 %v540, %v533
    %v547 = vmul.f32 %v540, %v534
    %v548 = vmul.f32 %v540, %v535
    %v549 = vadd.f32 %v496, %v541
    %v550 = vadd.f32 %v497, %v542
    %v551 = vadd.f32 %v498, %v543
    %v552 = vadd.f32 %v499, %v544
    %v553 = vadd.f32 %v500, %v545
    %v554 = vadd.f32 %v501, %v546
    %v555 = vadd.f32 %v502, %v547
    %v556 = vadd.f32 %v503, %v548
    %vm557 = vcmask 1046528
    %v558 = vrot.slane %v227, 1
    %v559 = vrot.slane %v228, 1
    %v560 = vsel %vm557, %v558, %v559
    %v561 = vrot.slane %v229, 1
    %v562 = vsel %vm557, %v559, %v561
    %v563 = vrot.slane %v230, 1
    %v564 = vsel %vm557, %v561, %v563
    %v565 = vrot.slane %v231, 1
    %v566 = vsel %vm557, %v563, %v565
    %v567 = vrot.slane %v232, 1
    %v568 = vsel %vm557, %v565, %v567
    %v569 = vrot.slane %v233, 1
    %v570 = vsel %vm557, %v567, %v569
    %v571 = vrot.slane %v234, 1
    %v572 = vsel %vm557, %v569, %v571
    %v582 = vsel %vm557, %v571, %v558
    %v583 = vmul.f32 %v560, %v243
    %v584 = vmul.f32 %v562, %v244
    %v585 = vmul.f32 %v564, %v245
    %v586 = vmul.f32 %v566, %v246
    %v587 = vmul.f32 %v568, %v247
    %v588 = vmul.f32 %v570, %v248
    %v589 = vmul.f32 %v572, %v249
    %v590 = vmul.f32 %v582, %v250
    %599 = vrot.lane.b32.xlu0 %v583, 1
    %v600 = vpop.permute.xlu0 %599
    %601 = vrot.lane.b32.xlu0 %v584, 1
    %v602 = vpop.permute.xlu0 %601
    %603 = vrot.lane.b32.xlu0 %v585, 1
    %v604 = vpop.permute.xlu0 %603
    %605 = vrot.lane.b32.xlu0 %v586, 1
    %v606 = vpop.permute.xlu0 %605
    %607 = vrot.lane.b32.xlu0 %v587, 1
    %v608 = vpop.permute.xlu0 %607
    %609 = vrot.lane.b32.xlu0 %v588, 1
    %v610 = vpop.permute.xlu0 %609
    %611 = vrot.lane.b32.xlu0 %v589, 1
    %v612 = vpop.permute.xlu0 %611
    %613 = vrot.lane.b32.xlu0 %v590, 1
    %v614 = vpop.permute.xlu0 %613
    %v623 = vmul.f32 %v600, %v226
    %v624 = vmul.f32 %v602, %v226
    %v625 = vmul.f32 %v604, %v226
    %v626 = vmul.f32 %v606, %v226
    %v627 = vmul.f32 %v608, %v226
    %v628 = vmul.f32 %v610, %v226
    %v629 = vmul.f32 %v612, %v226
    %v630 = vmul.f32 %v614, %v226
    %v631 = vld [vmem:[%s1 + $0x6] sm:$0x1]
    %v632 = vlaneseq
    %v633 = vshrl.u32 %v632, 7
    %v634 = vsub.s32 0, %v633
    %v635 = vrot.slane %v631, %v634
    %v636 = vmul.f32 %v635, %v623
    %v637 = vmul.f32 %v635, %v624
    %v638 = vmul.f32 %v635, %v625
    %v639 = vmul.f32 %v635, %v626
    %v640 = vmul.f32 %v635, %v627
    %v641 = vmul.f32 %v635, %v628
    %v642 = vmul.f32 %v635, %v629
    %v643 = vmul.f32 %v635, %v630
    %v644 = vadd.f32 %v549, %v636
    %v645 = vadd.f32 %v550, %v637
    %v646 = vadd.f32 %v551, %v638
    %v647 = vadd.f32 %v552, %v639
    %v648 = vadd.f32 %v553, %v640
    %v649 = vadd.f32 %v554, %v641
    %v650 = vadd.f32 %v555, %v642
    %v651 = vadd.f32 %v556, %v643
    %v652 = vld [vmem:[%s1 + $0x7] sm:$0x1]
    %v653 = vlaneseq
    %v654 = vshrl.u32 %v653, 7
    %v655 = vsub.s32 0, %v654
    %v656 = vrot.slane %v652, %v655
    %v657 = vmul.f32 %v656, %v583
    %v658 = vmul.f32 %v656, %v584
    %v659 = vmul.f32 %v656, %v585
    %v660 = vmul.f32 %v656, %v586
    %v661 = vmul.f32 %v656, %v587
    %v662 = vmul.f32 %v656, %v588
    %v663 = vmul.f32 %v656, %v589
    %v664 = vmul.f32 %v656, %v590
    %v665 = vadd.f32 %v644, %v657
    %v666 = vadd.f32 %v645, %v658
    %v667 = vadd.f32 %v646, %v659
    %v668 = vadd.f32 %v647, %v660
    %v669 = vadd.f32 %v648, %v661
    %v670 = vadd.f32 %v649, %v662
    %v671 = vadd.f32 %v650, %v663
    %v672 = vadd.f32 %v651, %v664
    %673 = vrot.lane.b32.xlu0 %v583, 127
    %v674 = vpop.permute.xlu0 %673
    %675 = vrot.lane.b32.xlu0 %v584, 127
    %v676 = vpop.permute.xlu0 %675
    %677 = vrot.lane.b32.xlu0 %v585, 127
    %v678 = vpop.permute.xlu0 %677
    %679 = vrot.lane.b32.xlu0 %v586, 127
    %v680 = vpop.permute.xlu0 %679
    %681 = vrot.lane.b32.xlu0 %v587, 127
    %v682 = vpop.permute.xlu0 %681
    %683 = vrot.lane.b32.xlu0 %v588, 127
    %v684 = vpop.permute.xlu0 %683
    %685 = vrot.lane.b32.xlu0 %v589, 127
    %v686 = vpop.permute.xlu0 %685
    %687 = vrot.lane.b32.xlu0 %v590, 127
    %v688 = vpop.permute.xlu0 %687
    %v697 = vmul.f32 %v674, %v252
    %v698 = vmul.f32 %v676, %v252
    %v699 = vmul.f32 %v678, %v252
    %v700 = vmul.f32 %v680, %v252
    %v701 = vmul.f32 %v682, %v252
    %v702 = vmul.f32 %v684, %v252
    %v703 = vmul.f32 %v686, %v252
    %v704 = vmul.f32 %v688, %v252
    %v705 = vld [vmem:[%s1 + $0x8] sm:$0x1]
    %v706 = vlaneseq
    %v707 = vshrl.u32 %v706, 7
    %v708 = vsub.s32 0, %v707
    %v709 = vrot.slane %v705, %v708
    %v710 = vmul.f32 %v709, %v697
    %v711 = vmul.f32 %v709, %v698
    %v712 = vmul.f32 %v709, %v699
    %v713 = vmul.f32 %v709, %v700
    %v714 = vmul.f32 %v709, %v701
    %v715 = vmul.f32 %v709, %v702
    %v716 = vmul.f32 %v709, %v703
    %v717 = vmul.f32 %v709, %v704
    %v718 = vadd.f32 %v665, %v710
    %v719 = vadd.f32 %v666, %v711
    %v720 = vadd.f32 %v667, %v712
    %v721 = vadd.f32 %v668, %v713
    %v722 = vadd.f32 %v669, %v714
    %v723 = vadd.f32 %v670, %v715
    %v724 = vadd.f32 %v671, %v716
    %v725 = vadd.f32 %v672, %v717
    %v726 = vld [vmem:[%s2] sm:$0x1]
    %v728 = vlaneseq
    %v729 = vshrl.u32 %v728, 7
    %v730 = vsub.s32 0, %v729
    %v731 = vrot.slane %v726, %v730
    %v733 = vadd.f32 %v718, %v731
    %v734 = vadd.f32 %v719, %v731
    %v735 = vadd.f32 %v720, %v731
    %v736 = vadd.f32 %v721, %v731
    %v737 = vadd.f32 %v722, %v731
    %v738 = vadd.f32 %v723, %v731
    %v739 = vadd.f32 %v724, %v731
    %v740 = vadd.f32 %v725, %v731
    %v741 = vadd.f32 %v733, %v734
    %v742 = vadd.f32 %v741, %v735
    %v743 = vadd.f32 %v742, %v736
    %v744 = vadd.f32 %v743, %v737
    %v745 = vadd.f32 %v744, %v738
    %v746 = vadd.f32 %v745, %v739
    %v747 = vadd.f32 %v746, %v740
    %v748 = vrot.slane %v747, 4
    %v749 = vadd.f32 %v747, %v748
    %v750 = vrot.slane %v749, 2
    %v751 = vadd.f32 %v749, %v750
    %v752 = vrot.slane %v751, 1
    %v753 = vadd.f32 %v751, %v752
    %v754 = vmul.f32 %v733, %v733
    %v755 = vmul.f32 %v734, %v734
    %v756 = vmul.f32 %v735, %v735
    %v757 = vmul.f32 %v736, %v736
    %v758 = vmul.f32 %v737, %v737
    %v759 = vmul.f32 %v738, %v738
    %v760 = vmul.f32 %v739, %v739
    %v761 = vmul.f32 %v740, %v740
    %v762 = vadd.f32 %v754, %v755
    %v763 = vadd.f32 %v762, %v756
    %v764 = vadd.f32 %v763, %v757
    %v765 = vadd.f32 %v764, %v758
    %v766 = vadd.f32 %v765, %v759
    %v767 = vadd.f32 %v766, %v760
    %v768 = vadd.f32 %v767, %v761
    %v769 = vrot.slane %v768, 4
    %v770 = vadd.f32 %v768, %v769
    %v771 = vrot.slane %v770, 2
    %v772 = vadd.f32 %v770, %v771
    %v773 = vrot.slane %v772, 1
    %v774 = vadd.f32 %v772, %v773
    %vm775 = vcmask 261120
    %v776 = vsel %vm775, %v753, 0.0
    %777 = vadd.xlane.f32.xlu0 %v776
    %v778 = vpop.xlane.xlu0 %777
    %v779 = vmul.f32 %v778, 0.00048828125
    %v780 = vsel %vm775, %v774, 0.0
    %781 = vadd.xlane.f32.xlu0 %v780
    %v782 = vpop.xlane.xlu0 %781
    %v783 = vmul.f32 %v782, 0.00048828125
    %v784 = vmul.f32 %v779, %v779
    %v785 = vsub.f32 %v783, %v784
    %v786 = vmax.f32 %v785, 0.0
    %s787 = sld [smem:[#allocation2]]
    %v788 = vadd.f32 %v786, 1e-05
    %v789 = vrsqrt.pop %v788
    %v790 = vstv %s787
    %v791 = vmul.f32 %v790, %v789
    %s792 = sld [smem:[#allocation5]]
    %v793 = vmul.f32 %v779, %v791
    %v794 = vstv %s792
    %v795 = vsub.f32 %v794, %v793
    %v796 = vld [vmem:[%s9] sm:$0x1]
    %v797 = vmul.f32 %v791, %v796
    %v798 = vadd.f32 %v797, 0.0
    %v799 = vmul.f32 %v795, %v796
    %v800 = vadd.f32 %v799, 0.0
    %802 = vrot.lane.b32.xlu0 %v753, 96
    %v803 = vpop.permute.xlu0 %802
    %v805 = vsel %vm775, %v803, 0.0
    %806 = vadd.xlane.f32.xlu0 %v805
    %v807 = vpop.xlane.xlu0 %806
    %v808 = vmul.f32 %v807, 0.00048828125
    %810 = vrot.lane.b32.xlu0 %v774, 96
    %v811 = vpop.permute.xlu0 %810
    %v813 = vsel %vm775, %v811, 0.0
    %814 = vadd.xlane.f32.xlu0 %v813
    %v815 = vpop.xlane.xlu0 %814
    %v816 = vmul.f32 %v815, 0.00048828125
    %v817 = vmul.f32 %v808, %v808
    %v818 = vsub.f32 %v816, %v817
    %v819 = vmax.f32 %v818, 0.0
    %s820 = sld [smem:[#allocation2 + $0x1]]
    %v821 = vadd.f32 %v819, 1e-05
    %v822 = vrsqrt.pop %v821
    %v823 = vstv %s820
    %v824 = vmul.f32 %v823, %v822
    %s825 = sld [smem:[#allocation5 + $0x1]]
    %v826 = vmul.f32 %v808, %v824
    %v827 = vstv %s825
    %v828 = vsub.f32 %v827, %v826
    %v829 = vld [vmem:[%s9 + $0x1] sm:$0x1]
    %v830 = vmul.f32 %v824, %v829
    %v831 = vadd.f32 %v798, %v830
    %v832 = vmul.f32 %v828, %v829
    %v833 = vadd.f32 %v800, %v832
    %834 = vrot.lane.b32.xlu0 %v753, 64
    %v835 = vpop.permute.xlu0 %834
    %v837 = vsel %vm775, %v835, 0.0
    %838 = vadd.xlane.f32.xlu0 %v837
    %v839 = vpop.xlane.xlu0 %838
    %v840 = vmul.f32 %v839, 0.00048828125
    %841 = vrot.lane.b32.xlu0 %v774, 64
    %v842 = vpop.permute.xlu0 %841
    %v844 = vsel %vm775, %v842, 0.0
    %845 = vadd.xlane.f32.xlu0 %v844
    %v846 = vpop.xlane.xlu0 %845
    %v847 = vmul.f32 %v846, 0.00048828125
    %v848 = vmul.f32 %v840, %v840
    %v849 = vsub.f32 %v847, %v848
    %v850 = vmax.f32 %v849, 0.0
    %s851 = sld [smem:[#allocation2 + $0x2]]
    %v852 = vadd.f32 %v850, 1e-05
    %v853 = vrsqrt.pop %v852
    %v854 = vstv %s851
    %v855 = vmul.f32 %v854, %v853
    %s856 = sld [smem:[#allocation5 + $0x2]]
    %v857 = vmul.f32 %v840, %v855
    %v858 = vstv %s856
    %v859 = vsub.f32 %v858, %v857
    %v860 = vld [vmem:[%s9 + $0x2] sm:$0x1]
    %v861 = vmul.f32 %v855, %v860
    %v862 = vadd.f32 %v831, %v861
    %v863 = vmul.f32 %v859, %v860
    %v864 = vadd.f32 %v833, %v863
    %865 = vrot.lane.b32.xlu0 %v753, 32
    %v866 = vpop.permute.xlu0 %865
    %v868 = vsel %vm775, %v866, 0.0
    %869 = vadd.xlane.f32.xlu0 %v868
    %v870 = vpop.xlane.xlu0 %869
    %v871 = vmul.f32 %v870, 0.00048828125
    %872 = vrot.lane.b32.xlu0 %v774, 32
    %v873 = vpop.permute.xlu0 %872
    %v875 = vsel %vm775, %v873, 0.0
    %876 = vadd.xlane.f32.xlu0 %v875
    %v877 = vpop.xlane.xlu0 %876
    %v878 = vmul.f32 %v877, 0.00048828125
    %v879 = vmul.f32 %v871, %v871
    %v880 = vsub.f32 %v878, %v879
    %v881 = vmax.f32 %v880, 0.0
    %s882 = sld [smem:[#allocation2 + $0x3]]
    %v883 = vadd.f32 %v881, 1e-05
    %v884 = vrsqrt.pop %v883
    %v885 = vstv %s882
    %v886 = vmul.f32 %v885, %v884
    %s887 = sld [smem:[#allocation5 + $0x3]]
    %v888 = vmul.f32 %v871, %v886
    %v889 = vstv %s887
    %v890 = vsub.f32 %v889, %v888
    %v891 = vld [vmem:[%s9 + $0x3] sm:$0x1]
    %v892 = vmul.f32 %v886, %v891
    %v893 = vadd.f32 %v862, %v892
    %v894 = vmul.f32 %v890, %v891
    %v895 = vadd.f32 %v864, %v894
    %v896 = vlaneseq
    %v897 = vshrl.u32 %v896, 7
    %v898 = vsub.s32 0, %v897
    %v899 = vrot.slane %v893, %v898
    %v900 = vmul.f32 %v733, %v899
    %v901 = vmul.f32 %v734, %v899
    %v902 = vmul.f32 %v735, %v899
    %v903 = vmul.f32 %v736, %v899
    %v904 = vmul.f32 %v737, %v899
    %v905 = vmul.f32 %v738, %v899
    %v906 = vmul.f32 %v739, %v899
    %v907 = vmul.f32 %v740, %v899
    %v908 = vlaneseq
    %v909 = vshrl.u32 %v908, 7
    %v910 = vsub.s32 0, %v909
    %v911 = vrot.slane %v895, %v910
    %v912 = vadd.f32 %v900, %v911
    %v913 = vadd.f32 %v901, %v911
    %v914 = vadd.f32 %v902, %v911
    %v915 = vadd.f32 %v903, %v911
    %v916 = vadd.f32 %v904, %v911
    %v917 = vadd.f32 %v905, %v911
    %v918 = vadd.f32 %v906, %v911
    %v919 = vadd.f32 %v907, %v911
    %v920 = vmax.f32 %v912, 0.0
    %v921 = vmax.f32 %v913, 0.0
    %v922 = vmax.f32 %v914, 0.0
    %v923 = vmax.f32 %v915, 0.0
    %v924 = vmax.f32 %v916, 0.0
    %v925 = vmax.f32 %v917, 0.0
    %v926 = vmax.f32 %v918, 0.0
    %v927 = vmax.f32 %v919, 0.0
    %v936 = vrot.slane %v920, 1
    %v937 = vrot.slane %v921, 1
    %v938 = vsel %vm557, %v936, %v937
    %v939 = vrot.slane %v922, 1
    %v940 = vsel %vm557, %v937, %v939
    %v941 = vrot.slane %v923, 1
    %v942 = vsel %vm557, %v939, %v941
    %v943 = vrot.slane %v924, 1
    %v944 = vsel %vm557, %v941, %v943
    %v945 = vrot.slane %v925, 1
    %v946 = vsel %vm557, %v943, %v945
    %v947 = vrot.slane %v926, 1
    %v948 = vsel %vm557, %v945, %v947
    %v949 = vrot.slane %v927, 1
    %v950 = vsel %vm557, %v947, %v949
    %v960 = vsel %vm557, %v949, %v936
    %v961 = vmax.f32 %v920, %v938
    %v962 = vmax.f32 %v921, %v940
    %v963 = vmax.f32 %v922, %v942
    %v964 = vmax.f32 %v923, %v944
    %v965 = vmax.f32 %v924, %v946
    %v966 = vmax.f32 %v925, %v948
    %v967 = vmax.f32 %v926, %v950
    %v968 = vmax.f32 %v927, %v960
    %977 = vrot.lane.b32.xlu0 %v961, 127
    %v978 = vpop.permute.xlu0 %977
    %979 = vrot.lane.b32.xlu0 %v962, 127
    %v980 = vpop.permute.xlu0 %979
    %981 = vrot.lane.b32.xlu0 %v963, 127
    %v982 = vpop.permute.xlu0 %981
    %983 = vrot.lane.b32.xlu0 %v964, 127
    %v984 = vpop.permute.xlu0 %983
    %985 = vrot.lane.b32.xlu0 %v965, 127
    %v986 = vpop.permute.xlu0 %985
    %987 = vrot.lane.b32.xlu0 %v966, 127
    %v988 = vpop.permute.xlu0 %987
    %989 = vrot.lane.b32.xlu0 %v967, 127
    %v990 = vpop.permute.xlu0 %989
    %991 = vrot.lane.b32.xlu0 %v968, 127
    %v992 = vpop.permute.xlu0 %991
    %v1001 = vmax.f32 %v961, %v978
    %v1002 = vmax.f32 %v962, %v980
    %v1003 = vmax.f32 %v963, %v982
    %v1004 = vmax.f32 %v964, %v984
    %v1005 = vmax.f32 %v965, %v986
    %v1006 = vmax.f32 %v966, %v988
    %v1007 = vmax.f32 %v967, %v990
    %v1008 = vmax.f32 %v968, %v992
    %vm1009 = vcmp.ne.s32.totalorder %v189, 30
    %vm1010 = vcmp.ne.s32.totalorder %v190, 30
    %vm1011 = vcmp.ne.s32.totalorder %v191, 30
    %vm1012 = vcmp.ne.s32.totalorder %v192, 30
    %vm1013 = vcmp.ne.s32.totalorder %v193, 30
    %vm1014 = vcmp.ne.s32.totalorder %v194, 30
    %vm1015 = vcmp.ne.s32.totalorder %v195, 30
    %vm1016 = vcmp.ne.s32.totalorder %v196, 30
    %v1017 = vsel %vm1009, 1.0, 0.0
    %v1018 = vsel %vm1010, 1.0, 0.0
    %v1019 = vsel %vm1011, 1.0, 0.0
    %v1020 = vsel %vm1012, 1.0, 0.0
    %v1021 = vsel %vm1013, 1.0, 0.0
    %v1022 = vsel %vm1014, 1.0, 0.0
    %v1023 = vsel %vm1015, 1.0, 0.0
    %v1024 = vsel %vm1016, 1.0, 0.0
    %vm1025 = vcmp.ne.s32.totalorder %v208, 30
    %v1026 = vsel %vm1025, 1.0, 0.0
    %v1028 = vrot.slane %v1008, 6
    %vm1037 = vcmask 1041408
    %v1038 = vrot.slane %v1001, 6
    %v1039 = vrot.slane %v1002, 6
    %v1040 = vsel %vm1037, %v1038, %v1039
    %v1041 = vrot.slane %v1003, 6
    %v1042 = vsel %vm1037, %v1039, %v1041
    %v1043 = vrot.slane %v1004, 6
    %v1044 = vsel %vm1037, %v1041, %v1043
    %v1045 = vrot.slane %v1005, 6
    %v1046 = vsel %vm1037, %v1043, %v1045
    %v1047 = vrot.slane %v1006, 6
    %v1048 = vsel %vm1037, %v1045, %v1047
    %v1049 = vrot.slane %v1007, 6
    %v1050 = vsel %vm1037, %v1047, %v1049
    %v1051 = vsel %vm1037, %v1049, %v1028
    %v1060 = vsel %vm1037, %v1028, %v1038
    %v1061 = vmul.f32 %v1060, %v217
    %v1062 = vmul.f32 %v1040, %v218
    %v1063 = vmul.f32 %v1042, %v219
    %v1064 = vmul.f32 %v1044, %v220
    %v1065 = vmul.f32 %v1046, %v221
    %v1066 = vmul.f32 %v1048, %v222
    %v1067 = vmul.f32 %v1050, %v223
    %v1068 = vmul.f32 %v1051, %v224
    %1077 = vrot.lane.b32.xlu0 %v1061, 2
    %v1078 = vpop.permute.xlu0 %1077
    %1079 = vrot.lane.b32.xlu0 %v1062, 2
    %v1080 = vpop.permute.xlu0 %1079
    %1081 = vrot.lane.b32.xlu0 %v1063, 2
    %v1082 = vpop.permute.xlu0 %1081
    %1083 = vrot.lane.b32.xlu0 %v1064, 2
    %v1084 = vpop.permute.xlu0 %1083
    %1085 = vrot.lane.b32.xlu0 %v1065, 2
    %v1086 = vpop.permute.xlu0 %1085
    %1087 = vrot.lane.b32.xlu0 %v1066, 2
    %v1088 = vpop.permute.xlu0 %1087
    %1089 = vrot.lane.b32.xlu0 %v1067, 2
    %v1090 = vpop.permute.xlu0 %1089
    %1091 = vrot.lane.b32.xlu0 %v1068, 2
    %v1092 = vpop.permute.xlu0 %1091
    %v1101 = vmul.f32 %v1078, %v226
    %v1102 = vmul.f32 %v1080, %v226
    %v1103 = vmul.f32 %v1082, %v226
    %v1104 = vmul.f32 %v1084, %v226
    %v1105 = vmul.f32 %v1086, %v226
    %v1106 = vmul.f32 %v1088, %v226
    %v1107 = vmul.f32 %v1090, %v226
    %v1108 = vmul.f32 %v1092, %v226
    %v1109 = vld [vmem:[%s5] sm:$0x1]
    %v1110 = vlaneseq
    %v1111 = vshrl.u32 %v1110, 7
    %v1112 = vsub.s32 0, %v1111
    %v1113 = vrot.slane %v1109, %v1112
    %v1114 = vmul.f32 %v1113, %v1101
    %v1115 = vmul.f32 %v1113, %v1102
    %v1116 = vmul.f32 %v1113, %v1103
    %v1117 = vmul.f32 %v1113, %v1104
    %v1118 = vmul.f32 %v1113, %v1105
    %v1119 = vmul.f32 %v1113, %v1106
    %v1120 = vmul.f32 %v1113, %v1107
    %v1121 = vmul.f32 %v1113, %v1108
    %v1122 = vadd.f32 %v1114, 0.0
    %v1123 = vadd.f32 %v1115, 0.0
    %v1124 = vadd.f32 %v1116, 0.0
    %v1125 = vadd.f32 %v1117, 0.0
    %v1126 = vadd.f32 %v1118, 0.0
    %v1127 = vadd.f32 %v1119, 0.0
    %v1128 = vadd.f32 %v1120, 0.0
    %v1129 = vadd.f32 %v1121, 0.0
    %1138 = vrot.lane.b32.xlu0 %v1101, 96
    %v1139 = vpop.permute.xlu0 %1138
    %1140 = vrot.lane.b32.xlu0 %v1102, 96
    %v1141 = vpop.permute.xlu0 %1140
    %1142 = vrot.lane.b32.xlu0 %v1103, 96
    %v1143 = vpop.permute.xlu0 %1142
    %1144 = vrot.lane.b32.xlu0 %v1104, 96
    %v1145 = vpop.permute.xlu0 %1144
    %1146 = vrot.lane.b32.xlu0 %v1105, 96
    %v1147 = vpop.permute.xlu0 %1146
    %1148 = vrot.lane.b32.xlu0 %v1106, 96
    %v1149 = vpop.permute.xlu0 %1148
    %1150 = vrot.lane.b32.xlu0 %v1107, 96
    %v1151 = vpop.permute.xlu0 %1150
    %1152 = vrot.lane.b32.xlu0 %v1108, 96
    %v1153 = vpop.permute.xlu0 %1152
    %v1162 = vld [vmem:[%s5 + $0x1] sm:$0x1]
    %v1163 = vlaneseq
    %v1164 = vshrl.u32 %v1163, 7
    %v1165 = vsub.s32 0, %v1164
    %v1166 = vrot.slane %v1162, %v1165
    %v1167 = vmul.f32 %v1166, %v1139
    %v1168 = vmul.f32 %v1166, %v1141
    %v1169 = vmul.f32 %v1166, %v1143
    %v1170 = vmul.f32 %v1166, %v1145
    %v1171 = vmul.f32 %v1166, %v1147
    %v1172 = vmul.f32 %v1166, %v1149
    %v1173 = vmul.f32 %v1166, %v1151
    %v1174 = vmul.f32 %v1166, %v1153
    %v1175 = vadd.f32 %v1122, %v1167
    %v1176 = vadd.f32 %v1123, %v1168
    %v1177 = vadd.f32 %v1124, %v1169
    %v1178 = vadd.f32 %v1125, %v1170
    %v1179 = vadd.f32 %v1126, %v1171
    %v1180 = vadd.f32 %v1127, %v1172
    %v1181 = vadd.f32 %v1128, %v1173
    %v1182 = vadd.f32 %v1129, %v1174
    %1183 = vrot.lane.b32.xlu0 %v1101, 64
    %v1184 = vpop.permute.xlu0 %1183
    %1185 = vrot.lane.b32.xlu0 %v1102, 64
    %v1186 = vpop.permute.xlu0 %1185
    %1187 = vrot.lane.b32.xlu0 %v1103, 64
    %v1188 = vpop.permute.xlu0 %1187
    %1189 = vrot.lane.b32.xlu0 %v1104, 64
    %v1190 = vpop.permute.xlu0 %1189
    %1191 = vrot.lane.b32.xlu0 %v1105, 64
    %v1192 = vpop.permute.xlu0 %1191
    %1193 = vrot.lane.b32.xlu0 %v1106, 64
    %v1194 = vpop.permute.xlu0 %1193
    %1195 = vrot.lane.b32.xlu0 %v1107, 64
    %v1196 = vpop.permute.xlu0 %1195
    %1197 = vrot.lane.b32.xlu0 %v1108, 64
    %v1198 = vpop.permute.xlu0 %1197
    %v1207 = vld [vmem:[%s5 + $0x2] sm:$0x1]
    %v1208 = vlaneseq
    %v1209 = vshrl.u32 %v1208, 7
    %v1210 = vsub.s32 0, %v1209
    %v1211 = vrot.slane %v1207, %v1210
    %v1212 = vmul.f32 %v1211, %v1184
    %v1213 = vmul.f32 %v1211, %v1186
    %v1214 = vmul.f32 %v1211, %v1188
    %v1215 = vmul.f32 %v1211, %v1190
    %v1216 = vmul.f32 %v1211, %v1192
    %v1217 = vmul.f32 %v1211, %v1194
    %v1218 = vmul.f32 %v1211, %v1196
    %v1219 = vmul.f32 %v1211, %v1198
    %v1220 = vadd.f32 %v1175, %v1212
    %v1221 = vadd.f32 %v1176, %v1213
    %v1222 = vadd.f32 %v1177, %v1214
    %v1223 = vadd.f32 %v1178, %v1215
    %v1224 = vadd.f32 %v1179, %v1216
    %v1225 = vadd.f32 %v1180, %v1217
    %v1226 = vadd.f32 %v1181, %v1218
    %v1227 = vadd.f32 %v1182, %v1219
    %1228 = vrot.lane.b32.xlu0 %v1101, 32
    %v1229 = vpop.permute.xlu0 %1228
    %1230 = vrot.lane.b32.xlu0 %v1102, 32
    %v1231 = vpop.permute.xlu0 %1230
    %1232 = vrot.lane.b32.xlu0 %v1103, 32
    %v1233 = vpop.permute.xlu0 %1232
    %1234 = vrot.lane.b32.xlu0 %v1104, 32
    %v1235 = vpop.permute.xlu0 %1234
    %1236 = vrot.lane.b32.xlu0 %v1105, 32
    %v1237 = vpop.permute.xlu0 %1236
    %1238 = vrot.lane.b32.xlu0 %v1106, 32
    %v1239 = vpop.permute.xlu0 %1238
    %1240 = vrot.lane.b32.xlu0 %v1107, 32
    %v1241 = vpop.permute.xlu0 %1240
    %1242 = vrot.lane.b32.xlu0 %v1108, 32
    %v1243 = vpop.permute.xlu0 %1242
    %v1252 = vld [vmem:[%s5 + $0x3] sm:$0x1]
    %v1253 = vlaneseq
    %v1254 = vshrl.u32 %v1253, 7
    %v1255 = vsub.s32 0, %v1254
    %v1256 = vrot.slane %v1252, %v1255
    %v1257 = vmul.f32 %v1256, %v1229
    %v1258 = vmul.f32 %v1256, %v1231
    %v1259 = vmul.f32 %v1256, %v1233
    %v1260 = vmul.f32 %v1256, %v1235
    %v1261 = vmul.f32 %v1256, %v1237
    %v1262 = vmul.f32 %v1256, %v1239
    %v1263 = vmul.f32 %v1256, %v1241
    %v1264 = vmul.f32 %v1256, %v1243
    %v1265 = vadd.f32 %v1220, %v1257
    %v1266 = vadd.f32 %v1221, %v1258
    %v1267 = vadd.f32 %v1222, %v1259
    %v1268 = vadd.f32 %v1223, %v1260
    %v1269 = vadd.f32 %v1224, %v1261
    %v1270 = vadd.f32 %v1225, %v1262
    %v1271 = vadd.f32 %v1226, %v1263
    %v1272 = vadd.f32 %v1227, %v1264
    %v1273 = vld [vmem:[%s5 + $0x4] sm:$0x1]
    %v1274 = vlaneseq
    %v1275 = vshrl.u32 %v1274, 7
    %v1276 = vsub.s32 0, %v1275
    %v1277 = vrot.slane %v1273, %v1276
    %v1278 = vmul.f32 %v1277, %v1061
    %v1279 = vmul.f32 %v1277, %v1062
    %v1280 = vmul.f32 %v1277, %v1063
    %v1281 = vmul.f32 %v1277, %v1064
    %v1282 = vmul.f32 %v1277, %v1065
    %v1283 = vmul.f32 %v1277, %v1066
    %v1284 = vmul.f32 %v1277, %v1067
    %v1285 = vmul.f32 %v1277, %v1068
    %v1286 = vadd.f32 %v1265, %v1278
    %v1287 = vadd.f32 %v1266, %v1279
    %v1288 = vadd.f32 %v1267, %v1280
    %v1289 = vadd.f32 %v1268, %v1281
    %v1290 = vadd.f32 %v1269, %v1282
    %v1291 = vadd.f32 %v1270, %v1283
    %v1292 = vadd.f32 %v1271, %v1284
    %v1293 = vadd.f32 %v1272, %v1285
    %1294 = vrot.lane.b32.xlu0 %v1061, 96
    %v1295 = vpop.permute.xlu0 %1294
    %1296 = vrot.lane.b32.xlu0 %v1062, 96
    %v1297 = vpop.permute.xlu0 %1296
    %1298 = vrot.lane.b32.xlu0 %v1063, 96
    %v1299 = vpop.permute.xlu0 %1298
    %1300 = vrot.lane.b32.xlu0 %v1064, 96
    %v1301 = vpop.permute.xlu0 %1300
    %1302 = vrot.lane.b32.xlu0 %v1065, 96
    %v1303 = vpop.permute.xlu0 %1302
    %1304 = vrot.lane.b32.xlu0 %v1066, 96
    %v1305 = vpop.permute.xlu0 %1304
    %1306 = vrot.lane.b32.xlu0 %v1067, 96
    %v1307 = vpop.permute.xlu0 %1306
    %1308 = vrot.lane.b32.xlu0 %v1068, 96
    %v1309 = vpop.permute.xlu0 %1308
    %v1318 = vld [vmem:[%s5 + $0x5] sm:$0x1]
    %v1319 = vlaneseq
    %v1320 = vshrl.u32 %v1319, 7
    %v1321 = vsub.s32 0, %v1320
    %v1322 = vrot.slane %v1318, %v1321
    %v1323 = vmul.f32 %v1322, %v1295
    %v1324 = vmul.f32 %v1322, %v1297
    %v1325 = vmul.f32 %v1322, %v1299
    %v1326 = vmul.f32 %v1322, %v1301
    %v1327 = vmul.f32 %v1322, %v1303
    %v1328 = vmul.f32 %v1322, %v1305
    %v1329 = vmul.f32 %v1322, %v1307
    %v1330 = vmul.f32 %v1322, %v1309
    %v1331 = vadd.f32 %v1286, %v1323
    %v1332 = vadd.f32 %v1287, %v1324
    %v1333 = vadd.f32 %v1288, %v1325
    %v1334 = vadd.f32 %v1289, %v1326
    %v1335 = vadd.f32 %v1290, %v1327
    %v1336 = vadd.f32 %v1291, %v1328
    %v1337 = vadd.f32 %v1292, %v1329
    %v1338 = vadd.f32 %v1293, %v1330
    %1339 = vrot.lane.b32.xlu0 %v1061, 64
    %v1340 = vpop.permute.xlu0 %1339
    %1341 = vrot.lane.b32.xlu0 %v1062, 64
    %v1342 = vpop.permute.xlu0 %1341
    %1343 = vrot.lane.b32.xlu0 %v1063, 64
    %v1344 = vpop.permute.xlu0 %1343
    %1345 = vrot.lane.b32.xlu0 %v1064, 64
    %v1346 = vpop.permute.xlu0 %1345
    %1347 = vrot.lane.b32.xlu0 %v1065, 64
    %v1348 = vpop.permute.xlu0 %1347
    %1349 = vrot.lane.b32.xlu0 %v1066, 64
    %v1350 = vpop.permute.xlu0 %1349
    %1351 = vrot.lane.b32.xlu0 %v1067, 64
    %v1352 = vpop.permute.xlu0 %1351
    %1353 = vrot.lane.b32.xlu0 %v1068, 64
    %v1354 = vpop.permute.xlu0 %1353
    %v1363 = vld [vmem:[%s5 + $0x6] sm:$0x1]
    %v1364 = vlaneseq
    %v1365 = vshrl.u32 %v1364, 7
    %v1366 = vsub.s32 0, %v1365
    %v1367 = vrot.slane %v1363, %v1366
    %v1368 = vmul.f32 %v1367, %v1340
    %v1369 = vmul.f32 %v1367, %v1342
    %v1370 = vmul.f32 %v1367, %v1344
    %v1371 = vmul.f32 %v1367, %v1346
    %v1372 = vmul.f32 %v1367, %v1348
    %v1373 = vmul.f32 %v1367, %v1350
    %v1374 = vmul.f32 %v1367, %v1352
    %v1375 = vmul.f32 %v1367, %v1354
    %v1376 = vadd.f32 %v1331, %v1368
    %v1377 = vadd.f32 %v1332, %v1369
    %v1378 = vadd.f32 %v1333, %v1370
    %v1379 = vadd.f32 %v1334, %v1371
    %v1380 = vadd.f32 %v1335, %v1372
    %v1381 = vadd.f32 %v1336, %v1373
    %v1382 = vadd.f32 %v1337, %v1374
    %v1383 = vadd.f32 %v1338, %v1375
    %1384 = vrot.lane.b32.xlu0 %v1061, 32
    %v1385 = vpop.permute.xlu0 %1384
    %1386 = vrot.lane.b32.xlu0 %v1062, 32
    %v1387 = vpop.permute.xlu0 %1386
    %1388 = vrot.lane.b32.xlu0 %v1063, 32
    %v1389 = vpop.permute.xlu0 %1388
    %1390 = vrot.lane.b32.xlu0 %v1064, 32
    %v1391 = vpop.permute.xlu0 %1390
    %1392 = vrot.lane.b32.xlu0 %v1065, 32
    %v1393 = vpop.permute.xlu0 %1392
    %1394 = vrot.lane.b32.xlu0 %v1066, 32
    %v1395 = vpop.permute.xlu0 %1394
    %1396 = vrot.lane.b32.xlu0 %v1067, 32
    %v1397 = vpop.permute.xlu0 %1396
    %1398 = vrot.lane.b32.xlu0 %v1068, 32
    %v1399 = vpop.permute.xlu0 %1398
    %v1408 = vld [vmem:[%s5 + $0x7] sm:$0x1]
    %v1409 = vlaneseq
    %v1410 = vshrl.u32 %v1409, 7
    %v1411 = vsub.s32 0, %v1410
    %v1412 = vrot.slane %v1408, %v1411
    %v1413 = vmul.f32 %v1412, %v1385
    %v1414 = vmul.f32 %v1412, %v1387
    %v1415 = vmul.f32 %v1412, %v1389
    %v1416 = vmul.f32 %v1412, %v1391
    %v1417 = vmul.f32 %v1412, %v1393
    %v1418 = vmul.f32 %v1412, %v1395
    %v1419 = vmul.f32 %v1412, %v1397
    %v1420 = vmul.f32 %v1412, %v1399
    %v1421 = vadd.f32 %v1376, %v1413
    %v1422 = vadd.f32 %v1377, %v1414
    %v1423 = vadd.f32 %v1378, %v1415
    %v1424 = vadd.f32 %v1379, %v1416
    %v1425 = vadd.f32 %v1380, %v1417
    %v1426 = vadd.f32 %v1381, %v1418
    %v1427 = vadd.f32 %v1382, %v1419
    %v1428 = vadd.f32 %v1383, %v1420
    %1429 = vrot.lane.b32.xlu0 %v1061, 126
    %v1430 = vpop.permute.xlu0 %1429
    %1431 = vrot.lane.b32.xlu0 %v1062, 126
    %v1432 = vpop.permute.xlu0 %1431
    %1433 = vrot.lane.b32.xlu0 %v1063, 126
    %v1434 = vpop.permute.xlu0 %1433
    %1435 = vrot.lane.b32.xlu0 %v1064, 126
    %v1436 = vpop.permute.xlu0 %1435
    %1437 = vrot.lane.b32.xlu0 %v1065, 126
    %v1438 = vpop.permute.xlu0 %1437
    %1439 = vrot.lane.b32.xlu0 %v1066, 126
    %v1440 = vpop.permute.xlu0 %1439
    %1441 = vrot.lane.b32.xlu0 %v1067, 126
    %v1442 = vpop.permute.xlu0 %1441
    %1443 = vrot.lane.b32.xlu0 %v1068, 126
    %v1444 = vpop.permute.xlu0 %1443
    %v1453 = vmul.f32 %v1430, %v1026
    %v1454 = vmul.f32 %v1432, %v1026
    %v1455 = vmul.f32 %v1434, %v1026
    %v1456 = vmul.f32 %v1436, %v1026
    %v1457 = vmul.f32 %v1438, %v1026
    %v1458 = vmul.f32 %v1440, %v1026
    %v1459 = vmul.f32 %v1442, %v1026
    %v1460 = vmul.f32 %v1444, %v1026
    %v1461 = vld [vmem:[%s5 + $0x8] sm:$0x1]
    %v1462 = vlaneseq
    %v1463 = vshrl.u32 %v1462, 7
    %v1464 = vsub.s32 0, %v1463
    %v1465 = vrot.slane %v1461, %v1464
    %v1466 = vmul.f32 %v1465, %v1453
    %v1467 = vmul.f32 %v1465, %v1454
    %v1468 = vmul.f32 %v1465, %v1455
    %v1469 = vmul.f32 %v1465, %v1456
    %v1470 = vmul.f32 %v1465, %v1457
    %v1471 = vmul.f32 %v1465, %v1458
    %v1472 = vmul.f32 %v1465, %v1459
    %v1473 = vmul.f32 %v1465, %v1460
    %v1474 = vadd.f32 %v1421, %v1466
    %v1475 = vadd.f32 %v1422, %v1467
    %v1476 = vadd.f32 %v1423, %v1468
    %v1477 = vadd.f32 %v1424, %v1469
    %v1478 = vadd.f32 %v1425, %v1470
    %v1479 = vadd.f32 %v1426, %v1471
    %v1480 = vadd.f32 %v1427, %v1472
    %v1481 = vadd.f32 %v1428, %v1473
    %1490 = vrot.lane.b32.xlu0 %v1453, 96
    %v1491 = vpop.permute.xlu0 %1490
    %1492 = vrot.lane.b32.xlu0 %v1454, 96
    %v1493 = vpop.permute.xlu0 %1492
    %1494 = vrot.lane.b32.xlu0 %v1455, 96
    %v1495 = vpop.permute.xlu0 %1494
    %1496 = vrot.lane.b32.xlu0 %v1456, 96
    %v1497 = vpop.permute.xlu0 %1496
    %1498 = vrot.lane.b32.xlu0 %v1457, 96
    %v1499 = vpop.permute.xlu0 %1498
    %1500 = vrot.lane.b32.xlu0 %v1458, 96
    %v1501 = vpop.permute.xlu0 %1500
    %1502 = vrot.lane.b32.xlu0 %v1459, 96
    %v1503 = vpop.permute.xlu0 %1502
    %1504 = vrot.lane.b32.xlu0 %v1460, 96
    %v1505 = vpop.permute.xlu0 %1504
    %v1514 = vld [vmem:[%s5 + $0x9] sm:$0x1]
    %v1515 = vlaneseq
    %v1516 = vshrl.u32 %v1515, 7
    %v1517 = vsub.s32 0, %v1516
    %v1518 = vrot.slane %v1514, %v1517
    %v1519 = vmul.f32 %v1518, %v1491
    %v1520 = vmul.f32 %v1518, %v1493
    %v1521 = vmul.f32 %v1518, %v1495
    %v1522 = vmul.f32 %v1518, %v1497
    %v1523 = vmul.f32 %v1518, %v1499
    %v1524 = vmul.f32 %v1518, %v1501
    %v1525 = vmul.f32 %v1518, %v1503
    %v1526 = vmul.f32 %v1518, %v1505
    %v1527 = vadd.f32 %v1474, %v1519
    %v1528 = vadd.f32 %v1475, %v1520
    %v1529 = vadd.f32 %v1476, %v1521
    %v1530 = vadd.f32 %v1477, %v1522
    %v1531 = vadd.f32 %v1478, %v1523
    %v1532 = vadd.f32 %v1479, %v1524
    %v1533 = vadd.f32 %v1480, %v1525
    %v1534 = vadd.f32 %v1481, %v1526
    %1535 = vrot.lane.b32.xlu0 %v1453, 64
    %v1536 = vpop.permute.xlu0 %1535
    %1537 = vrot.lane.b32.xlu0 %v1454, 64
    %v1538 = vpop.permute.xlu0 %1537
    %1539 = vrot.lane.b32.xlu0 %v1455, 64
    %v1540 = vpop.permute.xlu0 %1539
    %1541 = vrot.lane.b32.xlu0 %v1456, 64
    %v1542 = vpop.permute.xlu0 %1541
    %1543 = vrot.lane.b32.xlu0 %v1457, 64
    %v1544 = vpop.permute.xlu0 %1543
    %1545 = vrot.lane.b32.xlu0 %v1458, 64
    %v1546 = vpop.permute.xlu0 %1545
    %1547 = vrot.lane.b32.xlu0 %v1459, 64
    %v1548 = vpop.permute.xlu0 %1547
    %1549 = vrot.lane.b32.xlu0 %v1460, 64
    %v1550 = vpop.permute.xlu0 %1549
    %v1559 = vld [vmem:[%s5 + $0xa] sm:$0x1]
    %v1560 = vlaneseq
    %v1561 = vshrl.u32 %v1560, 7
    %v1562 = vsub.s32 0, %v1561
    %v1563 = vrot.slane %v1559, %v1562
    %v1564 = vmul.f32 %v1563, %v1536
    %v1565 = vmul.f32 %v1563, %v1538
    %v1566 = vmul.f32 %v1563, %v1540
    %v1567 = vmul.f32 %v1563, %v1542
    %v1568 = vmul.f32 %v1563, %v1544
    %v1569 = vmul.f32 %v1563, %v1546
    %v1570 = vmul.f32 %v1563, %v1548
    %v1571 = vmul.f32 %v1563, %v1550
    %v1572 = vadd.f32 %v1527, %v1564
    %v1573 = vadd.f32 %v1528, %v1565
    %v1574 = vadd.f32 %v1529, %v1566
    %v1575 = vadd.f32 %v1530, %v1567
    %v1576 = vadd.f32 %v1531, %v1568
    %v1577 = vadd.f32 %v1532, %v1569
    %v1578 = vadd.f32 %v1533, %v1570
    %v1579 = vadd.f32 %v1534, %v1571
    %1580 = vrot.lane.b32.xlu0 %v1453, 32
    %v1581 = vpop.permute.xlu0 %1580
    %1582 = vrot.lane.b32.xlu0 %v1454, 32
    %v1583 = vpop.permute.xlu0 %1582
    %1584 = vrot.lane.b32.xlu0 %v1455, 32
    %v1585 = vpop.permute.xlu0 %1584
    %1586 = vrot.lane.b32.xlu0 %v1456, 32
    %v1587 = vpop.permute.xlu0 %1586
    %1588 = vrot.lane.b32.xlu0 %v1457, 32
    %v1589 = vpop.permute.xlu0 %1588
    %1590 = vrot.lane.b32.xlu0 %v1458, 32
    %v1591 = vpop.permute.xlu0 %1590
    %1592 = vrot.lane.b32.xlu0 %v1459, 32
    %v1593 = vpop.permute.xlu0 %1592
    %1594 = vrot.lane.b32.xlu0 %v1460, 32
    %v1595 = vpop.permute.xlu0 %1594
    %v1604 = vld [vmem:[%s5 + $0xb] sm:$0x1]
    %v1605 = vlaneseq
    %v1606 = vshrl.u32 %v1605, 7
    %v1607 = vsub.s32 0, %v1606
    %v1608 = vrot.slane %v1604, %v1607
    %v1609 = vmul.f32 %v1608, %v1581
    %v1610 = vmul.f32 %v1608, %v1583
    %v1611 = vmul.f32 %v1608, %v1585
    %v1612 = vmul.f32 %v1608, %v1587
    %v1613 = vmul.f32 %v1608, %v1589
    %v1614 = vmul.f32 %v1608, %v1591
    %v1615 = vmul.f32 %v1608, %v1593
    %v1616 = vmul.f32 %v1608, %v1595
    %v1617 = vadd.f32 %v1572, %v1609
    %v1618 = vadd.f32 %v1573, %v1610
    %v1619 = vadd.f32 %v1574, %v1611
    %v1620 = vadd.f32 %v1575, %v1612
    %v1621 = vadd.f32 %v1576, %v1613
    %v1622 = vadd.f32 %v1577, %v1614
    %v1623 = vadd.f32 %v1578, %v1615
    %v1624 = vadd.f32 %v1579, %v1616
    %1625 = vrot.lane.b32.xlu0 %v1001, 2
    %v1626 = vpop.permute.xlu0 %1625
    %1627 = vrot.lane.b32.xlu0 %v1002, 2
    %v1628 = vpop.permute.xlu0 %1627
    %1629 = vrot.lane.b32.xlu0 %v1003, 2
    %v1630 = vpop.permute.xlu0 %1629
    %1631 = vrot.lane.b32.xlu0 %v1004, 2
    %v1632 = vpop.permute.xlu0 %1631
    %1633 = vrot.lane.b32.xlu0 %v1005, 2
    %v1634 = vpop.permute.xlu0 %1633
    %1635 = vrot.lane.b32.xlu0 %v1006, 2
    %v1636 = vpop.permute.xlu0 %1635
    %1637 = vrot.lane.b32.xlu0 %v1007, 2
    %v1638 = vpop.permute.xlu0 %1637
    %1639 = vrot.lane.b32.xlu0 %v1008, 2
    %v1640 = vpop.permute.xlu0 %1639
    %v1649 = vmul.f32 %v1626, %v226
    %v1650 = vmul.f32 %v1628, %v226
    %v1651 = vmul.f32 %v1630, %v226
    %v1652 = vmul.f32 %v1632, %v226
    %v1653 = vmul.f32 %v1634, %v226
    %v1654 = vmul.f32 %v1636, %v226
    %v1655 = vmul.f32 %v1638, %v226
    %v1656 = vmul.f32 %v1640, %v226
    %v1657 = vld [vmem:[%s5 + $0xc] sm:$0x1]
    %v1658 = vlaneseq
    %v1659 = vshrl.u32 %v1658, 7
    %v1660 = vsub.s32 0, %v1659
    %v1661 = vrot.slane %v1657, %v1660
    %v1662 = vmul.f32 %v1661, %v1649
    %v1663 = vmul.f32 %v1661, %v1650
    %v1664 = vmul.f32 %v1661, %v1651
    %v1665 = vmul.f32 %v1661, %v1652
    %v1666 = vmul.f32 %v1661, %v1653
    %v1667 = vmul.f32 %v1661, %v1654
    %v1668 = vmul.f32 %v1661, %v1655
    %v1669 = vmul.f32 %v1661, %v1656
    %v1670 = vadd.f32 %v1617, %v1662
    %v1671 = vadd.f32 %v1618, %v1663
    %v1672 = vadd.f32 %v1619, %v1664
    %v1673 = vadd.f32 %v1620, %v1665
    %v1674 = vadd.f32 %v1621, %v1666
    %v1675 = vadd.f32 %v1622, %v1667
    %v1676 = vadd.f32 %v1623, %v1668
    %v1677 = vadd.f32 %v1624, %v1669
    %1686 = vrot.lane.b32.xlu0 %v1649, 96
    %v1687 = vpop.permute.xlu0 %1686
    %1688 = vrot.lane.b32.xlu0 %v1650, 96
    %v1689 = vpop.permute.xlu0 %1688
    %1690 = vrot.lane.b32.xlu0 %v1651, 96
    %v1691 = vpop.permute.xlu0 %1690
    %1692 = vrot.lane.b32.xlu0 %v1652, 96
    %v1693 = vpop.permute.xlu0 %1692
    %1694 = vrot.lane.b32.xlu0 %v1653, 96
    %v1695 = vpop.permute.xlu0 %1694
    %1696 = vrot.lane.b32.xlu0 %v1654, 96
    %v1697 = vpop.permute.xlu0 %1696
    %1698 = vrot.lane.b32.xlu0 %v1655, 96
    %v1699 = vpop.permute.xlu0 %1698
    %1700 = vrot.lane.b32.xlu0 %v1656, 96
    %v1701 = vpop.permute.xlu0 %1700
    %v1710 = vld [vmem:[%s5 + $0xd] sm:$0x1]
    %v1711 = vlaneseq
    %v1712 = vshrl.u32 %v1711, 7
    %v1713 = vsub.s32 0, %v1712
    %v1714 = vrot.slane %v1710, %v1713
    %v1715 = vmul.f32 %v1714, %v1687
    %v1716 = vmul.f32 %v1714, %v1689
    %v1717 = vmul.f32 %v1714, %v1691
    %v1718 = vmul.f32 %v1714, %v1693
    %v1719 = vmul.f32 %v1714, %v1695
    %v1720 = vmul.f32 %v1714, %v1697
    %v1721 = vmul.f32 %v1714, %v1699
    %v1722 = vmul.f32 %v1714, %v1701
    %v1723 = vadd.f32 %v1670, %v1715
    %v1724 = vadd.f32 %v1671, %v1716
    %v1725 = vadd.f32 %v1672, %v1717
    %v1726 = vadd.f32 %v1673, %v1718
    %v1727 = vadd.f32 %v1674, %v1719
    %v1728 = vadd.f32 %v1675, %v1720
    %v1729 = vadd.f32 %v1676, %v1721
    %v1730 = vadd.f32 %v1677, %v1722
    %1731 = vrot.lane.b32.xlu0 %v1649, 64
    %v1732 = vpop.permute.xlu0 %1731
    %1733 = vrot.lane.b32.xlu0 %v1650, 64
    %v1734 = vpop.permute.xlu0 %1733
    %1735 = vrot.lane.b32.xlu0 %v1651, 64
    %v1736 = vpop.permute.xlu0 %1735
    %1737 = vrot.lane.b32.xlu0 %v1652, 64
    %v1738 = vpop.permute.xlu0 %1737
    %1739 = vrot.lane.b32.xlu0 %v1653, 64
    %v1740 = vpop.permute.xlu0 %1739
    %1741 = vrot.lane.b32.xlu0 %v1654, 64
    %v1742 = vpop.permute.xlu0 %1741
    %1743 = vrot.lane.b32.xlu0 %v1655, 64
    %v1744 = vpop.permute.xlu0 %1743
    %1745 = vrot.lane.b32.xlu0 %v1656, 64
    %v1746 = vpop.permute.xlu0 %1745
    %v1755 = vld [vmem:[%s5 + $0xe] sm:$0x1]
    %v1756 = vlaneseq
    %v1757 = vshrl.u32 %v1756, 7
    %v1758 = vsub.s32 0, %v1757
    %v1759 = vrot.slane %v1755, %v1758
    %v1760 = vmul.f32 %v1759, %v1732
    %v1761 = vmul.f32 %v1759, %v1734
    %v1762 = vmul.f32 %v1759, %v1736
    %v1763 = vmul.f32 %v1759, %v1738
    %v1764 = vmul.f32 %v1759, %v1740
    %v1765 = vmul.f32 %v1759, %v1742
    %v1766 = vmul.f32 %v1759, %v1744
    %v1767 = vmul.f32 %v1759, %v1746
    %v1768 = vadd.f32 %v1723, %v1760
    %v1769 = vadd.f32 %v1724, %v1761
    %v1770 = vadd.f32 %v1725, %v1762
    %v1771 = vadd.f32 %v1726, %v1763
    %v1772 = vadd.f32 %v1727, %v1764
    %v1773 = vadd.f32 %v1728, %v1765
    %v1774 = vadd.f32 %v1729, %v1766
    %v1775 = vadd.f32 %v1730, %v1767
    %1776 = vrot.lane.b32.xlu0 %v1649, 32
    %v1777 = vpop.permute.xlu0 %1776
    %1778 = vrot.lane.b32.xlu0 %v1650, 32
    %v1779 = vpop.permute.xlu0 %1778
    %1780 = vrot.lane.b32.xlu0 %v1651, 32
    %v1781 = vpop.permute.xlu0 %1780
    %1782 = vrot.lane.b32.xlu0 %v1652, 32
    %v1783 = vpop.permute.xlu0 %1782
    %1784 = vrot.lane.b32.xlu0 %v1653, 32
    %v1785 = vpop.permute.xlu0 %1784
    %1786 = vrot.lane.b32.xlu0 %v1654, 32
    %v1787 = vpop.permute.xlu0 %1786
    %1788 = vrot.lane.b32.xlu0 %v1655, 32
    %v1789 = vpop.permute.xlu0 %1788
    %1790 = vrot.lane.b32.xlu0 %v1656, 32
    %v1791 = vpop.permute.xlu0 %1790
    %v1800 = vld [vmem:[%s5 + $0xf] sm:$0x1]
    %v1801 = vlaneseq
    %v1802 = vshrl.u32 %v1801, 7
    %v1803 = vsub.s32 0, %v1802
    %v1804 = vrot.slane %v1800, %v1803
    %v1805 = vmul.f32 %v1804, %v1777
    %v1806 = vmul.f32 %v1804, %v1779
    %v1807 = vmul.f32 %v1804, %v1781
    %v1808 = vmul.f32 %v1804, %v1783
    %v1809 = vmul.f32 %v1804, %v1785
    %v1810 = vmul.f32 %v1804, %v1787
    %v1811 = vmul.f32 %v1804, %v1789
    %v1812 = vmul.f32 %v1804, %v1791
    %v1813 = vadd.f32 %v1768, %v1805
    %v1814 = vadd.f32 %v1769, %v1806
    %v1815 = vadd.f32 %v1770, %v1807
    %v1816 = vadd.f32 %v1771, %v1808
    %v1817 = vadd.f32 %v1772, %v1809
    %v1818 = vadd.f32 %v1773, %v1810
    %v1819 = vadd.f32 %v1774, %v1811
    %v1820 = vadd.f32 %v1775, %v1812
    %v1821 = vld [vmem:[%s5 + $0x10] sm:$0x1]
    %v1822 = vlaneseq
    %v1823 = vshrl.u32 %v1822, 7
    %v1824 = vsub.s32 0, %v1823
    %v1825 = vrot.slane %v1821, %v1824
    %v1826 = vmul.f32 %v1825, %v1001
    %v1827 = vmul.f32 %v1825, %v1002
    %v1828 = vmul.f32 %v1825, %v1003
    %v1829 = vmul.f32 %v1825, %v1004
    %v1830 = vmul.f32 %v1825, %v1005
    %v1831 = vmul.f32 %v1825, %v1006
    %v1832 = vmul.f32 %v1825, %v1007
    %v1833 = vmul.f32 %v1825, %v1008
    %v1834 = vadd.f32 %v1813, %v1826
    %v1835 = vadd.f32 %v1814, %v1827
    %v1836 = vadd.f32 %v1815, %v1828
    %v1837 = vadd.f32 %v1816, %v1829
    %v1838 = vadd.f32 %v1817, %v1830
    %v1839 = vadd.f32 %v1818, %v1831
    %v1840 = vadd.f32 %v1819, %v1832
    %v1841 = vadd.f32 %v1820, %v1833
    %1842 = vrot.lane.b32.xlu0 %v1001, 96
    %v1843 = vpop.permute.xlu0 %1842
    %1844 = vrot.lane.b32.xlu0 %v1002, 96
    %v1845 = vpop.permute.xlu0 %1844
    %1846 = vrot.lane.b32.xlu0 %v1003, 96
    %v1847 = vpop.permute.xlu0 %1846
    %1848 = vrot.lane.b32.xlu0 %v1004, 96
    %v1849 = vpop.permute.xlu0 %1848
    %1850 = vrot.lane.b32.xlu0 %v1005, 96
    %v1851 = vpop.permute.xlu0 %1850
    %1852 = vrot.lane.b32.xlu0 %v1006, 96
    %v1853 = vpop.permute.xlu0 %1852
    %1854 = vrot.lane.b32.xlu0 %v1007, 96
    %v1855 = vpop.permute.xlu0 %1854
    %1856 = vrot.lane.b32.xlu0 %v1008, 96
    %v1857 = vpop.permute.xlu0 %1856
    %v1866 = vld [vmem:[%s5 + $0x11] sm:$0x1]
    %v1867 = vlaneseq
    %v1868 = vshrl.u32 %v1867, 7
    %v1869 = vsub.s32 0, %v1868
    %v1870 = vrot.slane %v1866, %v1869
    %v1871 = vmul.f32 %v1870, %v1843
    %v1872 = vmul.f32 %v1870, %v1845
    %v1873 = vmul.f32 %v1870, %v1847
    %v1874 = vmul.f32 %v1870, %v1849
    %v1875 = vmul.f32 %v1870, %v1851
    %v1876 = vmul.f32 %v1870, %v1853
    %v1877 = vmul.f32 %v1870, %v1855
    %v1878 = vmul.f32 %v1870, %v1857
    %v1879 = vadd.f32 %v1834, %v1871
    %v1880 = vadd.f32 %v1835, %v1872
    %v1881 = vadd.f32 %v1836, %v1873
    %v1882 = vadd.f32 %v1837, %v1874
    %v1883 = vadd.f32 %v1838, %v1875
    %v1884 = vadd.f32 %v1839, %v1876
    %v1885 = vadd.f32 %v1840, %v1877
    %v1886 = vadd.f32 %v1841, %v1878
    %1887 = vrot.lane.b32.xlu0 %v1001, 64
    %v1888 = vpop.permute.xlu0 %1887
    %1889 = vrot.lane.b32.xlu0 %v1002, 64
    %v1890 = vpop.permute.xlu0 %1889
    %1891 = vrot.lane.b32.xlu0 %v1003, 64
    %v1892 = vpop.permute.xlu0 %1891
    %1893 = vrot.lane.b32.xlu0 %v1004, 64
    %v1894 = vpop.permute.xlu0 %1893
    %1895 = vrot.lane.b32.xlu0 %v1005, 64
    %v1896 = vpop.permute.xlu0 %1895
    %1897 = vrot.lane.b32.xlu0 %v1006, 64
    %v1898 = vpop.permute.xlu0 %1897
    %1899 = vrot.lane.b32.xlu0 %v1007, 64
    %v1900 = vpop.permute.xlu0 %1899
    %1901 = vrot.lane.b32.xlu0 %v1008, 64
    %v1902 = vpop.permute.xlu0 %1901
    %v1911 = vld [vmem:[%s5 + $0x12] sm:$0x1]
    %v1912 = vlaneseq
    %v1913 = vshrl.u32 %v1912, 7
    %v1914 = vsub.s32 0, %v1913
    %v1915 = vrot.slane %v1911, %v1914
    %v1916 = vmul.f32 %v1915, %v1888
    %v1917 = vmul.f32 %v1915, %v1890
    %v1918 = vmul.f32 %v1915, %v1892
    %v1919 = vmul.f32 %v1915, %v1894
    %v1920 = vmul.f32 %v1915, %v1896
    %v1921 = vmul.f32 %v1915, %v1898
    %v1922 = vmul.f32 %v1915, %v1900
    %v1923 = vmul.f32 %v1915, %v1902
    %v1924 = vadd.f32 %v1879, %v1916
    %v1925 = vadd.f32 %v1880, %v1917
    %v1926 = vadd.f32 %v1881, %v1918
    %v1927 = vadd.f32 %v1882, %v1919
    %v1928 = vadd.f32 %v1883, %v1920
    %v1929 = vadd.f32 %v1884, %v1921
    %v1930 = vadd.f32 %v1885, %v1922
    %v1931 = vadd.f32 %v1886, %v1923
    %1932 = vrot.lane.b32.xlu0 %v1001, 32
    %v1933 = vpop.permute.xlu0 %1932
    %1934 = vrot.lane.b32.xlu0 %v1002, 32
    %v1935 = vpop.permute.xlu0 %1934
    %1936 = vrot.lane.b32.xlu0 %v1003, 32
    %v1937 = vpop.permute.xlu0 %1936
    %1938 = vrot.lane.b32.xlu0 %v1004, 32
    %v1939 = vpop.permute.xlu0 %1938
    %1940 = vrot.lane.b32.xlu0 %v1005, 32
    %v1941 = vpop.permute.xlu0 %1940
    %1942 = vrot.lane.b32.xlu0 %v1006, 32
    %v1943 = vpop.permute.xlu0 %1942
    %1944 = vrot.lane.b32.xlu0 %v1007, 32
    %v1945 = vpop.permute.xlu0 %1944
    %1946 = vrot.lane.b32.xlu0 %v1008, 32
    %v1947 = vpop.permute.xlu0 %1946
    %v1956 = vld [vmem:[%s5 + $0x13] sm:$0x1]
    %v1957 = vlaneseq
    %v1958 = vshrl.u32 %v1957, 7
    %v1959 = vsub.s32 0, %v1958
    %v1960 = vrot.slane %v1956, %v1959
    %v1961 = vmul.f32 %v1960, %v1933
    %v1962 = vmul.f32 %v1960, %v1935
    %v1963 = vmul.f32 %v1960, %v1937
    %v1964 = vmul.f32 %v1960, %v1939
    %v1965 = vmul.f32 %v1960, %v1941
    %v1966 = vmul.f32 %v1960, %v1943
    %v1967 = vmul.f32 %v1960, %v1945
    %v1968 = vmul.f32 %v1960, %v1947
    %v1969 = vadd.f32 %v1924, %v1961
    %v1970 = vadd.f32 %v1925, %v1962
    %v1971 = vadd.f32 %v1926, %v1963
    %v1972 = vadd.f32 %v1927, %v1964
    %v1973 = vadd.f32 %v1928, %v1965
    %v1974 = vadd.f32 %v1929, %v1966
    %v1975 = vadd.f32 %v1930, %v1967
    %v1976 = vadd.f32 %v1931, %v1968
    %1977 = vrot.lane.b32.xlu0 %v1001, 126
    %v1978 = vpop.permute.xlu0 %1977
    %1979 = vrot.lane.b32.xlu0 %v1002, 126
    %v1980 = vpop.permute.xlu0 %1979
    %1981 = vrot.lane.b32.xlu0 %v1003, 126
    %v1982 = vpop.permute.xlu0 %1981
    %1983 = vrot.lane.b32.xlu0 %v1004, 126
    %v1984 = vpop.permute.xlu0 %1983
    %1985 = vrot.lane.b32.xlu0 %v1005, 126
    %v1986 = vpop.permute.xlu0 %1985
    %1987 = vrot.lane.b32.xlu0 %v1006, 126
    %v1988 = vpop.permute.xlu0 %1987
    %1989 = vrot.lane.b32.xlu0 %v1007, 126
    %v1990 = vpop.permute.xlu0 %1989
    %1991 = vrot.lane.b32.xlu0 %v1008, 126
    %v1992 = vpop.permute.xlu0 %1991
    %v2001 = vmul.f32 %v1978, %v1026
    %v2002 = vmul.f32 %v1980, %v1026
    %v2003 = vmul.f32 %v1982, %v1026
    %v2004 = vmul.f32 %v1984, %v1026
    %v2005 = vmul.f32 %v1986, %v1026
    %v2006 = vmul.f32 %v1988, %v1026
    %v2007 = vmul.f32 %v1990, %v1026
    %v2008 = vmul.f32 %v1992, %v1026
    %v2009 = vld [vmem:[%s5 + $0x14] sm:$0x1]
    %v2010 = vlaneseq
    %v2011 = vshrl.u32 %v2010, 7
    %v2012 = vsub.s32 0, %v2011
    %v2013 = vrot.slane %v2009, %v2012
    %v2014 = vmul.f32 %v2013, %v2001
    %v2015 = vmul.f32 %v2013, %v2002
    %v2016 = vmul.f32 %v2013, %v2003
    %v2017 = vmul.f32 %v2013, %v2004
    %v2018 = vmul.f32 %v2013, %v2005
    %v2019 = vmul.f32 %v2013, %v2006
    %v2020 = vmul.f32 %v2013, %v2007
    %v2021 = vmul.f32 %v2013, %v2008
    %v2022 = vadd.f32 %v1969, %v2014
    %v2023 = vadd.f32 %v1970, %v2015
    %v2024 = vadd.f32 %v1971, %v2016
    %v2025 = vadd.f32 %v1972, %v2017
    %v2026 = vadd.f32 %v1973, %v2018
    %v2027 = vadd.f32 %v1974, %v2019
    %v2028 = vadd.f32 %v1975, %v2020
    %v2029 = vadd.f32 %v1976, %v2021
    %2038 = vrot.lane.b32.xlu0 %v2001, 96
    %v2039 = vpop.permute.xlu0 %2038
    %2040 = vrot.lane.b32.xlu0 %v2002, 96
    %v2041 = vpop.permute.xlu0 %2040
    %2042 = vrot.lane.b32.xlu0 %v2003, 96
    %v2043 = vpop.permute.xlu0 %2042
    %2044 = vrot.lane.b32.xlu0 %v2004, 96
    %v2045 = vpop.permute.xlu0 %2044
    %2046 = vrot.lane.b32.xlu0 %v2005, 96
    %v2047 = vpop.permute.xlu0 %2046
    %2048 = vrot.lane.b32.xlu0 %v2006, 96
    %v2049 = vpop.permute.xlu0 %2048
    %2050 = vrot.lane.b32.xlu0 %v2007, 96
    %v2051 = vpop.permute.xlu0 %2050
    %2052 = vrot.lane.b32.xlu0 %v2008, 96
    %v2053 = vpop.permute.xlu0 %2052
    %v2062 = vld [vmem:[%s5 + $0x15] sm:$0x1]
    %v2063 = vlaneseq
    %v2064 = vshrl.u32 %v2063, 7
    %v2065 = vsub.s32 0, %v2064
    %v2066 = vrot.slane %v2062, %v2065
    %v2067 = vmul.f32 %v2066, %v2039
    %v2068 = vmul.f32 %v2066, %v2041
    %v2069 = vmul.f32 %v2066, %v2043
    %v2070 = vmul.f32 %v2066, %v2045
    %v2071 = vmul.f32 %v2066, %v2047
    %v2072 = vmul.f32 %v2066, %v2049
    %v2073 = vmul.f32 %v2066, %v2051
    %v2074 = vmul.f32 %v2066, %v2053
    %v2075 = vadd.f32 %v2022, %v2067
    %v2076 = vadd.f32 %v2023, %v2068
    %v2077 = vadd.f32 %v2024, %v2069
    %v2078 = vadd.f32 %v2025, %v2070
    %v2079 = vadd.f32 %v2026, %v2071
    %v2080 = vadd.f32 %v2027, %v2072
    %v2081 = vadd.f32 %v2028, %v2073
    %v2082 = vadd.f32 %v2029, %v2074
    %2083 = vrot.lane.b32.xlu0 %v2001, 64
    %v2084 = vpop.permute.xlu0 %2083
    %2085 = vrot.lane.b32.xlu0 %v2002, 64
    %v2086 = vpop.permute.xlu0 %2085
    %2087 = vrot.lane.b32.xlu0 %v2003, 64
    %v2088 = vpop.permute.xlu0 %2087
    %2089 = vrot.lane.b32.xlu0 %v2004, 64
    %v2090 = vpop.permute.xlu0 %2089
    %2091 = vrot.lane.b32.xlu0 %v2005, 64
    %v2092 = vpop.permute.xlu0 %2091
    %2093 = vrot.lane.b32.xlu0 %v2006, 64
    %v2094 = vpop.permute.xlu0 %2093
    %2095 = vrot.lane.b32.xlu0 %v2007, 64
    %v2096 = vpop.permute.xlu0 %2095
    %2097 = vrot.lane.b32.xlu0 %v2008, 64
    %v2098 = vpop.permute.xlu0 %2097
    %v2107 = vld [vmem:[%s5 + $0x16] sm:$0x1]
    %v2108 = vlaneseq
    %v2109 = vshrl.u32 %v2108, 7
    %v2110 = vsub.s32 0, %v2109
    %v2111 = vrot.slane %v2107, %v2110
    %v2112 = vmul.f32 %v2111, %v2084
    %v2113 = vmul.f32 %v2111, %v2086
    %v2114 = vmul.f32 %v2111, %v2088
    %v2115 = vmul.f32 %v2111, %v2090
    %v2116 = vmul.f32 %v2111, %v2092
    %v2117 = vmul.f32 %v2111, %v2094
    %v2118 = vmul.f32 %v2111, %v2096
    %v2119 = vmul.f32 %v2111, %v2098
    %v2120 = vadd.f32 %v2075, %v2112
    %v2121 = vadd.f32 %v2076, %v2113
    %v2122 = vadd.f32 %v2077, %v2114
    %v2123 = vadd.f32 %v2078, %v2115
    %v2124 = vadd.f32 %v2079, %v2116
    %v2125 = vadd.f32 %v2080, %v2117
    %v2126 = vadd.f32 %v2081, %v2118
    %v2127 = vadd.f32 %v2082, %v2119
    %2128 = vrot.lane.b32.xlu0 %v2001, 32
    %v2129 = vpop.permute.xlu0 %2128
    %2130 = vrot.lane.b32.xlu0 %v2002, 32
    %v2131 = vpop.permute.xlu0 %2130
    %2132 = vrot.lane.b32.xlu0 %v2003, 32
    %v2133 = vpop.permute.xlu0 %2132
    %2134 = vrot.lane.b32.xlu0 %v2004, 32
    %v2135 = vpop.permute.xlu0 %2134
    %2136 = vrot.lane.b32.xlu0 %v2005, 32
    %v2137 = vpop.permute.xlu0 %2136
    %2138 = vrot.lane.b32.xlu0 %v2006, 32
    %v2139 = vpop.permute.xlu0 %2138
    %2140 = vrot.lane.b32.xlu0 %v2007, 32
    %v2141 = vpop.permute.xlu0 %2140
    %2142 = vrot.lane.b32.xlu0 %v2008, 32
    %v2143 = vpop.permute.xlu0 %2142
    %v2152 = vld [vmem:[%s5 + $0x17] sm:$0x1]
    %v2153 = vlaneseq
    %v2154 = vshrl.u32 %v2153, 7
    %v2155 = vsub.s32 0, %v2154
    %v2156 = vrot.slane %v2152, %v2155
    %v2157 = vmul.f32 %v2156, %v2129
    %v2158 = vmul.f32 %v2156, %v2131
    %v2159 = vmul.f32 %v2156, %v2133
    %v2160 = vmul.f32 %v2156, %v2135
    %v2161 = vmul.f32 %v2156, %v2137
    %v2162 = vmul.f32 %v2156, %v2139
    %v2163 = vmul.f32 %v2156, %v2141
    %v2164 = vmul.f32 %v2156, %v2143
    %v2165 = vadd.f32 %v2120, %v2157
    %v2166 = vadd.f32 %v2121, %v2158
    %v2167 = vadd.f32 %v2122, %v2159
    %v2168 = vadd.f32 %v2123, %v2160
    %v2169 = vadd.f32 %v2124, %v2161
    %v2170 = vadd.f32 %v2125, %v2162
    %v2171 = vadd.f32 %v2126, %v2163
    %v2172 = vadd.f32 %v2127, %v2164
    %vm2173 = vcmask 1045504
    %v2174 = vrot.slane %v1001, 2
    %v2175 = vrot.slane %v1002, 2
    %v2176 = vsel %vm2173, %v2174, %v2175
    %v2177 = vrot.slane %v1003, 2
    %v2178 = vsel %vm2173, %v2175, %v2177
    %v2179 = vrot.slane %v1004, 2
    %v2180 = vsel %vm2173, %v2177, %v2179
    %v2181 = vrot.slane %v1005, 2
    %v2182 = vsel %vm2173, %v2179, %v2181
    %v2183 = vrot.slane %v1006, 2
    %v2184 = vsel %vm2173, %v2181, %v2183
    %v2185 = vrot.slane %v1007, 2
    %v2186 = vsel %vm2173, %v2183, %v2185
    %v2187 = vrot.slane %v1008, 2
    %v2188 = vsel %vm2173, %v2185, %v2187
    %v2198 = vsel %vm2173, %v2187, %v2174
    %v2199 = vmul.f32 %v2176, %v1017
    %v2200 = vmul.f32 %v2178, %v1018
    %v2201 = vmul.f32 %v2180, %v1019
    %v2202 = vmul.f32 %v2182, %v1020
    %v2203 = vmul.f32 %v2184, %v1021
    %v2204 = vmul.f32 %v2186, %v1022
    %v2205 = vmul.f32 %v2188, %v1023
    %v2206 = vmul.f32 %v2198, %v1024
    %2215 = vrot.lane.b32.xlu0 %v2199, 2
    %v2216 = vpop.permute.xlu0 %2215
    %2217 = vrot.lane.b32.xlu0 %v2200, 2
    %v2218 = vpop.permute.xlu0 %2217
    %2219 = vrot.lane.b32.xlu0 %v2201, 2
    %v2220 = vpop.permute.xlu0 %2219
    %2221 = vrot.lane.b32.xlu0 %v2202, 2
    %v2222 = vpop.permute.xlu0 %2221
    %2223 = vrot.lane.b32.xlu0 %v2203, 2
    %v2224 = vpop.permute.xlu0 %2223
    %2225 = vrot.lane.b32.xlu0 %v2204, 2
    %v2226 = vpop.permute.xlu0 %2225
    %2227 = vrot.lane.b32.xlu0 %v2205, 2
    %v2228 = vpop.permute.xlu0 %2227
    %2229 = vrot.lane.b32.xlu0 %v2206, 2
    %v2230 = vpop.permute.xlu0 %2229
    %v2239 = vmul.f32 %v2216, %v226
    %v2240 = vmul.f32 %v2218, %v226
    %v2241 = vmul.f32 %v2220, %v226
    %v2242 = vmul.f32 %v2222, %v226
    %v2243 = vmul.f32 %v2224, %v226
    %v2244 = vmul.f32 %v2226, %v226
    %v2245 = vmul.f32 %v2228, %v226
    %v2246 = vmul.f32 %v2230, %v226
    %v2247 = vld [vmem:[%s5 + $0x18] sm:$0x1]
    %v2248 = vlaneseq
    %v2249 = vshrl.u32 %v2248, 7
    %v2250 = vsub.s32 0, %v2249
    %v2251 = vrot.slane %v2247, %v2250
    %v2252 = vmul.f32 %v2251, %v2239
    %v2253 = vmul.f32 %v2251, %v2240
    %v2254 = vmul.f32 %v2251, %v2241
    %v2255 = vmul.f32 %v2251, %v2242
    %v2256 = vmul.f32 %v2251, %v2243
    %v2257 = vmul.f32 %v2251, %v2244
    %v2258 = vmul.f32 %v2251, %v2245
    %v2259 = vmul.f32 %v2251, %v2246
    %v2260 = vadd.f32 %v2165, %v2252
    %v2261 = vadd.f32 %v2166, %v2253
    %v2262 = vadd.f32 %v2167, %v2254
    %v2263 = vadd.f32 %v2168, %v2255
    %v2264 = vadd.f32 %v2169, %v2256
    %v2265 = vadd.f32 %v2170, %v2257
    %v2266 = vadd.f32 %v2171, %v2258
    %v2267 = vadd.f32 %v2172, %v2259
    %2276 = vrot.lane.b32.xlu0 %v2239, 96
    %v2277 = vpop.permute.xlu0 %2276
    %2278 = vrot.lane.b32.xlu0 %v2240, 96
    %v2279 = vpop.permute.xlu0 %2278
    %2280 = vrot.lane.b32.xlu0 %v2241, 96
    %v2281 = vpop.permute.xlu0 %2280
    %2282 = vrot.lane.b32.xlu0 %v2242, 96
    %v2283 = vpop.permute.xlu0 %2282
    %2284 = vrot.lane.b32.xlu0 %v2243, 96
    %v2285 = vpop.permute.xlu0 %2284
    %2286 = vrot.lane.b32.xlu0 %v2244, 96
    %v2287 = vpop.permute.xlu0 %2286
    %2288 = vrot.lane.b32.xlu0 %v2245, 96
    %v2289 = vpop.permute.xlu0 %2288
    %2290 = vrot.lane.b32.xlu0 %v2246, 96
    %v2291 = vpop.permute.xlu0 %2290
    %v2300 = vld [vmem:[%s5 + $0x19] sm:$0x1]
    %v2301 = vlaneseq
    %v2302 = vshrl.u32 %v2301, 7
    %v2303 = vsub.s32 0, %v2302
    %v2304 = vrot.slane %v2300, %v2303
    %v2305 = vmul.f32 %v2304, %v2277
    %v2306 = vmul.f32 %v2304, %v2279
    %v2307 = vmul.f32 %v2304, %v2281
    %v2308 = vmul.f32 %v2304, %v2283
    %v2309 = vmul.f32 %v2304, %v2285
    %v2310 = vmul.f32 %v2304, %v2287
    %v2311 = vmul.f32 %v2304, %v2289
    %v2312 = vmul.f32 %v2304, %v2291
    %v2313 = vadd.f32 %v2260, %v2305
    %v2314 = vadd.f32 %v2261, %v2306
    %v2315 = vadd.f32 %v2262, %v2307
    %v2316 = vadd.f32 %v2263, %v2308
    %v2317 = vadd.f32 %v2264, %v2309
    %v2318 = vadd.f32 %v2265, %v2310
    %v2319 = vadd.f32 %v2266, %v2311
    %v2320 = vadd.f32 %v2267, %v2312
    %2321 = vrot.lane.b32.xlu0 %v2239, 64
    %v2322 = vpop.permute.xlu0 %2321
    %2323 = vrot.lane.b32.xlu0 %v2240, 64
    %v2324 = vpop.permute.xlu0 %2323
    %2325 = vrot.lane.b32.xlu0 %v2241, 64
    %v2326 = vpop.permute.xlu0 %2325
    %2327 = vrot.lane.b32.xlu0 %v2242, 64
    %v2328 = vpop.permute.xlu0 %2327
    %2329 = vrot.lane.b32.xlu0 %v2243, 64
    %v2330 = vpop.permute.xlu0 %2329
    %2331 = vrot.lane.b32.xlu0 %v2244, 64
    %v2332 = vpop.permute.xlu0 %2331
    %2333 = vrot.lane.b32.xlu0 %v2245, 64
    %v2334 = vpop.permute.xlu0 %2333
    %2335 = vrot.lane.b32.xlu0 %v2246, 64
    %v2336 = vpop.permute.xlu0 %2335
    %v2345 = vld [vmem:[%s5 + $0x1a] sm:$0x1]
    %v2346 = vlaneseq
    %v2347 = vshrl.u32 %v2346, 7
    %v2348 = vsub.s32 0, %v2347
    %v2349 = vrot.slane %v2345, %v2348
    %v2350 = vmul.f32 %v2349, %v2322
    %v2351 = vmul.f32 %v2349, %v2324
    %v2352 = vmul.f32 %v2349, %v2326
    %v2353 = vmul.f32 %v2349, %v2328
    %v2354 = vmul.f32 %v2349, %v2330
    %v2355 = vmul.f32 %v2349, %v2332
    %v2356 = vmul.f32 %v2349, %v2334
    %v2357 = vmul.f32 %v2349, %v2336
    %v2358 = vadd.f32 %v2313, %v2350
    %v2359 = vadd.f32 %v2314, %v2351
    %v2360 = vadd.f32 %v2315, %v2352
    %v2361 = vadd.f32 %v2316, %v2353
    %v2362 = vadd.f32 %v2317, %v2354
    %v2363 = vadd.f32 %v2318, %v2355
    %v2364 = vadd.f32 %v2319, %v2356
    %v2365 = vadd.f32 %v2320, %v2357
    %2366 = vrot.lane.b32.xlu0 %v2239, 32
    %v2367 = vpop.permute.xlu0 %2366
    %2368 = vrot.lane.b32.xlu0 %v2240, 32
    %v2369 = vpop.permute.xlu0 %2368
    %2370 = vrot.lane.b32.xlu0 %v2241, 32
    %v2371 = vpop.permute.xlu0 %2370
    %2372 = vrot.lane.b32.xlu0 %v2242, 32
    %v2373 = vpop.permute.xlu0 %2372
    %2374 = vrot.lane.b32.xlu0 %v2243, 32
    %v2375 = vpop.permute.xlu0 %2374
    %2376 = vrot.lane.b32.xlu0 %v2244, 32
    %v2377 = vpop.permute.xlu0 %2376
    %2378 = vrot.lane.b32.xlu0 %v2245, 32
    %v2379 = vpop.permute.xlu0 %2378
    %2380 = vrot.lane.b32.xlu0 %v2246, 32
    %v2381 = vpop.permute.xlu0 %2380
    %v2390 = vld [vmem:[%s5 + $0x1b] sm:$0x1]
    %v2391 = vlaneseq
    %v2392 = vshrl.u32 %v2391, 7
    %v2393 = vsub.s32 0, %v2392
    %v2394 = vrot.slane %v2390, %v2393
    %v2395 = vmul.f32 %v2394, %v2367
    %v2396 = vmul.f32 %v2394, %v2369
    %v2397 = vmul.f32 %v2394, %v2371
    %v2398 = vmul.f32 %v2394, %v2373
    %v2399 = vmul.f32 %v2394, %v2375
    %v2400 = vmul.f32 %v2394, %v2377
    %v2401 = vmul.f32 %v2394, %v2379
    %v2402 = vmul.f32 %v2394, %v2381
    %v2403 = vadd.f32 %v2358, %v2395
    %v2404 = vadd.f32 %v2359, %v2396
    %v2405 = vadd.f32 %v2360, %v2397
    %v2406 = vadd.f32 %v2361, %v2398
    %v2407 = vadd.f32 %v2362, %v2399
    %v2408 = vadd.f32 %v2363, %v2400
    %v2409 = vadd.f32 %v2364, %v2401
    %v2410 = vadd.f32 %v2365, %v2402
    %v2411 = vld [vmem:[%s5 + $0x1c] sm:$0x1]
    %v2412 = vlaneseq
    %v2413 = vshrl.u32 %v2412, 7
    %v2414 = vsub.s32 0, %v2413
    %v2415 = vrot.slane %v2411, %v2414
    %v2416 = vmul.f32 %v2415, %v2199
    %v2417 = vmul.f32 %v2415, %v2200
    %v2418 = vmul.f32 %v2415, %v2201
    %v2419 = vmul.f32 %v2415, %v2202
    %v2420 = vmul.f32 %v2415, %v2203
    %v2421 = vmul.f32 %v2415, %v2204
    %v2422 = vmul.f32 %v2415, %v2205
    %v2423 = vmul.f32 %v2415, %v2206
    %v2424 = vadd.f32 %v2403, %v2416
    %v2425 = vadd.f32 %v2404, %v2417
    %v2426 = vadd.f32 %v2405, %v2418
    %v2427 = vadd.f32 %v2406, %v2419
    %v2428 = vadd.f32 %v2407, %v2420
    %v2429 = vadd.f32 %v2408, %v2421
    %v2430 = vadd.f32 %v2409, %v2422
    %v2431 = vadd.f32 %v2410, %v2423
    %2432 = vrot.lane.b32.xlu0 %v2199, 96
    %v2433 = vpop.permute.xlu0 %2432
    %2434 = vrot.lane.b32.xlu0 %v2200, 96
    %v2435 = vpop.permute.xlu0 %2434
    %2436 = vrot.lane.b32.xlu0 %v2201, 96
    %v2437 = vpop.permute.xlu0 %2436
    %2438 = vrot.lane.b32.xlu0 %v2202, 96
    %v2439 = vpop.permute.xlu0 %2438
    %2440 = vrot.lane.b32.xlu0 %v2203, 96
    %v2441 = vpop.permute.xlu0 %2440
    %2442 = vrot.lane.b32.xlu0 %v2204, 96
    %v2443 = vpop.permute.xlu0 %2442
    %2444 = vrot.lane.b32.xlu0 %v2205, 96
    %v2445 = vpop.permute.xlu0 %2444
    %2446 = vrot.lane.b32.xlu0 %v2206, 96
    %v2447 = vpop.permute.xlu0 %2446
    %v2456 = vld [vmem:[%s5 + $0x1d] sm:$0x1]
    %v2457 = vlaneseq
    %v2458 = vshrl.u32 %v2457, 7
    %v2459 = vsub.s32 0, %v2458
    %v2460 = vrot.slane %v2456, %v2459
    %v2461 = vmul.f32 %v2460, %v2433
    %v2462 = vmul.f32 %v2460, %v2435
    %v2463 = vmul.f32 %v2460, %v2437
    %v2464 = vmul.f32 %v2460, %v2439
    %v2465 = vmul.f32 %v2460, %v2441
    %v2466 = vmul.f32 %v2460, %v2443
    %v2467 = vmul.f32 %v2460, %v2445
    %v2468 = vmul.f32 %v2460, %v2447
    %v2469 = vadd.f32 %v2424, %v2461
    %v2470 = vadd.f32 %v2425, %v2462
    %v2471 = vadd.f32 %v2426, %v2463
    %v2472 = vadd.f32 %v2427, %v2464
    %v2473 = vadd.f32 %v2428, %v2465
    %v2474 = vadd.f32 %v2429, %v2466
    %v2475 = vadd.f32 %v2430, %v2467
    %v2476 = vadd.f32 %v2431, %v2468
    %2477 = vrot.lane.b32.xlu0 %v2199, 64
    %v2478 = vpop.permute.xlu0 %2477
    %2479 = vrot.lane.b32.xlu0 %v2200, 64
    %v2480 = vpop.permute.xlu0 %2479
    %2481 = vrot.lane.b32.xlu0 %v2201, 64
    %v2482 = vpop.permute.xlu0 %2481
    %2483 = vrot.lane.b32.xlu0 %v2202, 64
    %v2484 = vpop.permute.xlu0 %2483
    %2485 = vrot.lane.b32.xlu0 %v2203, 64
    %v2486 = vpop.permute.xlu0 %2485
    %2487 = vrot.lane.b32.xlu0 %v2204, 64
    %v2488 = vpop.permute.xlu0 %2487
    %2489 = vrot.lane.b32.xlu0 %v2205, 64
    %v2490 = vpop.permute.xlu0 %2489
    %2491 = vrot.lane.b32.xlu0 %v2206, 64
    %v2492 = vpop.permute.xlu0 %2491
    %v2501 = vld [vmem:[%s5 + $0x1e] sm:$0x1]
    %v2502 = vlaneseq
    %v2503 = vshrl.u32 %v2502, 7
    %v2504 = vsub.s32 0, %v2503
    %v2505 = vrot.slane %v2501, %v2504
    %v2506 = vmul.f32 %v2505, %v2478
    %v2507 = vmul.f32 %v2505, %v2480
    %v2508 = vmul.f32 %v2505, %v2482
    %v2509 = vmul.f32 %v2505, %v2484
    %v2510 = vmul.f32 %v2505, %v2486
    %v2511 = vmul.f32 %v2505, %v2488
    %v2512 = vmul.f32 %v2505, %v2490
    %v2513 = vmul.f32 %v2505, %v2492
    %v2514 = vadd.f32 %v2469, %v2506
    %v2515 = vadd.f32 %v2470, %v2507
    %v2516 = vadd.f32 %v2471, %v2508
    %v2517 = vadd.f32 %v2472, %v2509
    %v2518 = vadd.f32 %v2473, %v2510
    %v2519 = vadd.f32 %v2474, %v2511
    %v2520 = vadd.f32 %v2475, %v2512
    %v2521 = vadd.f32 %v2476, %v2513
    %2522 = vrot.lane.b32.xlu0 %v2199, 32
    %v2523 = vpop.permute.xlu0 %2522
    %2524 = vrot.lane.b32.xlu0 %v2200, 32
    %v2525 = vpop.permute.xlu0 %2524
    %2526 = vrot.lane.b32.xlu0 %v2201, 32
    %v2527 = vpop.permute.xlu0 %2526
    %2528 = vrot.lane.b32.xlu0 %v2202, 32
    %v2529 = vpop.permute.xlu0 %2528
    %2530 = vrot.lane.b32.xlu0 %v2203, 32
    %v2531 = vpop.permute.xlu0 %2530
    %2532 = vrot.lane.b32.xlu0 %v2204, 32
    %v2533 = vpop.permute.xlu0 %2532
    %2534 = vrot.lane.b32.xlu0 %v2205, 32
    %v2535 = vpop.permute.xlu0 %2534
    %2536 = vrot.lane.b32.xlu0 %v2206, 32
    %v2537 = vpop.permute.xlu0 %2536
    %v2546 = vld [vmem:[%s5 + $0x1f] sm:$0x1]
    %v2547 = vlaneseq
    %v2548 = vshrl.u32 %v2547, 7
    %v2549 = vsub.s32 0, %v2548
    %v2550 = vrot.slane %v2546, %v2549
    %v2551 = vmul.f32 %v2550, %v2523
    %v2552 = vmul.f32 %v2550, %v2525
    %v2553 = vmul.f32 %v2550, %v2527
    %v2554 = vmul.f32 %v2550, %v2529
    %v2555 = vmul.f32 %v2550, %v2531
    %v2556 = vmul.f32 %v2550, %v2533
    %v2557 = vmul.f32 %v2550, %v2535
    %v2558 = vmul.f32 %v2550, %v2537
    %v2559 = vadd.f32 %v2514, %v2551
    %v2560 = vadd.f32 %v2515, %v2552
    %v2561 = vadd.f32 %v2516, %v2553
    %v2562 = vadd.f32 %v2517, %v2554
    %v2563 = vadd.f32 %v2518, %v2555
    %v2564 = vadd.f32 %v2519, %v2556
    %v2565 = vadd.f32 %v2520, %v2557
    %v2566 = vadd.f32 %v2521, %v2558
    %2567 = vrot.lane.b32.xlu0 %v2199, 126
    %v2568 = vpop.permute.xlu0 %2567
    %2569 = vrot.lane.b32.xlu0 %v2200, 126
    %v2570 = vpop.permute.xlu0 %2569
    %2571 = vrot.lane.b32.xlu0 %v2201, 126
    %v2572 = vpop.permute.xlu0 %2571
    %2573 = vrot.lane.b32.xlu0 %v2202, 126
    %v2574 = vpop.permute.xlu0 %2573
    %2575 = vrot.lane.b32.xlu0 %v2203, 126
    %v2576 = vpop.permute.xlu0 %2575
    %2577 = vrot.lane.b32.xlu0 %v2204, 126
    %v2578 = vpop.permute.xlu0 %2577
    %2579 = vrot.lane.b32.xlu0 %v2205, 126
    %v2580 = vpop.permute.xlu0 %2579
    %2581 = vrot.lane.b32.xlu0 %v2206, 126
    %v2582 = vpop.permute.xlu0 %2581
    %v2591 = vmul.f32 %v2568, %v1026
    %v2592 = vmul.f32 %v2570, %v1026
    %v2593 = vmul.f32 %v2572, %v1026
    %v2594 = vmul.f32 %v2574, %v1026
    %v2595 = vmul.f32 %v2576, %v1026
    %v2596 = vmul.f32 %v2578, %v1026
    %v2597 = vmul.f32 %v2580, %v1026
    %v2598 = vmul.f32 %v2582, %v1026
    %v2599 = vld [vmem:[%s5 + $0x20] sm:$0x1]
    %v2600 = vlaneseq
    %v2601 = vshrl.u32 %v2600, 7
    %v2602 = vsub.s32 0, %v2601
    %v2603 = vrot.slane %v2599, %v2602
    %v2604 = vmul.f32 %v2603, %v2591
    %v2605 = vmul.f32 %v2603, %v2592
    %v2606 = vmul.f32 %v2603, %v2593
    %v2607 = vmul.f32 %v2603, %v2594
    %v2608 = vmul.f32 %v2603, %v2595
    %v2609 = vmul.f32 %v2603, %v2596
    %v2610 = vmul.f32 %v2603, %v2597
    %v2611 = vmul.f32 %v2603, %v2598
    %v2612 = vadd.f32 %v2559, %v2604
    %v2613 = vadd.f32 %v2560, %v2605
    %v2614 = vadd.f32 %v2561, %v2606
    %v2615 = vadd.f32 %v2562, %v2607
    %v2616 = vadd.f32 %v2563, %v2608
    %v2617 = vadd.f32 %v2564, %v2609
    %v2618 = vadd.f32 %v2565, %v2610
    %v2619 = vadd.f32 %v2566, %v2611
    %2628 = vrot.lane.b32.xlu0 %v2591, 96
    %v2629 = vpop.permute.xlu0 %2628
    %2630 = vrot.lane.b32.xlu0 %v2592, 96
    %v2631 = vpop.permute.xlu0 %2630
    %2632 = vrot.lane.b32.xlu0 %v2593, 96
    %v2633 = vpop.permute.xlu0 %2632
    %2634 = vrot.lane.b32.xlu0 %v2594, 96
    %v2635 = vpop.permute.xlu0 %2634
    %2636 = vrot.lane.b32.xlu0 %v2595, 96
    %v2637 = vpop.permute.xlu0 %2636
    %2638 = vrot.lane.b32.xlu0 %v2596, 96
    %v2639 = vpop.permute.xlu0 %2638
    %2640 = vrot.lane.b32.xlu0 %v2597, 96
    %v2641 = vpop.permute.xlu0 %2640
    %2642 = vrot.lane.b32.xlu0 %v2598, 96
    %v2643 = vpop.permute.xlu0 %2642
    %v2652 = vld [vmem:[%s5 + $0x21] sm:$0x1]
    %v2653 = vlaneseq
    %v2654 = vshrl.u32 %v2653, 7
    %v2655 = vsub.s32 0, %v2654
    %v2656 = vrot.slane %v2652, %v2655
    %v2657 = vmul.f32 %v2656, %v2629
    %v2658 = vmul.f32 %v2656, %v2631
    %v2659 = vmul.f32 %v2656, %v2633
    %v2660 = vmul.f32 %v2656, %v2635
    %v2661 = vmul.f32 %v2656, %v2637
    %v2662 = vmul.f32 %v2656, %v2639
    %v2663 = vmul.f32 %v2656, %v2641
    %v2664 = vmul.f32 %v2656, %v2643
    %v2665 = vadd.f32 %v2612, %v2657
    %v2666 = vadd.f32 %v2613, %v2658
    %v2667 = vadd.f32 %v2614, %v2659
    %v2668 = vadd.f32 %v2615, %v2660
    %v2669 = vadd.f32 %v2616, %v2661
    %v2670 = vadd.f32 %v2617, %v2662
    %v2671 = vadd.f32 %v2618, %v2663
    %v2672 = vadd.f32 %v2619, %v2664
    %2673 = vrot.lane.b32.xlu0 %v2591, 64
    %v2674 = vpop.permute.xlu0 %2673
    %2675 = vrot.lane.b32.xlu0 %v2592, 64
    %v2676 = vpop.permute.xlu0 %2675
    %2677 = vrot.lane.b32.xlu0 %v2593, 64
    %v2678 = vpop.permute.xlu0 %2677
    %2679 = vrot.lane.b32.xlu0 %v2594, 64
    %v2680 = vpop.permute.xlu0 %2679
    %2681 = vrot.lane.b32.xlu0 %v2595, 64
    %v2682 = vpop.permute.xlu0 %2681
    %2683 = vrot.lane.b32.xlu0 %v2596, 64
    %v2684 = vpop.permute.xlu0 %2683
    %2685 = vrot.lane.b32.xlu0 %v2597, 64
    %v2686 = vpop.permute.xlu0 %2685
    %2687 = vrot.lane.b32.xlu0 %v2598, 64
    %v2688 = vpop.permute.xlu0 %2687
    %v2697 = vld [vmem:[%s5 + $0x22] sm:$0x1]
    %v2698 = vlaneseq
    %v2699 = vshrl.u32 %v2698, 7
    %v2700 = vsub.s32 0, %v2699
    %v2701 = vrot.slane %v2697, %v2700
    %v2702 = vmul.f32 %v2701, %v2674
    %v2703 = vmul.f32 %v2701, %v2676
    %v2704 = vmul.f32 %v2701, %v2678
    %v2705 = vmul.f32 %v2701, %v2680
    %v2706 = vmul.f32 %v2701, %v2682
    %v2707 = vmul.f32 %v2701, %v2684
    %v2708 = vmul.f32 %v2701, %v2686
    %v2709 = vmul.f32 %v2701, %v2688
    %v2710 = vadd.f32 %v2665, %v2702
    %v2711 = vadd.f32 %v2666, %v2703
    %v2712 = vadd.f32 %v2667, %v2704
    %v2713 = vadd.f32 %v2668, %v2705
    %v2714 = vadd.f32 %v2669, %v2706
    %v2715 = vadd.f32 %v2670, %v2707
    %v2716 = vadd.f32 %v2671, %v2708
    %v2717 = vadd.f32 %v2672, %v2709
    %2718 = vrot.lane.b32.xlu0 %v2591, 32
    %v2719 = vpop.permute.xlu0 %2718
    %2720 = vrot.lane.b32.xlu0 %v2592, 32
    %v2721 = vpop.permute.xlu0 %2720
    %2722 = vrot.lane.b32.xlu0 %v2593, 32
    %v2723 = vpop.permute.xlu0 %2722
    %2724 = vrot.lane.b32.xlu0 %v2594, 32
    %v2725 = vpop.permute.xlu0 %2724
    %2726 = vrot.lane.b32.xlu0 %v2595, 32
    %v2727 = vpop.permute.xlu0 %2726
    %2728 = vrot.lane.b32.xlu0 %v2596, 32
    %v2729 = vpop.permute.xlu0 %2728
    %2730 = vrot.lane.b32.xlu0 %v2597, 32
    %v2731 = vpop.permute.xlu0 %2730
    %2732 = vrot.lane.b32.xlu0 %v2598, 32
    %v2733 = vpop.permute.xlu0 %2732
    %v2742 = vld [vmem:[%s5 + $0x23] sm:$0x1]
    %v2743 = vlaneseq
    %v2744 = vshrl.u32 %v2743, 7
    %v2745 = vsub.s32 0, %v2744
    %v2746 = vrot.slane %v2742, %v2745
    %v2747 = vmul.f32 %v2746, %v2719
    %v2748 = vmul.f32 %v2746, %v2721
    %v2749 = vmul.f32 %v2746, %v2723
    %v2750 = vmul.f32 %v2746, %v2725
    %v2751 = vmul.f32 %v2746, %v2727
    %v2752 = vmul.f32 %v2746, %v2729
    %v2753 = vmul.f32 %v2746, %v2731
    %v2754 = vmul.f32 %v2746, %v2733
    %v2755 = vadd.f32 %v2710, %v2747
    %v2756 = vadd.f32 %v2711, %v2748
    %v2757 = vadd.f32 %v2712, %v2749
    %v2758 = vadd.f32 %v2713, %v2750
    %v2759 = vadd.f32 %v2714, %v2751
    %v2760 = vadd.f32 %v2715, %v2752
    %v2761 = vadd.f32 %v2716, %v2753
    %v2762 = vadd.f32 %v2717, %v2754
    %v2763 = vld [vmem:[%s6] sm:$0x1]
    %v2765 = vlaneseq
    %v2766 = vshrl.u32 %v2765, 7
    %v2767 = vsub.s32 0, %v2766
    %v2768 = vrot.slane %v2763, %v2767
    %v2770 = vadd.f32 %v2755, %v2768
    %v2771 = vadd.f32 %v2756, %v2768
    %v2772 = vadd.f32 %v2757, %v2768
    %v2773 = vadd.f32 %v2758, %v2768
    %v2774 = vadd.f32 %v2759, %v2768
    %v2775 = vadd.f32 %v2760, %v2768
    %v2776 = vadd.f32 %v2761, %v2768
    %v2777 = vadd.f32 %v2762, %v2768
    %vm2778 = vcmp.lt.s32.totalorder %v189, 0
    %v2779 = vsub.s32 0, %v189
    %v2780 = vsel %vm2778, %v2779, %v189
    %v2781 = vshrl.u32 %v2780, 1
    %v2782 = vand.u32 %v2780, 1
    %v2783 = vsub.s32 0, %v2782
    %v2784 = vsel %vm2778, %v2783, %v2782
    %vm2785 = vcmp.lt.s32.totalorder %v190, 0
    %v2786 = vsub.s32 0, %v190
    %v2787 = vsel %vm2785, %v2786, %v190
    %v2788 = vshrl.u32 %v2787, 1
    %v2789 = vand.u32 %v2787, 1
    %v2790 = vsub.s32 0, %v2789
    %v2791 = vsel %vm2785, %v2790, %v2789
    %vm2792 = vcmp.lt.s32.totalorder %v191, 0
    %v2793 = vsub.s32 0, %v191
    %v2794 = vsel %vm2792, %v2793, %v191
    %v2795 = vshrl.u32 %v2794, 1
    %v2796 = vand.u32 %v2794, 1
    %v2797 = vsub.s32 0, %v2796
    %v2798 = vsel %vm2792, %v2797, %v2796
    %vm2799 = vcmp.lt.s32.totalorder %v192, 0
    %v2800 = vsub.s32 0, %v192
    %v2801 = vsel %vm2799, %v2800, %v192
    %v2802 = vshrl.u32 %v2801, 1
    %v2803 = vand.u32 %v2801, 1
    %v2804 = vsub.s32 0, %v2803
    %v2805 = vsel %vm2799, %v2804, %v2803
    %vm2806 = vcmp.lt.s32.totalorder %v193, 0
    %v2807 = vsub.s32 0, %v193
    %v2808 = vsel %vm2806, %v2807, %v193
    %v2809 = vshrl.u32 %v2808, 1
    %v2810 = vand.u32 %v2808, 1
    %v2811 = vsub.s32 0, %v2810
    %v2812 = vsel %vm2806, %v2811, %v2810
    %vm2813 = vcmp.lt.s32.totalorder %v194, 0
    %v2814 = vsub.s32 0, %v194
    %v2815 = vsel %vm2813, %v2814, %v194
    %v2816 = vshrl.u32 %v2815, 1
    %v2817 = vand.u32 %v2815, 1
    %v2818 = vsub.s32 0, %v2817
    %v2819 = vsel %vm2813, %v2818, %v2817
    %vm2820 = vcmp.lt.s32.totalorder %v195, 0
    %v2821 = vsub.s32 0, %v195
    %v2822 = vsel %vm2820, %v2821, %v195
    %v2823 = vshrl.u32 %v2822, 1
    %v2824 = vand.u32 %v2822, 1
    %v2825 = vsub.s32 0, %v2824
    %v2826 = vsel %vm2820, %v2825, %v2824
    %vm2827 = vcmp.lt.s32.totalorder %v196, 0
    %v2828 = vsub.s32 0, %v196
    %v2829 = vsel %vm2827, %v2828, %v196
    %v2830 = vshrl.u32 %v2829, 1
    %v2831 = vand.u32 %v2829, 1
    %v2832 = vsub.s32 0, %v2831
    %v2833 = vsel %vm2827, %v2832, %v2831
    %vm2834 = vcmp.ne.s32.totalorder %v2784, 0
    %vm2835 = vcmp.ne.s32.totalorder %v2791, 0
    %vm2836 = vcmp.ne.s32.totalorder %v2798, 0
    %vm2837 = vcmp.ne.s32.totalorder %v2805, 0
    %vm2838 = vcmp.ne.s32.totalorder %v2812, 0
    %vm2839 = vcmp.ne.s32.totalorder %v2819, 0
    %vm2840 = vcmp.ne.s32.totalorder %v2826, 0
    %vm2841 = vcmp.ne.s32.totalorder %v2833, 0
    %vm2842 = vcmp.lt.s32.totalorder %v2784, 0
    %vm2843 = vcmp.lt.s32.totalorder %v2791, 0
    %vm2844 = vcmp.lt.s32.totalorder %v2798, 0
    %vm2845 = vcmp.lt.s32.totalorder %v2805, 0
    %vm2846 = vcmp.lt.s32.totalorder %v2812, 0
    %vm2847 = vcmp.lt.s32.totalorder %v2819, 0
    %vm2848 = vcmp.lt.s32.totalorder %v2826, 0
    %vm2849 = vcmp.lt.s32.totalorder %v2833, 0
    %vm2850 = vmand %vm2842, %vm2834
    %vm2851 = vmand %vm2843, %vm2835
    %vm2852 = vmand %vm2844, %vm2836
    %vm2853 = vmand %vm2845, %vm2837
    %vm2854 = vmand %vm2846, %vm2838
    %vm2855 = vmand %vm2847, %vm2839
    %vm2856 = vmand %vm2848, %vm2840
    %vm2857 = vmand %vm2849, %vm2841
    %v2858 = vadd.s32 %v2784, 2
    %v2859 = vadd.s32 %v2791, 2
    %v2860 = vadd.s32 %v2798, 2
    %v2861 = vadd.s32 %v2805, 2
    %v2862 = vadd.s32 %v2812, 2
    %v2863 = vadd.s32 %v2819, 2
    %v2864 = vadd.s32 %v2826, 2
    %v2865 = vadd.s32 %v2833, 2
    %v2866 = vsel %vm2850, %v2858, %v2784
    %v2867 = vsel %vm2851, %v2859, %v2791
    %v2868 = vsel %vm2852, %v2860, %v2798
    %v2869 = vsel %vm2853, %v2861, %v2805
    %v2870 = vsel %vm2854, %v2862, %v2812
    %v2871 = vsel %vm2855, %v2863, %v2819
    %v2872 = vsel %vm2856, %v2864, %v2826
    %v2873 = vsel %vm2857, %v2865, %v2833
    %vm2874 = vcmp.eq.s32.totalorder %v2866, 0
    %vm2875 = vcmp.eq.s32.totalorder %v2867, 0
    %vm2876 = vcmp.eq.s32.totalorder %v2868, 0
    %vm2877 = vcmp.eq.s32.totalorder %v2869, 0
    %vm2878 = vcmp.eq.s32.totalorder %v2870, 0
    %vm2879 = vcmp.eq.s32.totalorder %v2871, 0
    %vm2880 = vcmp.eq.s32.totalorder %v2872, 0
    %vm2881 = vcmp.eq.s32.totalorder %v2873, 0
    %v2882 = vsel %vm2874, 1.0, 0.0
    %v2883 = vsel %vm2875, 1.0, 0.0
    %v2884 = vsel %vm2876, 1.0, 0.0
    %v2885 = vsel %vm2877, 1.0, 0.0
    %v2886 = vsel %vm2878, 1.0, 0.0
    %v2887 = vsel %vm2879, 1.0, 0.0
    %v2888 = vsel %vm2880, 1.0, 0.0
    %v2889 = vsel %vm2881, 1.0, 0.0
    %vm2890 = vcmp.lt.s32.totalorder %v208, 0
    %v2891 = vsub.s32 0, %v208
    %v2892 = vsel %vm2890, %v2891, %v208
    %v2893 = vshrl.u32 %v2892, 1
    %v2894 = vand.u32 %v2892, 1
    %v2895 = vsub.s32 0, %v2894
    %v2896 = vsel %vm2890, %v2895, %v2894
    %vm2897 = vcmp.ne.s32.totalorder %v2896, 0
    %vm2898 = vcmp.lt.s32.totalorder %v2896, 0
    %vm2899 = vmand %vm2898, %vm2897
    %v2900 = vadd.s32 %v2896, 2
    %v2901 = vsel %vm2899, %v2900, %v2896
    %vm2902 = vcmp.eq.s32.totalorder %v2901, 0
    %v2903 = vsel %vm2902, 1.0, 0.0
    %v2904 = vmul.f32 %v2770, %v2882
    %v2905 = vmul.f32 %v2771, %v2883
    %v2906 = vmul.f32 %v2772, %v2884
    %v2907 = vmul.f32 %v2773, %v2885
    %v2908 = vmul.f32 %v2774, %v2886
    %v2909 = vmul.f32 %v2775, %v2887
    %v2910 = vmul.f32 %v2776, %v2888
    %v2911 = vmul.f32 %v2777, %v2889
    %v2912 = vmul.f32 %v2904, %v2903
    %v2913 = vmul.f32 %v2905, %v2903
    %v2914 = vmul.f32 %v2906, %v2903
    %v2915 = vmul.f32 %v2907, %v2903
    %v2916 = vmul.f32 %v2908, %v2903
    %v2917 = vmul.f32 %v2909, %v2903
    %v2918 = vmul.f32 %v2910, %v2903
    %v2919 = vmul.f32 %v2911, %v2903
    %v2920 = vadd.f32 %v2912, %v2913
    %v2921 = vadd.f32 %v2920, %v2914
    %v2922 = vadd.f32 %v2921, %v2915
    %v2923 = vadd.f32 %v2922, %v2916
    %v2924 = vadd.f32 %v2923, %v2917
    %v2925 = vadd.f32 %v2924, %v2918
    %v2926 = vadd.f32 %v2925, %v2919
    %v2927 = vrot.slane %v2926, 4
    %v2928 = vadd.f32 %v2926, %v2927
    %v2929 = vrot.slane %v2928, 2
    %v2930 = vadd.f32 %v2928, %v2929
    %v2931 = vrot.slane %v2930, 1
    %v2932 = vadd.f32 %v2930, %v2931
    %v2933 = vmul.f32 %v2912, %v2912
    %v2934 = vmul.f32 %v2913, %v2913
    %v2935 = vmul.f32 %v2914, %v2914
    %v2936 = vmul.f32 %v2915, %v2915
    %v2937 = vmul.f32 %v2916, %v2916
    %v2938 = vmul.f32 %v2917, %v2917
    %v2939 = vmul.f32 %v2918, %v2918
    %v2940 = vmul.f32 %v2919, %v2919
    %v2941 = vadd.f32 %v2933, %v2934
    %v2942 = vadd.f32 %v2941, %v2935
    %v2943 = vadd.f32 %v2942, %v2936
    %v2944 = vadd.f32 %v2943, %v2937
    %v2945 = vadd.f32 %v2944, %v2938
    %v2946 = vadd.f32 %v2945, %v2939
    %v2947 = vadd.f32 %v2946, %v2940
    %v2948 = vrot.slane %v2947, 4
    %v2949 = vadd.f32 %v2947, %v2948
    %v2950 = vrot.slane %v2949, 2
    %v2951 = vadd.f32 %v2949, %v2950
    %v2952 = vrot.slane %v2951, 1
    %v2953 = vadd.f32 %v2951, %v2952
    %v2954 = vsel %vm775, %v2932, 0.0
    %2955 = vadd.xlane.f32.xlu0 %v2954
    %v2956 = vpop.xlane.xlu0 %2955
    %v2957 = vmul.f32 %v2956, 0.001953125
    %v2958 = vsel %vm775, %v2953, 0.0
    %2959 = vadd.xlane.f32.xlu0 %v2958
    %v2960 = vpop.xlane.xlu0 %2959
    %v2961 = vmul.f32 %v2960, 0.001953125
    %v2962 = vmul.f32 %v2957, %v2957
    %v2963 = vsub.f32 %v2961, %v2962
    %v2964 = vmax.f32 %v2963, 0.0
    %s2965 = sld [smem:[#allocation7]]
    %v2966 = vadd.f32 %v2964, 1e-05
    %v2967 = vrsqrt.pop %v2966
    %v2968 = vstv %s2965
    %v2969 = vmul.f32 %v2968, %v2967
    %s2970 = sld [smem:[#allocation8]]
    %v2971 = vmul.f32 %v2957, %v2969
    %v2972 = vstv %s2970
    %v2973 = vsub.f32 %v2972, %v2971
    %v2974 = vmul.f32 %v2969, %v796
    %v2975 = vadd.f32 %v2974, 0.0
    %v2976 = vmul.f32 %v2973, %v796
    %v2977 = vadd.f32 %v2976, 0.0
    %2979 = vrot.lane.b32.xlu0 %v2932, 96
    %v2980 = vpop.permute.xlu0 %2979
    %v2982 = vsel %vm775, %v2980, 0.0
    %2983 = vadd.xlane.f32.xlu0 %v2982
    %v2984 = vpop.xlane.xlu0 %2983
    %v2985 = vmul.f32 %v2984, 0.001953125
    %2987 = vrot.lane.b32.xlu0 %v2953, 96
    %v2988 = vpop.permute.xlu0 %2987
    %v2990 = vsel %vm775, %v2988, 0.0
    %2991 = vadd.xlane.f32.xlu0 %v2990
    %v2992 = vpop.xlane.xlu0 %2991
    %v2993 = vmul.f32 %v2992, 0.001953125
    %v2994 = vmul.f32 %v2985, %v2985
    %v2995 = vsub.f32 %v2993, %v2994
    %v2996 = vmax.f32 %v2995, 0.0
    %s2997 = sld [smem:[#allocation7 + $0x1]]
    %v2998 = vadd.f32 %v2996, 1e-05
    %v2999 = vrsqrt.pop %v2998
    %v3000 = vstv %s2997
    %v3001 = vmul.f32 %v3000, %v2999
    %s3002 = sld [smem:[#allocation8 + $0x1]]
    %v3003 = vmul.f32 %v2985, %v3001
    %v3004 = vstv %s3002
    %v3005 = vsub.f32 %v3004, %v3003
    %v3006 = vmul.f32 %v3001, %v829
    %v3007 = vadd.f32 %v2975, %v3006
    %v3008 = vmul.f32 %v3005, %v829
    %v3009 = vadd.f32 %v2977, %v3008
    %3010 = vrot.lane.b32.xlu0 %v2932, 64
    %v3011 = vpop.permute.xlu0 %3010
    %v3013 = vsel %vm775, %v3011, 0.0
    %3014 = vadd.xlane.f32.xlu0 %v3013
    %v3015 = vpop.xlane.xlu0 %3014
    %v3016 = vmul.f32 %v3015, 0.001953125
    %3017 = vrot.lane.b32.xlu0 %v2953, 64
    %v3018 = vpop.permute.xlu0 %3017
    %v3020 = vsel %vm775, %v3018, 0.0
    %3021 = vadd.xlane.f32.xlu0 %v3020
    %v3022 = vpop.xlane.xlu0 %3021
    %v3023 = vmul.f32 %v3022, 0.001953125
    %v3024 = vmul.f32 %v3016, %v3016
    %v3025 = vsub.f32 %v3023, %v3024
    %v3026 = vmax.f32 %v3025, 0.0
    %s3027 = sld [smem:[#allocation7 + $0x2]]
    %v3028 = vadd.f32 %v3026, 1e-05
    %v3029 = vrsqrt.pop %v3028
    %v3030 = vstv %s3027
    %v3031 = vmul.f32 %v3030, %v3029
    %s3032 = sld [smem:[#allocation8 + $0x2]]
    %v3033 = vmul.f32 %v3016, %v3031
    %v3034 = vstv %s3032
    %v3035 = vsub.f32 %v3034, %v3033
    %v3036 = vmul.f32 %v3031, %v860
    %v3037 = vadd.f32 %v3007, %v3036
    %v3038 = vmul.f32 %v3035, %v860
    %v3039 = vadd.f32 %v3009, %v3038
    %3040 = vrot.lane.b32.xlu0 %v2932, 32
    %v3041 = vpop.permute.xlu0 %3040
    %v3043 = vsel %vm775, %v3041, 0.0
    %3044 = vadd.xlane.f32.xlu0 %v3043
    %v3045 = vpop.xlane.xlu0 %3044
    %v3046 = vmul.f32 %v3045, 0.001953125
    %3047 = vrot.lane.b32.xlu0 %v2953, 32
    %v3048 = vpop.permute.xlu0 %3047
    %v3050 = vsel %vm775, %v3048, 0.0
    %3051 = vadd.xlane.f32.xlu0 %v3050
    %v3052 = vpop.xlane.xlu0 %3051
    %v3053 = vmul.f32 %v3052, 0.001953125
    %v3054 = vmul.f32 %v3046, %v3046
    %v3055 = vsub.f32 %v3053, %v3054
    %v3056 = vmax.f32 %v3055, 0.0
    %s3057 = sld [smem:[#allocation7 + $0x3]]
    %v3058 = vadd.f32 %v3056, 1e-05
    %v3059 = vrsqrt.pop %v3058
    %v3060 = vstv %s3057
    %v3061 = vmul.f32 %v3060, %v3059
    %s3062 = sld [smem:[#allocation8 + $0x3]]
    %v3063 = vmul.f32 %v3046, %v3061
    %v3064 = vstv %s3062
    %v3065 = vsub.f32 %v3064, %v3063
    %v3066 = vmul.f32 %v3061, %v891
    %v3067 = vadd.f32 %v3037, %v3066
    %v3068 = vmul.f32 %v3065, %v891
    %v3069 = vadd.f32 %v3039, %v3068
    %v3070 = vlaneseq
    %v3071 = vshrl.u32 %v3070, 7
    %v3072 = vsub.s32 0, %v3071
    %v3073 = vrot.slane %v3067, %v3072
    %v3074 = vmul.f32 %v2770, %v3073
    %v3075 = vmul.f32 %v2771, %v3073
    %v3076 = vmul.f32 %v2772, %v3073
    %v3077 = vmul.f32 %v2773, %v3073
    %v3078 = vmul.f32 %v2774, %v3073
    %v3079 = vmul.f32 %v2775, %v3073
    %v3080 = vmul.f32 %v2776, %v3073
    %v3081 = vmul.f32 %v2777, %v3073
    %v3082 = vlaneseq
    %v3083 = vshrl.u32 %v3082, 7
    %v3084 = vsub.s32 0, %v3083
    %v3085 = vrot.slane %v3069, %v3084
    %v3086 = vadd.f32 %v3074, %v3085
    %v3087 = vadd.f32 %v3075, %v3085
    %v3088 = vadd.f32 %v3076, %v3085
    %v3089 = vadd.f32 %v3077, %v3085
    %v3090 = vadd.f32 %v3078, %v3085
    %v3091 = vadd.f32 %v3079, %v3085
    %v3092 = vadd.f32 %v3080, %v3085
    %v3093 = vadd.f32 %v3081, %v3085
    %v3094 = vmax.f32 %v3086, 0.0
    %v3095 = vmax.f32 %v3087, 0.0
    %v3096 = vmax.f32 %v3088, 0.0
    %v3097 = vmax.f32 %v3089, 0.0
    %v3098 = vmax.f32 %v3090, 0.0
    %v3099 = vmax.f32 %v3091, 0.0
    %v3100 = vmax.f32 %v3092, 0.0
    %v3101 = vmax.f32 %v3093, 0.0
    %v3110 = vrot.slane %v3094, 2
    %v3111 = vrot.slane %v3095, 2
    %v3112 = vsel %vm2173, %v3110, %v3111
    %v3113 = vrot.slane %v3096, 2
    %v3114 = vsel %vm2173, %v3111, %v3113
    %v3115 = vrot.slane %v3097, 2
    %v3116 = vsel %vm2173, %v3113, %v3115
    %v3117 = vrot.slane %v3098, 2
    %v3118 = vsel %vm2173, %v3115, %v3117
    %v3119 = vrot.slane %v3099, 2
    %v3120 = vsel %vm2173, %v3117, %v3119
    %v3121 = vrot.slane %v3100, 2
    %v3122 = vsel %vm2173, %v3119, %v3121
    %v3123 = vrot.slane %v3101, 2
    %v3124 = vsel %vm2173, %v3121, %v3123
    %v3134 = vsel %vm2173, %v3123, %v3110
    %v3135 = vmax.f32 %v3094, %v3112
    %v3136 = vmax.f32 %v3095, %v3114
    %v3137 = vmax.f32 %v3096, %v3116
    %v3138 = vmax.f32 %v3097, %v3118
    %v3139 = vmax.f32 %v3098, %v3120
    %v3140 = vmax.f32 %v3099, %v3122
    %v3141 = vmax.f32 %v3100, %v3124
    %v3142 = vmax.f32 %v3101, %v3134
    %3151 = vrot.lane.b32.xlu0 %v3135, 126
    %v3152 = vpop.permute.xlu0 %3151
    %3153 = vrot.lane.b32.xlu0 %v3136, 126
    %v3154 = vpop.permute.xlu0 %3153
    %3155 = vrot.lane.b32.xlu0 %v3137, 126
    %v3156 = vpop.permute.xlu0 %3155
    %3157 = vrot.lane.b32.xlu0 %v3138, 126
    %v3158 = vpop.permute.xlu0 %3157
    %3159 = vrot.lane.b32.xlu0 %v3139, 126
    %v3160 = vpop.permute.xlu0 %3159
    %3161 = vrot.lane.b32.xlu0 %v3140, 126
    %v3162 = vpop.permute.xlu0 %3161
    %3163 = vrot.lane.b32.xlu0 %v3141, 126
    %v3164 = vpop.permute.xlu0 %3163
    %3165 = vrot.lane.b32.xlu0 %v3142, 126
    %v3166 = vpop.permute.xlu0 %3165
    %v3175 = vmax.f32 %v3135, %v3152
    %v3176 = vmax.f32 %v3136, %v3154
    %v3177 = vmax.f32 %v3137, %v3156
    %v3178 = vmax.f32 %v3138, %v3158
    %v3179 = vmax.f32 %v3139, %v3160
    %v3180 = vmax.f32 %v3140, %v3162
    %v3181 = vmax.f32 %v3141, %v3164
    %v3182 = vmax.f32 %v3142, %v3166
    %vm3183 = vcmp.eq.s32.totalorder %v100, 0
    %v3184 = vsel %vm3183, 1.0, 0.0
    %vm3185 = vcmp.eq.s32.totalorder %v100, 1
    %v3186 = vsel %vm3185, 1.0, 0.0
    %v3187 = vld [vmem:[%s10] sm:$0xff]
    %v3188 = vld [vmem:[%s10 + $0x8] sm:$0xff]
    %v3189 = vld [vmem:[%s10 + $0x10] sm:$0xff]
    %v3190 = vld [vmem:[%s10 + $0x18] sm:$0xff]
    %v3191 = vld [vmem:[%s10 + $0x20] sm:$0xff]
    %v3192 = vld [vmem:[%s10 + $0x28] sm:$0xff]
    %v3193 = vld [vmem:[%s10 + $0x30] sm:$0xff]
    %v3194 = vld [vmem:[%s10 + $0x38] sm:$0xff]
    %v3195 = vmul.f32 %v3175, %v3187
    %v3196 = vmul.f32 %v3176, %v3188
    %v3197 = vmul.f32 %v3177, %v3189
    %v3198 = vmul.f32 %v3178, %v3190
    %v3199 = vmul.f32 %v3179, %v3191
    %v3200 = vmul.f32 %v3180, %v3192
    %v3201 = vmul.f32 %v3181, %v3193
    %v3202 = vmul.f32 %v3182, %v3194
    %3203 = vadd.xlane.f32.xlu0 %v3195
    %v3204 = vpop.xlane.xlu0 %3203
    %3205 = vadd.xlane.f32.xlu0 %v3196
    %v3206 = vpop.xlane.xlu0 %3205
    %3207 = vadd.xlane.f32.xlu0 %v3197
    %v3208 = vpop.xlane.xlu0 %3207
    %3209 = vadd.xlane.f32.xlu0 %v3198
    %v3210 = vpop.xlane.xlu0 %3209
    %3211 = vadd.xlane.f32.xlu0 %v3199
    %v3212 = vpop.xlane.xlu0 %3211
    %3213 = vadd.xlane.f32.xlu0 %v3200
    %v3214 = vpop.xlane.xlu0 %3213
    %3215 = vadd.xlane.f32.xlu0 %v3201
    %v3216 = vpop.xlane.xlu0 %3215
    %3217 = vadd.xlane.f32.xlu0 %v3202
    %v3218 = vpop.xlane.xlu0 %3217
    %v3219 = vld [vmem:[%s10 + $0x40] sm:$0xff]
    %v3220 = vld [vmem:[%s10 + $0x48] sm:$0xff]
    %v3221 = vld [vmem:[%s10 + $0x50] sm:$0xff]
    %v3222 = vld [vmem:[%s10 + $0x58] sm:$0xff]
    %v3223 = vld [vmem:[%s10 + $0x60] sm:$0xff]
    %v3224 = vld [vmem:[%s10 + $0x68] sm:$0xff]
    %v3225 = vld [vmem:[%s10 + $0x70] sm:$0xff]
    %v3226 = vld [vmem:[%s10 + $0x78] sm:$0xff]
    %v3227 = vmul.f32 %v3175, %v3219
    %v3228 = vmul.f32 %v3176, %v3220
    %v3229 = vmul.f32 %v3177, %v3221
    %v3230 = vmul.f32 %v3178, %v3222
    %v3231 = vmul.f32 %v3179, %v3223
    %v3232 = vmul.f32 %v3180, %v3224
    %v3233 = vmul.f32 %v3181, %v3225
    %v3234 = vmul.f32 %v3182, %v3226
    %3235 = vadd.xlane.f32.xlu0 %v3227
    %v3236 = vpop.xlane.xlu0 %3235
    %3237 = vadd.xlane.f32.xlu0 %v3228
    %v3238 = vpop.xlane.xlu0 %3237
    %3239 = vadd.xlane.f32.xlu0 %v3229
    %v3240 = vpop.xlane.xlu0 %3239
    %3241 = vadd.xlane.f32.xlu0 %v3230
    %v3242 = vpop.xlane.xlu0 %3241
    %3243 = vadd.xlane.f32.xlu0 %v3231
    %v3244 = vpop.xlane.xlu0 %3243
    %3245 = vadd.xlane.f32.xlu0 %v3232
    %v3246 = vpop.xlane.xlu0 %3245
    %3247 = vadd.xlane.f32.xlu0 %v3233
    %v3248 = vpop.xlane.xlu0 %3247
    %3249 = vadd.xlane.f32.xlu0 %v3234
    %v3250 = vpop.xlane.xlu0 %3249
    %v3251 = vadd.f32 %v3204, %v3206
    %v3252 = vadd.f32 %v3251, %v3208
    %v3253 = vadd.f32 %v3252, %v3210
    %v3254 = vrot.slane %v3253, 4
    %v3255 = vadd.f32 %v3253, %v3254
    %v3256 = vrot.slane %v3255, 2
    %v3257 = vadd.f32 %v3255, %v3256
    %v3258 = vrot.slane %v3257, 1
    %v3259 = vadd.f32 %v3257, %v3258
    %v3260 = vadd.f32 %v3236, %v3238
    %v3261 = vadd.f32 %v3260, %v3240
    %v3262 = vadd.f32 %v3261, %v3242
    %v3263 = vrot.slane %v3262, 4
    %v3264 = vadd.f32 %v3262, %v3263
    %v3265 = vrot.slane %v3264, 2
    %v3266 = vadd.f32 %v3264, %v3265
    %v3267 = vrot.slane %v3266, 1
    %v3268 = vadd.f32 %v3266, %v3267
    %v3269 = vmul.f32 %v3259, %v3184
    %v3270 = vmul.f32 %v3268, %v3186
    %v3271 = vadd.f32 %v3269, %v3270
    %v3272 = vadd.f32 %v3212, %v3214
    %v3273 = vadd.f32 %v3272, %v3216
    %v3274 = vadd.f32 %v3273, %v3218
    %v3275 = vrot.slane %v3274, 4
    %v3276 = vadd.f32 %v3274, %v3275
    %v3277 = vrot.slane %v3276, 2
    %v3278 = vadd.f32 %v3276, %v3277
    %v3279 = vrot.slane %v3278, 1
    %v3280 = vadd.f32 %v3278, %v3279
    %v3281 = vadd.f32 %v3244, %v3246
    %v3282 = vadd.f32 %v3281, %v3248
    %v3283 = vadd.f32 %v3282, %v3250
    %v3284 = vrot.slane %v3283, 4
    %v3285 = vadd.f32 %v3283, %v3284
    %v3286 = vrot.slane %v3285, 2
    %v3287 = vadd.f32 %v3285, %v3286
    %v3288 = vrot.slane %v3287, 1
    %v3289 = vadd.f32 %v3287, %v3288
    %v3290 = vmul.f32 %v3280, %v3184
    %v3291 = vmul.f32 %v3289, %v3186
    %v3292 = vadd.f32 %v3290, %v3291
    %v3293 = vsel %vm263, %v3271, %v3292
    %v3294 = vld [vmem:[%s11] sm:$0x1]
    %v3296 = vlaneseq
    %v3297 = vshrl.u32 %v3296, 7
    %v3298 = vsub.s32 0, %v3297
    %v3299 = vrot.slane %v3294, %v3298
    %v3301 = vadd.f32 %v3293, %v3299
    %3302 = vst [vmem:[#allocation10] sm:$0x3] %v3301
    // Predicated region
    $region66: #{net_forward.1} parent=1 // pred_check
      _
    $region67: #{net_forward.1} parent=1 // pred_check_branch
      %3304 = sbr.rel (0) target = $region69
    $region68: #{net_forward.1} parent=1 // pred_region
      %s3306 = ssub.s32 32, 32
      %3307 = vsyncadd [#allocation3], %s3306
      %s3309 = sshll.u32 [#allocation10], 4
      %s3310 = int_to_ptr.vmem [resolvable:$true] %s3309
      %3312 = dma.vmem_to_hbm [thread:$0]  %s3310, 32, %s12, [#allocation3]
    $region69: #{net_forward.1} parent=1 // pred_fallthru
      _
    // Predicated region
    $region70: #{net_forward.1} parent=1 // pred_check
      _
    $region71: #{net_forward.1} parent=1 // pred_check_branch
      %3314 = sbr.rel (0) target = $region73
    $region72: #{net_forward.1} parent=1 // pred_region
      %3315 = dma.done [#allocation3], 32
    $region73: #{net_forward.1} parent=1 // pred_fallthru
      _
    %3316 = vsyncpa [#allocation3], 1
    %3317 = vsyncpa [#allocation4], 1
    %3318 = vsyncpa [#allocation6], 1
    %3319 = vsyncpa [#allocation9], 1

</llo_original>
